<compile_context>
chip_gen: v5e
topology: v5e:2x2
jax: 0.10.0
libtpu: 0.0.40
codegen_flags: <defaults>
</compile_context>

<pallas_src>
import functools

import jax
import jax.numpy as jnp
from jax.experimental import pallas as pl
from jax.experimental.pallas import tpu as pltpu


# ---------------------------------------------------------------------------
# Pallas kernels
# ---------------------------------------------------------------------------
def _tower_kernel(x0_ref, mask_ref, w_ref, b_ref, out_ref, act_ref, res_ref,
                  *, rows, padr, row_stride):
    """One grid step == one conv layer of the (ConvLayer + ResLayers) tower.

    act_ref : (rows + 2*padr, C) zero-halo padded activation (persists).
    res_ref : (rows, C) residual snapshot (persists).
    """
    l = pl.program_id(0)
    n_layers = pl.num_programs(0)
    chans = w_ref.shape[-1]

    @pl.when(l == 0)
    def _init():
        act_ref[...] = jnp.zeros_like(act_ref)
        res_ref[...] = jnp.zeros_like(res_ref)
        act_ref[padr:padr + rows, :] = x0_ref[...]

    # First conv of a residual block (odd layer): snapshot the block input.
    @pl.when(l % 2 == 1)
    def _save_residual():
        res_ref[...] = act_ref[padr:padr + rows, :]

    # 3x3 conv == accumulation of 9 shifted matmuls (bf16 MXU, f32 acc).
    acc = jnp.zeros((rows, chans), jnp.float32)
    for k in range(9):
        dy, dx = k // 3 - 1, k % 3 - 1
        off = dy * row_stride + dx
        xs = act_ref[padr + off:padr + off + rows, :]
        acc = acc + jnp.dot(xs.astype(jnp.bfloat16), w_ref[0, k],
                            preferred_element_type=jnp.float32)
    y = acc + b_ref[0]  # folded BN bias

    # Second conv of a residual block (even layer >= 2): pre-activation add.
    is_res_add = jnp.logical_and(l >= 2, l % 2 == 0)
    y = jnp.where(is_res_add, y + res_ref[...], y)
    y = jnp.maximum(y, 0.0)
    y = y * mask_ref[...]  # re-zero the halo rows for the next layer's taps

    act_ref[padr:padr + rows, :] = y

    @pl.when(l == n_layers - 1)
    def _emit():
        out_ref[...] = y


def _heads_kernel(s_ref, wv_ref, bv_ref, wp_ref, bp_ref,
                  w1_ref, b1_ref, w2_ref, b2_ref, v_ref, pmap_ref):
    """Fused heads: value 1x1 conv + value FCs + tanh, and policy 1x1 conv.

    The value FCs use block-diagonal (per-image) weights prepared host-side,
    so no reshapes are needed inside the kernel.
    """
    s = s_ref[...]
    # Value 1x1 conv (+ folded BN) + ReLU -> (M, 1)
    v_map = jnp.maximum(
        jnp.dot(s, wv_ref[...], preferred_element_type=jnp.float32) + bv_ref[...],
        0.0)
    # Policy 1x1 conv (+ folded BN) + ReLU -> (M, 32)
    pmap_ref[...] = jnp.maximum(
        jnp.dot(s, wp_ref[...], preferred_element_type=jnp.float32) + bp_ref[...],
        0.0)
    # Value FC1 (block-diag over images) + ReLU -> (N*32, 1)
    h = jnp.maximum(
        jnp.dot(w1_ref[...], v_map, preferred_element_type=jnp.float32) + b1_ref[...],
        0.0)
    # Value FC2 (block-diag) + tanh -> (N, 1)
    v_ref[...] = jnp.tanh(
        jnp.dot(w2_ref[...], h, preferred_element_type=jnp.float32) + b2_ref[...])


def _policy_fc_softmax_kernel(p_ref, w_ref, b_ref, out_ref):
    # logsoftmax(dim=1).exp() == softmax along the action dim
    y = jnp.dot(p_ref[...], w_ref[...], preferred_element_type=jnp.float32)
    y = y + b_ref[...]
    m = jnp.max(y, axis=-1, keepdims=True)
    e = jnp.exp(y - m)
    out_ref[...] = (e / jnp.sum(e, axis=-1, keepdims=True)).astype(out_ref.dtype)


# ---------------------------------------------------------------------------
# pallas_call wrappers
# ---------------------------------------------------------------------------
def _vmem_specs(n):
    return [pl.BlockSpec(memory_space=pltpu.MemorySpace.VMEM) for _ in range(n)]


def conv_tower(x0, mask, tower_w, tower_b, img_w, *, padr=16):
    """Fused residual tower. x0/out are (R, C) with R = N*(H+2)*(W+2)."""
    rows, chans = x0.shape
    n_layers = tower_w.shape[0]
    kernel = functools.partial(_tower_kernel, rows=rows, padr=padr,
                               row_stride=img_w + 2)
    return pl.pallas_call(
        kernel,
        out_shape=jax.ShapeDtypeStruct((rows, chans), jnp.float32),
        grid_spec=pltpu.PrefetchScalarGridSpec(
            num_scalar_prefetch=0,
            grid=(n_layers,),
            in_specs=[
                pl.BlockSpec((rows, chans), lambda l: (0, 0)),          # x0
                pl.BlockSpec((rows, 1), lambda l: (0, 0)),              # mask
                pl.BlockSpec((1, 9, chans, chans), lambda l: (l, 0, 0, 0)),  # weights
                pl.BlockSpec((1, 1, chans), lambda l: (l, 0, 0)),       # biases
            ],
            out_specs=pl.BlockSpec((rows, chans), lambda l: (0, 0)),
            scratch_shapes=[
                pltpu.VMEM((rows + 2 * padr, chans), jnp.float32),  # padded act
                pltpu.VMEM((rows, chans), jnp.float32),             # residual
            ],
        ),
        compiler_params=pltpu.CompilerParams(
            dimension_semantics=("arbitrary",),   # layers are sequential
            vmem_limit_bytes=32 * 1024 * 1024,
        ),
    )(x0, mask, tower_w, tower_b)


def fused_heads(s, wv, bv, wp, bp, w1, b1, w2, b2):
    m = s.shape[0]
    n_batch = w2.shape[0]
    p_ch = wp.shape[1]
    return pl.pallas_call(
        _heads_kernel,
        out_shape=(jax.ShapeDtypeStruct((n_batch, 1), jnp.float32),
                   jax.ShapeDtypeStruct((m, p_ch), jnp.float32)),
        in_specs=_vmem_specs(9),
        out_specs=(pl.BlockSpec(memory_space=pltpu.MemorySpace.VMEM),
                   pl.BlockSpec(memory_space=pltpu.MemorySpace.VMEM)),
    )(s, wv, bv, wp, bp, w1, b1, w2, b2)


def policy_fc_softmax(p_flat, w, b):
    n, _ = p_flat.shape
    a = w.shape[1]
    return pl.pallas_call(
        _policy_fc_softmax_kernel,
        out_shape=jax.ShapeDtypeStruct((n, a), jnp.float32),
        in_specs=_vmem_specs(3),
        out_specs=pl.BlockSpec(memory_space=pltpu.MemorySpace.VMEM),
    )(p_flat, w, b)


# ---------------------------------------------------------------------------
# Parameter init (deterministic, synthetic) + one-time prep/folding
# ---------------------------------------------------------------------------
def init_params(key, input_planes, board_dim, action_size, res_layer_number=5,
                planes=128):
    H, W = board_dim
    keys = iter(jax.random.split(key, 128))

    def nrm(shape, std=0.05):
        return jax.random.normal(next(keys), shape, jnp.float32) * std

    def bn_params(c):
        return dict(
            gamma=1.0 + nrm((c,), 0.1),
            beta=nrm((c,), 0.1),
            mean=nrm((c,), 0.1),
            var=1.0 + jnp.abs(nrm((c,), 0.1)),
        )

    return {
        "conv": dict(w=nrm((3, 3, input_planes, planes)), bn=bn_params(planes)),
        "res": [
            dict(w1=nrm((3, 3, planes, planes)), bn1=bn_params(planes),
                 w2=nrm((3, 3, planes, planes)), bn2=bn_params(planes))
            for _ in range(res_layer_number)
        ],
        "value": dict(
            conv_w=nrm((planes, 1)), conv_b=nrm((1,)), bn=bn_params(1),
            fc1_w=nrm((H * W, 32)), fc1_b=nrm((32,)),
            fc2_w=nrm((32, 1)), fc2_b=nrm((1,)),
        ),
        # fc_w rows follow the PyTorch NCHW flatten order: row = c*H*W + h*W + w
        "policy": dict(
            conv_w=nrm((planes, 32)), conv_b=nrm((32,)), bn=bn_params(32),
            fc_w=nrm((32 * H * W, action_size)), fc_b=nrm((action_size,)),
        ),
    }


def fold_bn(bn, conv_bias=None, eps=1e-5):
    scale = bn["gamma"] / jnp.sqrt(bn["var"] + eps)
    bias = bn["beta"] - bn["mean"] * scale
    if conv_bias is not None:
        bias = bias + conv_bias * scale
    return scale, bias


def prepare_params(params, batch, input_planes, board_dim, planes=128):
    """One-time folding/permutation of the PyTorch-style params."""
    H, W = board_dim
    HW = H * W
    N = batch

    # --- residual tower: fold BN scale into weights, stack per layer ---------
    tower_w, tower_b = [], []
    w0 = jnp.pad(params["conv"]["w"],
                 ((0, 0), (0, 0), (0, planes - input_planes), (0, 0)))
    s0, b0 = fold_bn(params["conv"]["bn"])
    tower_w.append((w0 * s0).reshape(9, planes, planes))
    tower_b.append(b0)
    for rp in params["res"]:
        s1, b1 = fold_bn(rp["bn1"])
        tower_w.append((rp["w1"] * s1).reshape(9, planes, planes))
        tower_b.append(b1)
        s2, b2 = fold_bn(rp["bn2"])
        tower_w.append((rp["w2"] * s2).reshape(9, planes, planes))
        tower_b.append(b2)
    tower_w = jnp.stack(tower_w).astype(jnp.bfloat16)          # (L, 9, C, C)
    tower_b = jnp.stack(tower_b).reshape(-1, 1, planes)         # (L, 1, C)

    # --- valid-row mask on the zero-halo padded grid -------------------------
    ii = jnp.arange(H + 2)
    jj = jnp.arange(W + 2)
    m2 = ((ii >= 1) & (ii <= H))[:, None] & ((jj >= 1) & (jj <= W))[None, :]
    mask = jnp.broadcast_to(m2[None], (N, H + 2, W + 2)).reshape(-1, 1)
    mask = mask.astype(jnp.float32)

    # --- value head -----------------------------------------------------------
    vp = params["value"]
    vs, vb = fold_bn(vp["bn"], conv_bias=vp["conv_b"])
    wv = vp["conv_w"] * vs                                       # (C, 1)
    bv = vb.reshape(1, 1)
    eye = jnp.eye(N, dtype=jnp.float32)
    w1 = jnp.kron(eye, vp["fc1_w"].T)                            # (N*32, N*HW)
    b1 = jnp.tile(vp["fc1_b"], N).reshape(N * 32, 1)
    w2 = jnp.kron(eye, vp["fc2_w"].T)                            # (N, N*32)
    b2 = jnp.full((N, 1), vp["fc2_b"][0], jnp.float32)

    # --- policy head ----------------------------------------------------------
    pp = params["policy"]
    ps, pb = fold_bn(pp["bn"], conv_bias=pp["conv_b"])
    wp = pp["conv_w"] * ps                                       # (C, 32)
    bp = pb.reshape(1, -1)
    A = pp["fc_w"].shape[1]
    # permute FC rows from NCHW order (c*HW+hw) to NHWC order (hw*32+c)
    wfc = pp["fc_w"].reshape(32, HW, A).transpose(1, 0, 2).reshape(HW * 32, A)
    bfc = pp["fc_b"].reshape(1, -1)

    return dict(tower_w=tower_w, tower_b=tower_b, mask=mask,
                wv=wv, bv=bv, wp=wp, bp=bp,
                w1=w1, b1=b1, w2=w2, b2=b2,
                wfc=wfc, bfc=bfc)


# ---------------------------------------------------------------------------
# Forward pass (== AlphaZeroNet.forward, eval mode)
# ---------------------------------------------------------------------------
def alphazero_forward(prep, x_nchw):
    N, Cin, H, W = x_nchw.shape
    planes = prep["tower_b"].shape[-1]
    HW = H * W
    R = N * (H + 2) * (W + 2)

    # NCHW -> NHWC, zero-halo spatial pad, pad channels to `planes`, flatten.
    x = jnp.transpose(x_nchw, (0, 2, 3, 1))
    x = jnp.pad(x, ((0, 0), (1, 1), (1, 1), (0, planes - Cin)))
    x0 = x.reshape(R, planes)

    # Fused tower: ConvLayer + all ResLayers in one kernel.
    s_pad = conv_tower(x0, prep["mask"], prep["tower_w"], prep["tower_b"], W)
    # Drop the halo rows (cheap slice+reshape between kernels).
    s = s_pad.reshape(N, H + 2, W + 2, planes)[:, 1:H + 1, 1:W + 1, :]
    s = s.reshape(N * HW, planes)

    # Fused heads: value head (full) + policy 1x1 conv, one read of s.
    v, p_map = fused_heads(s, prep["wv"], prep["bv"], prep["wp"], prep["bp"],
                           prep["w1"], prep["b1"], prep["w2"], prep["b2"])

    # Free row-major reshape (no transpose: fc weight rows were permuted).
    p_flat = p_map.reshape(N, HW * 32)
    p = policy_fc_softmax(p_flat, prep["wfc"], prep["bfc"])
    return v, p


# ---------------------------------------------------------------------------
if __name__ == "__main__":
    # Small synthetic "game": 4 input planes, 8x8 board, 64 actions, fc policy.
    batch = 2
    input_planes = 4
    board_dim = (8, 8)
    action_size = 64
    res_layer_number = 5

    key = jax.random.PRNGKey(0)
    pkey, xkey = jax.random.split(key)
    params = init_params(pkey, input_planes, board_dim, action_size,
                         res_layer_number)
    prep = prepare_params(params, batch, input_planes, board_dim)
    x = jax.random.normal(
        xkey, (batch, input_planes, board_dim[0], board_dim[1]), jnp.float32)

    fwd = jax.jit(alphazero_forward)
    v, p = fwd(prep, x)
    jax.block_until_ready((v, p))

    assert v.shape == (batch, 1), v.shape
    assert p.shape == (batch, action_size), p.shape
    assert bool(jnp.all(jnp.isfinite(v))) and bool(jnp.all(jnp.isfinite(p)))
    # value is tanh-bounded; policy rows are a softmax -> sum to 1
    assert bool(jnp.all(jnp.abs(v) <= 1.0))
    assert bool(jnp.allclose(jnp.sum(p, axis=1), 1.0, atol=1e-4))

    print("KERNEL_OK")
</pallas_src>

<mosaic_0001>
module attributes {stable_mosaic.version = 11 : i64} {
  func.func @_tower_kernel(%arg0: i32, %arg1: memref<200x128xf32, #tpu.memory_space<vmem>>, %arg2: memref<200x1xf32, #tpu.memory_space<vmem>>, %arg3: memref<1x9x128x128xbf16, #tpu.memory_space<vmem>>, %arg4: memref<1x1x128xf32, #tpu.memory_space<vmem>>, %arg5: memref<200x128xf32, #tpu.memory_space<vmem>>, %arg6: memref<232x128xf32, #tpu.memory_space<vmem>>, %arg7: memref<200x128xf32, #tpu.memory_space<vmem>>) attributes {dimension_semantics = [#tpu.dimension_semantics<arbitrary>], iteration_bounds = array<i64: 11>, scalar_prefetch = 0 : i64, scratch_operands = 2 : i64, tpu.core_type = #tpu.core_type<tc>, window_params = [{pipeline_mode = #tpu.pipeline_mode<synchronous>, transform_indices = @transform_0, window_bounds = array<i64: 200, 128>}, {pipeline_mode = #tpu.pipeline_mode<synchronous>, transform_indices = @transform_1, window_bounds = array<i64: 200, 1>}, {transform_indices = @transform_2, window_bounds = array<i64: 1, 9, 128, 128>}, {transform_indices = @transform_3, window_bounds = array<i64: 1, 1, 128>}, {pipeline_mode = #tpu.pipeline_mode<synchronous>, transform_indices = @transform_4, window_bounds = array<i64: 200, 128>}]} {
    %c0_i32 = arith.constant 0 : i32
    %0 = arith.cmpi eq, %arg0, %c0_i32 : i32
    %1 = arith.extui %0 : i1 to i32
    %c0_i32_0 = arith.constant 0 : i32
    %2 = arith.cmpi ne, %1, %c0_i32_0 : i32
    scf.if %2 {
      %cst_74 = arith.constant 0.000000e+00 : f32
      %100 = vector.broadcast %cst_74 : f32 to vector<232x128xf32>
      %c0_75 = arith.constant 0 : index
      %c0_76 = arith.constant 0 : index
      %101 = vector.load %arg6[%c0_75, %c0_76] : memref<232x128xf32, #tpu.memory_space<vmem>>, vector<232x128xf32>
      tpu.vector_store %arg6[%c0_75, %c0_76], %100 {strides = array<i32>} : memref<232x128xf32, #tpu.memory_space<vmem>>, vector<232x128xf32>,
      %cst_77 = arith.constant 0.000000e+00 : f32
      %102 = vector.broadcast %cst_77 : f32 to vector<200x128xf32>
      %c0_78 = arith.constant 0 : index
      %c0_79 = arith.constant 0 : index
      %103 = vector.load %arg7[%c0_78, %c0_79] : memref<200x128xf32, #tpu.memory_space<vmem>>, vector<200x128xf32>
      tpu.vector_store %arg7[%c0_78, %c0_79], %102 {strides = array<i32>} : memref<200x128xf32, #tpu.memory_space<vmem>>, vector<200x128xf32>,
      %c0_80 = arith.constant 0 : index
      %c0_81 = arith.constant 0 : index
      %104 = vector.load %arg1[%c0_80, %c0_81] : memref<200x128xf32, #tpu.memory_space<vmem>>, vector<200x128xf32>
      %c16_82 = arith.constant 16 : index
      %c0_83 = arith.constant 0 : index
      %105 = vector.load %arg6[%c16_82, %c0_83] : memref<232x128xf32, #tpu.memory_space<vmem>>, vector<200x128xf32>
      tpu.vector_store %arg6[%c16_82, %c0_83], %104 {strides = array<i32>} : memref<232x128xf32, #tpu.memory_space<vmem>>, vector<200x128xf32>,
    } else {
    }
    %c2_i32 = arith.constant 2 : i32
    %c0_i32_1 = arith.constant 0 : i32
    %3 = arith.cmpi eq, %c2_i32, %c0_i32_1 : i32
    %c1_i32 = arith.constant 1 : i32
    %4 = arith.select %3, %c1_i32, %c2_i32 : i32
    %5 = arith.remsi %arg0, %4 : i32
    %c0_i32_2 = arith.constant 0 : i32
    %6 = arith.cmpi ne, %5, %c0_i32_2 : i32
    %c0_i32_3 = arith.constant 0 : i32
    %7 = arith.cmpi slt, %5, %c0_i32_3 : i32
    %c0_i32_4 = arith.constant 0 : i32
    %8 = arith.cmpi slt, %4, %c0_i32_4 : i32
    %9 = arith.xori %7, %8 : i1
    %10 = arith.andi %9, %6 : i1
    %11 = arith.addi %5, %4 : i32
    %12 = arith.select %10, %11, %5 : i32
    %c1_i32_5 = arith.constant 1 : i32
    %13 = arith.cmpi eq, %12, %c1_i32_5 : i32
    %14 = arith.extui %13 : i1 to i32
    %c0_i32_6 = arith.constant 0 : i32
    %15 = arith.cmpi ne, %14, %c0_i32_6 : i32
    scf.if %15 {
      %c16_74 = arith.constant 16 : index
      %c0_75 = arith.constant 0 : index
      %100 = vector.load %arg6[%c16_74, %c0_75] : memref<232x128xf32, #tpu.memory_space<vmem>>, vector<200x128xf32>
      %c0_76 = arith.constant 0 : index
      %c0_77 = arith.constant 0 : index
      %101 = vector.load %arg7[%c0_76, %c0_77] : memref<200x128xf32, #tpu.memory_space<vmem>>, vector<200x128xf32>
      tpu.vector_store %arg7[%c0_76, %c0_77], %100 {strides = array<i32>} : memref<200x128xf32, #tpu.memory_space<vmem>>, vector<200x128xf32>,
    } else {
    }
    %cst = arith.constant 0.000000e+00 : f32
    %16 = vector.broadcast %cst : f32 to vector<200x128xf32>
    %c5 = arith.constant 5 : index
    %c0 = arith.constant 0 : index
    %17 = vector.load %arg6[%c5, %c0] : memref<232x128xf32, #tpu.memory_space<vmem>>, vector<200x128xf32>
    %18 = arith.truncf %17 : vector<200x128xf32> to vector<200x128xbf16>
    %c0_7 = arith.constant 0 : index
    %c0_8 = arith.constant 0 : index
    %c0_9 = arith.constant 0 : index
    %c0_10 = arith.constant 0 : index
    %19 = vector.load %arg3[%c0_7, %c0_8, %c0_9, %c0_10] : memref<1x9x128x128xbf16, #tpu.memory_space<vmem>>, vector<1x1x128x128xbf16>
    %20 = vector.shape_cast %19 : vector<1x1x128x128xbf16> to vector<128x128xbf16>
    %cst_11 = arith.constant dense<0.000000e+00> : vector<200x128xf32>
    %21 = tpu.matmul %18, %20, %cst_11 {dimension_numbers = #tpu.dot_dimension_numbers<[1], [0], [0], [1], [0, 0, 1, 1], [], []>} : vector<200x128xbf16>, vector<128x128xbf16>, vector<200x128xf32> -> vector<200x128xf32>
    %22 = arith.addf %16, %21 : vector<200x128xf32>
    %c6 = arith.constant 6 : index
    %c0_12 = arith.constant 0 : index
    %23 = vector.load %arg6[%c6, %c0_12] : memref<232x128xf32, #tpu.memory_space<vmem>>, vector<200x128xf32>
    %24 = arith.truncf %23 : vector<200x128xf32> to vector<200x128xbf16>
    %c0_13 = arith.constant 0 : index
    %c1 = arith.constant 1 : index
    %c0_14 = arith.constant 0 : index
    %c0_15 = arith.constant 0 : index
    %25 = vector.load %arg3[%c0_13, %c1, %c0_14, %c0_15] : memref<1x9x128x128xbf16, #tpu.memory_space<vmem>>, vector<1x1x128x128xbf16>
    %26 = vector.shape_cast %25 : vector<1x1x128x128xbf16> to vector<128x128xbf16>
    %cst_16 = arith.constant dense<0.000000e+00> : vector<200x128xf32>
    %27 = tpu.matmul %24, %26, %cst_16 {dimension_numbers = #tpu.dot_dimension_numbers<[1], [0], [0], [1], [0, 0, 1, 1], [], []>} : vector<200x128xbf16>, vector<128x128xbf16>, vector<200x128xf32> -> vector<200x128xf32>
    %28 = arith.addf %22, %27 : vector<200x128xf32>
    %c7 = arith.constant 7 : index
    %c0_17 = arith.constant 0 : index
    %29 = vector.load %arg6[%c7, %c0_17] : memref<232x128xf32, #tpu.memory_space<vmem>>, vector<200x128xf32>
    %30 = arith.truncf %29 : vector<200x128xf32> to vector<200x128xbf16>
    %c0_18 = arith.constant 0 : index
    %c2 = arith.constant 2 : index
    %c0_19 = arith.constant 0 : index
    %c0_20 = arith.constant 0 : index
    %31 = vector.load %arg3[%c0_18, %c2, %c0_19, %c0_20] : memref<1x9x128x128xbf16, #tpu.memory_space<vmem>>, vector<1x1x128x128xbf16>
    %32 = vector.shape_cast %31 : vector<1x1x128x128xbf16> to vector<128x128xbf16>
    %cst_21 = arith.constant dense<0.000000e+00> : vector<200x128xf32>
    %33 = tpu.matmul %30, %32, %cst_21 {dimension_numbers = #tpu.dot_dimension_numbers<[1], [0], [0], [1], [0, 0, 1, 1], [], []>} : vector<200x128xbf16>, vector<128x128xbf16>, vector<200x128xf32> -> vector<200x128xf32>
    %34 = arith.addf %28, %33 : vector<200x128xf32>
    %c15 = arith.constant 15 : index
    %c0_22 = arith.constant 0 : index
    %35 = vector.load %arg6[%c15, %c0_22] : memref<232x128xf32, #tpu.memory_space<vmem>>, vector<200x128xf32>
    %36 = arith.truncf %35 : vector<200x128xf32> to vector<200x128xbf16>
    %c0_23 = arith.constant 0 : index
    %c3 = arith.constant 3 : index
    %c0_24 = arith.constant 0 : index
    %c0_25 = arith.constant 0 : index
    %37 = vector.load %arg3[%c0_23, %c3, %c0_24, %c0_25] : memref<1x9x128x128xbf16, #tpu.memory_space<vmem>>, vector<1x1x128x128xbf16>
    %38 = vector.shape_cast %37 : vector<1x1x128x128xbf16> to vector<128x128xbf16>
    %cst_26 = arith.constant dense<0.000000e+00> : vector<200x128xf32>
    %39 = tpu.matmul %36, %38, %cst_26 {dimension_numbers = #tpu.dot_dimension_numbers<[1], [0], [0], [1], [0, 0, 1, 1], [], []>} : vector<200x128xbf16>, vector<128x128xbf16>, vector<200x128xf32> -> vector<200x128xf32>
    %40 = arith.addf %34, %39 : vector<200x128xf32>
    %c16 = arith.constant 16 : index
    %c0_27 = arith.constant 0 : index
    %41 = vector.load %arg6[%c16, %c0_27] : memref<232x128xf32, #tpu.memory_space<vmem>>, vector<200x128xf32>
    %42 = arith.truncf %41 : vector<200x128xf32> to vector<200x128xbf16>
    %c0_28 = arith.constant 0 : index
    %c4 = arith.constant 4 : index
    %c0_29 = arith.constant 0 : index
    %c0_30 = arith.constant 0 : index
    %43 = vector.load %arg3[%c0_28, %c4, %c0_29, %c0_30] : memref<1x9x128x128xbf16, #tpu.memory_space<vmem>>, vector<1x1x128x128xbf16>
    %44 = vector.shape_cast %43 : vector<1x1x128x128xbf16> to vector<128x128xbf16>
    %cst_31 = arith.constant dense<0.000000e+00> : vector<200x128xf32>
    %45 = tpu.matmul %42, %44, %cst_31 {dimension_numbers = #tpu.dot_dimension_numbers<[1], [0], [0], [1], [0, 0, 1, 1], [], []>} : vector<200x128xbf16>, vector<128x128xbf16>, vector<200x128xf32> -> vector<200x128xf32>
    %46 = arith.addf %40, %45 : vector<200x128xf32>
    %c17 = arith.constant 17 : index
    %c0_32 = arith.constant 0 : index
    %47 = vector.load %arg6[%c17, %c0_32] : memref<232x128xf32, #tpu.memory_space<vmem>>, vector<200x128xf32>
    %48 = arith.truncf %47 : vector<200x128xf32> to vector<200x128xbf16>
    %c0_33 = arith.constant 0 : index
    %c5_34 = arith.constant 5 : index
    %c0_35 = arith.constant 0 : index
    %c0_36 = arith.constant 0 : index
    %49 = vector.load %arg3[%c0_33, %c5_34, %c0_35, %c0_36] : memref<1x9x128x128xbf16, #tpu.memory_space<vmem>>, vector<1x1x128x128xbf16>
    %50 = vector.shape_cast %49 : vector<1x1x128x128xbf16> to vector<128x128xbf16>
    %cst_37 = arith.constant dense<0.000000e+00> : vector<200x128xf32>
    %51 = tpu.matmul %48, %50, %cst_37 {dimension_numbers = #tpu.dot_dimension_numbers<[1], [0], [0], [1], [0, 0, 1, 1], [], []>} : vector<200x128xbf16>, vector<128x128xbf16>, vector<200x128xf32> -> vector<200x128xf32>
    %52 = arith.addf %46, %51 : vector<200x128xf32>
    %c25 = arith.constant 25 : index
    %c0_38 = arith.constant 0 : index
    %53 = vector.load %arg6[%c25, %c0_38] : memref<232x128xf32, #tpu.memory_space<vmem>>, vector<200x128xf32>
    %54 = arith.truncf %53 : vector<200x128xf32> to vector<200x128xbf16>
    %c0_39 = arith.constant 0 : index
    %c6_40 = arith.constant 6 : index
    %c0_41 = arith.constant 0 : index
    %c0_42 = arith.constant 0 : index
    %55 = vector.load %arg3[%c0_39, %c6_40, %c0_41, %c0_42] : memref<1x9x128x128xbf16, #tpu.memory_space<vmem>>, vector<1x1x128x128xbf16>
    %56 = vector.shape_cast %55 : vector<1x1x128x128xbf16> to vector<128x128xbf16>
    %cst_43 = arith.constant dense<0.000000e+00> : vector<200x128xf32>
    %57 = tpu.matmul %54, %56, %cst_43 {dimension_numbers = #tpu.dot_dimension_numbers<[1], [0], [0], [1], [0, 0, 1, 1], [], []>} : vector<200x128xbf16>, vector<128x128xbf16>, vector<200x128xf32> -> vector<200x128xf32>
    %58 = arith.addf %52, %57 : vector<200x128xf32>
    %c26 = arith.constant 26 : index
    %c0_44 = arith.constant 0 : index
    %59 = vector.load %arg6[%c26, %c0_44] : memref<232x128xf32, #tpu.memory_space<vmem>>, vector<200x128xf32>
    %60 = arith.truncf %59 : vector<200x128xf32> to vector<200x128xbf16>
    %c0_45 = arith.constant 0 : index
    %c7_46 = arith.constant 7 : index
    %c0_47 = arith.constant 0 : index
    %c0_48 = arith.constant 0 : index
    %61 = vector.load %arg3[%c0_45, %c7_46, %c0_47, %c0_48] : memref<1x9x128x128xbf16, #tpu.memory_space<vmem>>, vector<1x1x128x128xbf16>
    %62 = vector.shape_cast %61 : vector<1x1x128x128xbf16> to vector<128x128xbf16>
    %cst_49 = arith.constant dense<0.000000e+00> : vector<200x128xf32>
    %63 = tpu.matmul %60, %62, %cst_49 {dimension_numbers = #tpu.dot_dimension_numbers<[1], [0], [0], [1], [0, 0, 1, 1], [], []>} : vector<200x128xbf16>, vector<128x128xbf16>, vector<200x128xf32> -> vector<200x128xf32>
    %64 = arith.addf %58, %63 : vector<200x128xf32>
    %c27 = arith.constant 27 : index
    %c0_50 = arith.constant 0 : index
    %65 = vector.load %arg6[%c27, %c0_50] : memref<232x128xf32, #tpu.memory_space<vmem>>, vector<200x128xf32>
    %66 = arith.truncf %65 : vector<200x128xf32> to vector<200x128xbf16>
    %c0_51 = arith.constant 0 : index
    %c8 = arith.constant 8 : index
    %c0_52 = arith.constant 0 : index
    %c0_53 = arith.constant 0 : index
    %67 = vector.load %arg3[%c0_51, %c8, %c0_52, %c0_53] : memref<1x9x128x128xbf16, #tpu.memory_space<vmem>>, vector<1x1x128x128xbf16>
    %68 = vector.shape_cast %67 : vector<1x1x128x128xbf16> to vector<128x128xbf16>
    %cst_54 = arith.constant dense<0.000000e+00> : vector<200x128xf32>
    %69 = tpu.matmul %66, %68, %cst_54 {dimension_numbers = #tpu.dot_dimension_numbers<[1], [0], [0], [1], [0, 0, 1, 1], [], []>} : vector<200x128xbf16>, vector<128x128xbf16>, vector<200x128xf32> -> vector<200x128xf32>
    %70 = arith.addf %64, %69 : vector<200x128xf32>
    %c0_55 = arith.constant 0 : index
    %c0_56 = arith.constant 0 : index
    %c0_57 = arith.constant 0 : index
    %71 = vector.load %arg4[%c0_55, %c0_56, %c0_57] : memref<1x1x128xf32, #tpu.memory_space<vmem>>, vector<1x1x128xf32>
    %72 = vector.shape_cast %71 : vector<1x1x128xf32> to vector<1x128xf32>
    %73 = vector.broadcast %72 : vector<1x128xf32> to vector<200x128xf32>
    %74 = arith.addf %70, %73 : vector<200x128xf32>
    %c2_i32_58 = arith.constant 2 : i32
    %75 = arith.cmpi sge, %arg0, %c2_i32_58 : i32
    %c2_i32_59 = arith.constant 2 : i32
    %c0_i32_60 = arith.constant 0 : i32
    %76 = arith.cmpi eq, %c2_i32_59, %c0_i32_60 : i32
    %c1_i32_61 = arith.constant 1 : i32
    %77 = arith.select %76, %c1_i32_61, %c2_i32_59 : i32
    %78 = arith.remsi %arg0, %77 : i32
    %c0_i32_62 = arith.constant 0 : i32
    %79 = arith.cmpi ne, %78, %c0_i32_62 : i32
    %c0_i32_63 = arith.constant 0 : i32
    %80 = arith.cmpi slt, %78, %c0_i32_63 : i32
    %c0_i32_64 = arith.constant 0 : i32
    %81 = arith.cmpi slt, %77, %c0_i32_64 : i32
    %82 = arith.xori %80, %81 : i1
    %83 = arith.andi %82, %79 : i1
    %84 = arith.addi %78, %77 : i32
    %85 = arith.select %83, %84, %78 : i32
    %c0_i32_65 = arith.constant 0 : i32
    %86 = arith.cmpi eq, %85, %c0_i32_65 : i32
    %87 = arith.andi %75, %86 : i1
    %c0_66 = arith.constant 0 : index
    %c0_67 = arith.constant 0 : index
    %88 = vector.load %arg7[%c0_66, %c0_67] : memref<200x128xf32, #tpu.memory_space<vmem>>, vector<200x128xf32>
    %89 = arith.addf %74, %88 : vector<200x128xf32>
    %90 = arith.select %87, %89, %74 : vector<200x128xf32>
    %cst_68 = arith.constant 0.000000e+00 : f32
    %91 = vector.broadcast %cst_68 : f32 to vector<200x128xf32>
    %92 = arith.maximumf %90, %91 : vector<200x128xf32>
    %c0_69 = arith.constant 0 : index
    %c0_70 = arith.constant 0 : index
    %93 = vector.load %arg2[%c0_69, %c0_70] : memref<200x1xf32, #tpu.memory_space<vmem>>, vector<200x1xf32>
    %94 = vector.broadcast %93 : vector<200x1xf32> to vector<200x128xf32>
    %95 = arith.mulf %92, %94 : vector<200x128xf32>
    %c16_71 = arith.constant 16 : index
    %c0_72 = arith.constant 0 : index
    %96 = vector.load %arg6[%c16_71, %c0_72] : memref<232x128xf32, #tpu.memory_space<vmem>>, vector<200x128xf32>
    tpu.vector_store %arg6[%c16_71, %c0_72], %95 {strides = array<i32>} : memref<232x128xf32, #tpu.memory_space<vmem>>, vector<200x128xf32>,
    %c10_i32 = arith.constant 10 : i32
    %97 = arith.cmpi eq, %arg0, %c10_i32 : i32
    %98 = arith.extui %97 : i1 to i32
    %c0_i32_73 = arith.constant 0 : i32
    %99 = arith.cmpi ne, %98, %c0_i32_73 : i32
    scf.if %99 {
      %c0_74 = arith.constant 0 : index
      %c0_75 = arith.constant 0 : index
      %100 = vector.load %arg5[%c0_74, %c0_75] : memref<200x128xf32, #tpu.memory_space<vmem>>, vector<200x128xf32>
      tpu.vector_store %arg5[%c0_74, %c0_75], %95 {strides = array<i32>} : memref<200x128xf32, #tpu.memory_space<vmem>>, vector<200x128xf32>,
    } else {
    }
    return
  }
  func.func @transform_0(%arg0: i32) -> (i32, i32) {
    %c0_i32 = arith.constant 0 : i32
    %c0_i32_0 = arith.constant 0 : i32
    %c0_i32_1 = arith.constant 0 : i32
    return %c0_i32, %c0_i32_0 : i32, i32
  }
  func.func @transform_1(%arg0: i32) -> (i32, i32) {
    %c0_i32 = arith.constant 0 : i32
    %c0_i32_0 = arith.constant 0 : i32
    %c0_i32_1 = arith.constant 0 : i32
    return %c0_i32, %c0_i32_0 : i32, i32
  }
  func.func @transform_2(%arg0: i32) -> (i32, i32, i32, i32) {
    %c0_i32 = arith.constant 0 : i32
    %c0_i32_0 = arith.constant 0 : i32
    %c0_i32_1 = arith.constant 0 : i32
    %c0_i32_2 = arith.constant 0 : i32
    return %arg0, %c0_i32, %c0_i32_0, %c0_i32_1 : i32, i32, i32, i32
  }
  func.func @transform_3(%arg0: i32) -> (i32, i32, i32) {
    %c0_i32 = arith.constant 0 : i32
    %c0_i32_0 = arith.constant 0 : i32
    %c0_i32_1 = arith.constant 0 : i32
    return %arg0, %c0_i32, %c0_i32_0 : i32, i32, i32
  }
  func.func @transform_4(%arg0: i32) -> (i32, i32) {
    %c0_i32 = arith.constant 0 : i32
    %c0_i32_0 = arith.constant 0 : i32
    %c0_i32_1 = arith.constant 0 : i32
    return %c0_i32, %c0_i32_0 : i32, i32
  }
}

module attributes {stable_mosaic.version = 11 : i64} {
  func.func @_heads_kernel(%arg0: memref<128x128xf32, #tpu.memory_space<vmem>>, %arg1: memref<128x1xf32, #tpu.memory_space<vmem>>, %arg2: memref<1x1xf32, #tpu.memory_space<vmem>>, %arg3: memref<128x32xf32, #tpu.memory_space<vmem>>, %arg4: memref<1x32xf32, #tpu.memory_space<vmem>>, %arg5: memref<64x128xf32, #tpu.memory_space<vmem>>, %arg6: memref<64x1xf32, #tpu.memory_space<vmem>>, %arg7: memref<2x64xf32, #tpu.memory_space<vmem>>, %arg8: memref<2x1xf32, #tpu.memory_space<vmem>>, %arg9: memref<2x1xf32, #tpu.memory_space<vmem>>, %arg10: memref<128x32xf32, #tpu.memory_space<vmem>>) attributes {dimension_semantics = [], scalar_prefetch = 0 : i64, scratch_operands = 0 : i64, tpu.core_type = #tpu.core_type<tc>} {
    %c0 = arith.constant 0 : index
    %c0_0 = arith.constant 0 : index
    %0 = vector.load %arg0[%c0, %c0_0] : memref<128x128xf32, #tpu.memory_space<vmem>>, vector<128x128xf32>
    %c0_1 = arith.constant 0 : index
    %c0_2 = arith.constant 0 : index
    %1 = vector.load %arg1[%c0_1, %c0_2] : memref<128x1xf32, #tpu.memory_space<vmem>>, vector<128x1xf32>
    %cst = arith.constant dense<0.000000e+00> : vector<128x1xf32>
    %2 = tpu.matmul %0, %1, %cst {dimension_numbers = #tpu.dot_dimension_numbers<[1], [0], [0], [1], [0, 0, 1, 1], [], []>} : vector<128x128xf32>, vector<128x1xf32>, vector<128x1xf32> -> vector<128x1xf32>
    %c0_3 = arith.constant 0 : index
    %c0_4 = arith.constant 0 : index
    %3 = vector.load %arg2[%c0_3, %c0_4] : memref<1x1xf32, #tpu.memory_space<vmem>>, vector<1x1xf32>
    %4 = vector.broadcast %3 : vector<1x1xf32> to vector<128x1xf32>
    %5 = arith.addf %2, %4 : vector<128x1xf32>
    %cst_5 = arith.constant 0.000000e+00 : f32
    %6 = vector.broadcast %cst_5 : f32 to vector<128x1xf32>
    %7 = arith.maximumf %5, %6 : vector<128x1xf32>
    %c0_6 = arith.constant 0 : index
    %c0_7 = arith.constant 0 : index
    %8 = vector.load %arg3[%c0_6, %c0_7] : memref<128x32xf32, #tpu.memory_space<vmem>>, vector<128x32xf32>
    %cst_8 = arith.constant dense<0.000000e+00> : vector<128x32xf32>
    %9 = tpu.matmul %0, %8, %cst_8 {dimension_numbers = #tpu.dot_dimension_numbers<[1], [0], [0], [1], [0, 0, 1, 1], [], []>} : vector<128x128xf32>, vector<128x32xf32>, vector<128x32xf32> -> vector<128x32xf32>
    %c0_9 = arith.constant 0 : index
    %c0_10 = arith.constant 0 : index
    %10 = vector.load %arg4[%c0_9, %c0_10] : memref<1x32xf32, #tpu.memory_space<vmem>>, vector<1x32xf32>
    %11 = vector.broadcast %10 : vector<1x32xf32> to vector<128x32xf32>
    %12 = arith.addf %9, %11 : vector<128x32xf32>
    %cst_11 = arith.constant 0.000000e+00 : f32
    %13 = vector.broadcast %cst_11 : f32 to vector<128x32xf32>
    %14 = arith.maximumf %12, %13 : vector<128x32xf32>
    %c0_12 = arith.constant 0 : index
    %c0_13 = arith.constant 0 : index
    %15 = vector.load %arg10[%c0_12, %c0_13] : memref<128x32xf32, #tpu.memory_space<vmem>>, vector<128x32xf32>
    tpu.vector_store %arg10[%c0_12, %c0_13], %14 {strides = array<i32>} : memref<128x32xf32, #tpu.memory_space<vmem>>, vector<128x32xf32>,
    %c0_14 = arith.constant 0 : index
    %c0_15 = arith.constant 0 : index
    %16 = vector.load %arg5[%c0_14, %c0_15] : memref<64x128xf32, #tpu.memory_space<vmem>>, vector<64x128xf32>
    %cst_16 = arith.constant dense<0.000000e+00> : vector<64x1xf32>
    %17 = tpu.matmul %16, %7, %cst_16 {dimension_numbers = #tpu.dot_dimension_numbers<[1], [0], [0], [1], [0, 0, 1, 1], [], []>} : vector<64x128xf32>, vector<128x1xf32>, vector<64x1xf32> -> vector<64x1xf32>
    %c0_17 = arith.constant 0 : index
    %c0_18 = arith.constant 0 : index
    %18 = vector.load %arg6[%c0_17, %c0_18] : memref<64x1xf32, #tpu.memory_space<vmem>>, vector<64x1xf32>
    %19 = arith.addf %17, %18 : vector<64x1xf32>
    %cst_19 = arith.constant 0.000000e+00 : f32
    %20 = vector.broadcast %cst_19 : f32 to vector<64x1xf32>
    %21 = arith.maximumf %19, %20 : vector<64x1xf32>
    %c0_20 = arith.constant 0 : index
    %c0_21 = arith.constant 0 : index
    %22 = vector.load %arg7[%c0_20, %c0_21] : memref<2x64xf32, #tpu.memory_space<vmem>>, vector<2x64xf32>
    %cst_22 = arith.constant dense<0.000000e+00> : vector<2x1xf32>
    %23 = tpu.matmul %22, %21, %cst_22 {dimension_numbers = #tpu.dot_dimension_numbers<[1], [0], [0], [1], [0, 0, 1, 1], [], []>} : vector<2x64xf32>, vector<64x1xf32>, vector<2x1xf32> -> vector<2x1xf32>
    %c0_23 = arith.constant 0 : index
    %c0_24 = arith.constant 0 : index
    %24 = vector.load %arg8[%c0_23, %c0_24] : memref<2x1xf32, #tpu.memory_space<vmem>>, vector<2x1xf32>
    %25 = arith.addf %23, %24 : vector<2x1xf32>
    %26 = math.tanh %25 : vector<2x1xf32>
    %c0_25 = arith.constant 0 : index
    %c0_26 = arith.constant 0 : index
    %27 = vector.load %arg9[%c0_25, %c0_26] : memref<2x1xf32, #tpu.memory_space<vmem>>, vector<2x1xf32>
    tpu.vector_store %arg9[%c0_25, %c0_26], %26 {strides = array<i32>} : memref<2x1xf32, #tpu.memory_space<vmem>>, vector<2x1xf32>,
    return
  }
}

module attributes {stable_mosaic.version = 11 : i64} {
  func.func @_policy_fc_softmax_kernel(%arg0: memref<2x2048xf32, #tpu.memory_space<vmem>>, %arg1: memref<2048x64xf32, #tpu.memory_space<vmem>>, %arg2: memref<1x64xf32, #tpu.memory_space<vmem>>, %arg3: memref<2x64xf32, #tpu.memory_space<vmem>>) attributes {dimension_semantics = [], scalar_prefetch = 0 : i64, scratch_operands = 0 : i64, tpu.core_type = #tpu.core_type<tc>} {
    %c0 = arith.constant 0 : index
    %c0_0 = arith.constant 0 : index
    %0 = vector.load %arg0[%c0, %c0_0] : memref<2x2048xf32, #tpu.memory_space<vmem>>, vector<2x2048xf32>
    %c0_1 = arith.constant 0 : index
    %c0_2 = arith.constant 0 : index
    %1 = vector.load %arg1[%c0_1, %c0_2] : memref<2048x64xf32, #tpu.memory_space<vmem>>, vector<2048x64xf32>
    %cst = arith.constant dense<0.000000e+00> : vector<2x64xf32>
    %2 = tpu.matmul %0, %1, %cst {dimension_numbers = #tpu.dot_dimension_numbers<[1], [0], [0], [1], [0, 0, 1, 1], [], []>} : vector<2x2048xf32>, vector<2048x64xf32>, vector<2x64xf32> -> vector<2x64xf32>
    %c0_3 = arith.constant 0 : index
    %c0_4 = arith.constant 0 : index
    %3 = vector.load %arg2[%c0_3, %c0_4] : memref<1x64xf32, #tpu.memory_space<vmem>>, vector<1x64xf32>
    %4 = vector.broadcast %3 : vector<1x64xf32> to vector<2x64xf32>
    %5 = arith.addf %2, %4 : vector<2x64xf32>
    %cst_5 = arith.constant dense<0xFF800000> : vector<2xf32>
    %6 = vector.multi_reduction <maximumf>, %5, %cst_5 [1] : vector<2x64xf32> to vector<2xf32>
    %7 = vector.shape_cast %6 : vector<2xf32> to vector<2x1xf32>
    %8 = vector.broadcast %7 : vector<2x1xf32> to vector<2x64xf32>
    %9 = arith.subf %5, %8 : vector<2x64xf32>
    %10 = math.exp %9 : vector<2x64xf32>
    %cst_6 = arith.constant dense<0.000000e+00> : vector<2xf32>
    %11 = vector.multi_reduction <add>, %10, %cst_6 [1] : vector<2x64xf32> to vector<2xf32>
    %12 = vector.shape_cast %11 : vector<2xf32> to vector<2x1xf32>
    %13 = vector.broadcast %12 : vector<2x1xf32> to vector<2x64xf32>
    %14 = arith.divf %10, %13 : vector<2x64xf32>
    %c0_7 = arith.constant 0 : index
    %c0_8 = arith.constant 0 : index
    %15 = vector.load %arg3[%c0_7, %c0_8] : memref<2x64xf32, #tpu.memory_space<vmem>>, vector<2x64xf32>
    tpu.vector_store %arg3[%c0_7, %c0_8], %14 {strides = array<i32>} : memref<2x64xf32, #tpu.memory_space<vmem>>, vector<2x64xf32>,
    return
  }
}

</mosaic_0001>

<llo_original>
// kernel: alphazero_forward.4
$region0: #{alphazero_forward.4}
  #allocation0 [shape = 'u32[]', space=smem, size = 0x4, offset = 0x4, fixed_abs, tag = 'smem constant byte address 0x4 - core index']
  #allocation1 [shape = 'u32[72,128]{1,0:T(1,128)}', space=vmem, size = 0x9000, scoped, tag = 'internal scratch']
  #allocation2 [shape = 'f32[1,1]{1,0:T(1,128)S(1)}', space=vmem, size = 0x200, scoped, tag = 'scoped memory for alphazero_forward.4']
  %s0 = inlined_call_operand.vmem [shape: f32[128,128], index: 0, kind: input, shape index: {}]
  %s1 = inlined_call_operand.vmem [shape: f32[128,1], index: 1, kind: input, shape index: {}]
  %s2 = inlined_call_operand.<no memory space> [shape: f32[1,1], index: 2, kind: input, shape index: {}]
  %s3 = inlined_call_operand.vmem [shape: f32[128,32], index: 3, kind: input, shape index: {}]
  %s4 = inlined_call_operand.hbm [shape: f32[1,32], index: 4, kind: input, shape index: {}]
  %s5 = inlined_call_operand.hbm [shape: f32[64,128], index: 5, kind: input, shape index: {}]
  %s6 = inlined_call_operand.vmem [shape: f32[64,1], index: 6, kind: input, shape index: {}]
  %s7 = inlined_call_operand.hbm [shape: f32[2,64], index: 7, kind: input, shape index: {}]
  %s8 = inlined_call_operand.vmem [shape: f32[2,1], index: 8, kind: input, shape index: {}]
  %s9 = inlined_call_operand.vmem [shape: f32[2,1], index: 9, kind: output, shape index: {0}]
  %s10 = inlined_call_operand.vmem [shape: f32[128,32], index: 10, kind: output, shape index: {1}]
  %11 = xla_tuple %s9, %s10
  %s12 = sld [smem:[#allocation0]]
  $region66: #{alphazero_forward.4} parent=0
    _
  %s14 = ssub.s32 1, %s12
  %s15 = scalar_select 0, %s14, %s12
  %v16 = vstv %s2
  %17 = vst [vmem:[#allocation2] sm:$0x1] %v16
  $region1: #{alphazero_forward.4} parent=0
    #allocation3 [shape = 'u8[512]{0}', space=vmem, size = 0x400, scoped, tag = 'input window, operand 4, single buffered']
    #allocation4 [shape = 's32[1]{0}', space=sflag, size = 0x4, scoped, tag = 'scoped memory for alphazero_forward.4']
    #allocation5 [shape = 'u8[32768]{0}', space=vmem, size = 0x8000, scoped, tag = 'input window, operand 5, single buffered']
    #allocation6 [shape = 's32[1]{0}', space=sflag, size = 0x4, scoped, tag = 'scoped memory for alphazero_forward.4']
    #allocation7 [shape = 'u8[1024]{0}', space=vmem, size = 0x400, scoped, tag = 'input window, operand 7, single buffered']
    %18 = vsyncpa [#allocation4], 0
    %19 = vsyncpa [#allocation6], 0
    // Predicated region
    $region2: #{alphazero_forward.4} parent=1 // pred_check
      _
    $region3: #{alphazero_forward.4} parent=1 // pred_check_branch
      %21 = sbr.rel (0) target = $region5
    $region4: #{alphazero_forward.4} parent=1 // pred_region
      _
    $region5: #{alphazero_forward.4} parent=1 // pred_fallthru
      _
    // Predicated region
    $region6: #{alphazero_forward.4} parent=1 // pred_check
      _
    $region7: #{alphazero_forward.4} parent=1 // pred_check_branch
      %23 = sbr.rel (0) target = $region9
    $region8: #{alphazero_forward.4} parent=1 // pred_region
      _
    $region9: #{alphazero_forward.4} parent=1 // pred_fallthru
      _
    // Predicated region
    $region10: #{alphazero_forward.4} parent=1 // pred_check
      _
    $region11: #{alphazero_forward.4} parent=1 // pred_check_branch
      %25 = sbr.rel (0) target = $region13
    $region12: #{alphazero_forward.4} parent=1 // pred_region
      _
    $region13: #{alphazero_forward.4} parent=1 // pred_fallthru
      _
    // Predicated region
    $region14: #{alphazero_forward.4} parent=1 // pred_check
      _
    $region15: #{alphazero_forward.4} parent=1 // pred_check_branch
      %27 = sbr.rel (0) target = $region17
    $region16: #{alphazero_forward.4} parent=1 // pred_region
      _
    $region17: #{alphazero_forward.4} parent=1 // pred_fallthru
      _
    // Predicated region
    $region18: #{alphazero_forward.4} parent=1 // pred_check
      _
    $region19: #{alphazero_forward.4} parent=1 // pred_check_branch
      %29 = sbr.rel (0) target = $region21
    $region20: #{alphazero_forward.4} parent=1 // pred_region
      %31 = vsyncadd [#allocation4], 0
      %s33 = sshll.u32 %s4, 4
      %s34 = int_to_ptr.hbm [resolvable:$true] %s33
      %s35 = sshll.u32 [#allocation3], 4
      %s36 = int_to_ptr.vmem [resolvable:$true] %s35
      %38 = dma.hbm_to_vmem [thread:$0]  %s34, 16, %s36, [#allocation4]
    $region21: #{alphazero_forward.4} parent=1 // pred_fallthru
      _
    // Predicated region
    $region22: #{alphazero_forward.4} parent=1 // pred_check
      _
    $region23: #{alphazero_forward.4} parent=1 // pred_check_branch
      %40 = sbr.rel (0) target = $region25
    $region24: #{alphazero_forward.4} parent=1 // pred_region
      %42 = vsyncadd [#allocation6], 0
      %s43 = sshll.u32 %s5, 4
      %s44 = int_to_ptr.hbm [resolvable:$true] %s43
      %s45 = sshll.u32 [#allocation5], 4
      %s46 = int_to_ptr.vmem [resolvable:$true] %s45
      %51 = dma.hbm_to_vmem [thread:$0]  %s44, 1024, %s46, [#allocation6], 128, 128, 8
    $region25: #{alphazero_forward.4} parent=1 // pred_fallthru
      _
    // Predicated region
    $region26: #{alphazero_forward.4} parent=1 // pred_check
      _
    $region27: #{alphazero_forward.4} parent=1 // pred_check_branch
      %53 = sbr.rel (0) target = $region29
    $region28: #{alphazero_forward.4} parent=1 // pred_region
      _
    $region29: #{alphazero_forward.4} parent=1 // pred_fallthru
      _
    // Predicated region
    $region30: #{alphazero_forward.4} parent=1 // pred_check
      _
    $region31: #{alphazero_forward.4} parent=1 // pred_check_branch
      %55 = sbr.rel (0) target = $region33
    $region32: #{alphazero_forward.4} parent=1 // pred_region
      %57 = vsyncadd [#allocation6], 0
      %s59 = sshll.u32 %s7, 4
      %s60 = int_to_ptr.hbm [resolvable:$true] %s59
      %s61 = sshll.u32 [#allocation7], 4
      %s62 = int_to_ptr.vmem [resolvable:$true] %s61
      %64 = dma.hbm_to_vmem [thread:$0]  %s60, 32, %s62, [#allocation6]
    $region33: #{alphazero_forward.4} parent=1 // pred_fallthru
      _
    // Predicated region
    $region34: #{alphazero_forward.4} parent=1 // pred_check
      _
    $region35: #{alphazero_forward.4} parent=1 // pred_check_branch
      %66 = sbr.rel (0) target = $region37
    $region36: #{alphazero_forward.4} parent=1 // pred_region
      _
    $region37: #{alphazero_forward.4} parent=1 // pred_fallthru
      _
    // Predicated region
    $region38: #{alphazero_forward.4} parent=1 // pred_check
      _
    $region39: #{alphazero_forward.4} parent=1 // pred_check_branch
      %68 = sbr.rel (0) target = $region41
    $region40: #{alphazero_forward.4} parent=1 // pred_region
      %70 = dma.done [#allocation4], 16
    $region41: #{alphazero_forward.4} parent=1 // pred_fallthru
      _
    // Predicated region
    $region42: #{alphazero_forward.4} parent=1 // pred_check
      _
    $region43: #{alphazero_forward.4} parent=1 // pred_check_branch
      %72 = sbr.rel (0) target = $region45
    $region44: #{alphazero_forward.4} parent=1 // pred_region
      %74 = dma.done [#allocation6], 1024
    $region45: #{alphazero_forward.4} parent=1 // pred_fallthru
      _
    // Predicated region
    $region46: #{alphazero_forward.4} parent=1 // pred_check
      _
    $region47: #{alphazero_forward.4} parent=1 // pred_check_branch
      %76 = sbr.rel (0) target = $region49
    $region48: #{alphazero_forward.4} parent=1 // pred_region
      %78 = dma.done [#allocation6], 32
    $region49: #{alphazero_forward.4} parent=1 // pred_fallthru
      _
    %v79 = vld [vmem:[%s0] sm:$0xff]
    %v80 = vld [vmem:[%s0 + $0x8] sm:$0xff]
    %v81 = vld [vmem:[%s0 + $0x10] sm:$0xff]
    %v82 = vld [vmem:[%s0 + $0x18] sm:$0xff]
    %v83 = vld [vmem:[%s0 + $0x20] sm:$0xff]
    %v84 = vld [vmem:[%s0 + $0x28] sm:$0xff]
    %v85 = vld [vmem:[%s0 + $0x30] sm:$0xff]
    %v86 = vld [vmem:[%s0 + $0x38] sm:$0xff]
    %v87 = vld [vmem:[%s0 + $0x40] sm:$0xff]
    %v88 = vld [vmem:[%s0 + $0x48] sm:$0xff]
    %v89 = vld [vmem:[%s0 + $0x50] sm:$0xff]
    %v90 = vld [vmem:[%s0 + $0x58] sm:$0xff]
    %v91 = vld [vmem:[%s0 + $0x60] sm:$0xff]
    %v92 = vld [vmem:[%s0 + $0x68] sm:$0xff]
    %v93 = vld [vmem:[%s0 + $0x70] sm:$0xff]
    %v94 = vld [vmem:[%s0 + $0x78] sm:$0xff]
    %v95 = vld [vmem:[%s1] sm:$0xff]
    %v96 = vld [vmem:[%s1 + $0x8] sm:$0xff]
    %v97 = vld [vmem:[%s1 + $0x10] sm:$0xff]
    %v98 = vld [vmem:[%s1 + $0x18] sm:$0xff]
    %v99 = vld [vmem:[%s1 + $0x20] sm:$0xff]
    %v100 = vld [vmem:[%s1 + $0x28] sm:$0xff]
    %v101 = vld [vmem:[%s1 + $0x30] sm:$0xff]
    %v102 = vld [vmem:[%s1 + $0x38] sm:$0xff]
    %v103 = vld [vmem:[%s1 + $0x40] sm:$0xff]
    %v104 = vld [vmem:[%s1 + $0x48] sm:$0xff]
    %v105 = vld [vmem:[%s1 + $0x50] sm:$0xff]
    %v106 = vld [vmem:[%s1 + $0x58] sm:$0xff]
    %v107 = vld [vmem:[%s1 + $0x60] sm:$0xff]
    %v108 = vld [vmem:[%s1 + $0x68] sm:$0xff]
    %v109 = vld [vmem:[%s1 + $0x70] sm:$0xff]
    %v110 = vld [vmem:[%s1 + $0x78] sm:$0xff]
    %v111 = vld [vmem:[#allocation2] sm:$0x1]
    %v113 = vperm.slane %v111, 0
    %115 = vmatpush.msra.mxu0 %v110
    %116 = vmatpush.msra.mxu0 %v109
    %117 = vmatpush.msra.mxu0 %v108
    %118 = vmatpush.msra.mxu0 %v107
    %119 = vmatpush.msra.mxu0 %v106
    %120 = vmatpush.msra.mxu0 %v105
    %121 = vmatpush.msra.mxu0 %v104
    %122 = vmatpush.msra.mxu0 %v103
    %123 = vmatpush.msra.mxu0 %v102
    %124 = vmatpush.msra.mxu0 %v101
    %125 = vmatpush.msra.mxu0 %v100
    %126 = vmatpush.msra.mxu0 %v99
    %127 = vmatpush.msra.mxu0 %v98
    %128 = vmatpush.msra.mxu0 %v97
    %129 = vmatpush.msra.mxu0 %v96
    %130 = vmatpush.msra.mxu0 %v95
    %131 = vmatmul.f32.gmra.mxu0 %v79
    %v132 = vpop.f32.mrf.mxu0
    %v133 = vadd.f32 %v113, %v132
    %134 = vmatmul.f32.gmra.mxu0 %v80
    %v135 = vpop.f32.mrf.mxu0
    %v136 = vadd.f32 %v113, %v135
    %137 = vmatmul.f32.gmra.mxu0 %v81
    %v138 = vpop.f32.mrf.mxu0
    %v139 = vadd.f32 %v113, %v138
    %140 = vmatmul.f32.gmra.mxu0 %v82
    %v141 = vpop.f32.mrf.mxu0
    %v142 = vadd.f32 %v113, %v141
    %143 = vmatmul.f32.gmra.mxu0 %v83
    %v144 = vpop.f32.mrf.mxu0
    %v145 = vadd.f32 %v113, %v144
    %146 = vmatmul.f32.gmra.mxu0 %v84
    %v147 = vpop.f32.mrf.mxu0
    %v148 = vadd.f32 %v113, %v147
    %149 = vmatmul.f32.gmra.mxu0 %v85
    %v150 = vpop.f32.mrf.mxu0
    %v151 = vadd.f32 %v113, %v150
    %152 = vmatmul.f32.gmra.mxu0 %v86
    %v153 = vpop.f32.mrf.mxu0
    %v154 = vadd.f32 %v113, %v153
    %155 = vmatmul.f32.gmra.mxu0 %v87
    %v156 = vpop.f32.mrf.mxu0
    %v157 = vadd.f32 %v113, %v156
    %158 = vmatmul.f32.gmra.mxu0 %v88
    %v159 = vpop.f32.mrf.mxu0
    %v160 = vadd.f32 %v113, %v159
    %161 = vmatmul.f32.gmra.mxu0 %v89
    %v162 = vpop.f32.mrf.mxu0
    %v163 = vadd.f32 %v113, %v162
    %164 = vmatmul.f32.gmra.mxu0 %v90
    %v165 = vpop.f32.mrf.mxu0
    %v166 = vadd.f32 %v113, %v165
    %167 = vmatmul.f32.gmra.mxu0 %v91
    %v168 = vpop.f32.mrf.mxu0
    %v169 = vadd.f32 %v113, %v168
    %170 = vmatmul.f32.gmra.mxu0 %v92
    %v171 = vpop.f32.mrf.mxu0
    %v172 = vadd.f32 %v113, %v171
    %173 = vmatmul.f32.gmra.mxu0 %v93
    %v174 = vpop.f32.mrf.mxu0
    %v175 = vadd.f32 %v113, %v174
    %176 = vmatmul.f32.gmra.mxu0 %v94
    %v177 = vpop.f32.mrf.mxu0
    %v178 = vadd.f32 %v113, %v177
    %179 = vdwg.mxu0
    %v180 = vmax.f32 %v133, 0.0
    %v181 = vmax.f32 %v136, 0.0
    %v182 = vmax.f32 %v139, 0.0
    %v183 = vmax.f32 %v142, 0.0
    %v184 = vmax.f32 %v145, 0.0
    %v185 = vmax.f32 %v148, 0.0
    %v186 = vmax.f32 %v151, 0.0
    %v187 = vmax.f32 %v154, 0.0
    %v188 = vmax.f32 %v157, 0.0
    %v189 = vmax.f32 %v160, 0.0
    %v190 = vmax.f32 %v163, 0.0
    %v191 = vmax.f32 %v166, 0.0
    %v192 = vmax.f32 %v169, 0.0
    %v193 = vmax.f32 %v172, 0.0
    %v194 = vmax.f32 %v175, 0.0
    %v195 = vmax.f32 %v178, 0.0
    %v196 = vld [vmem:[%s3] sm:$0xff]
    %v197 = vld [vmem:[%s3 + $0x8] sm:$0xff]
    %v198 = vld [vmem:[%s3 + $0x10] sm:$0xff]
    %v199 = vld [vmem:[%s3 + $0x18] sm:$0xff]
    %v200 = vld [vmem:[%s3 + $0x20] sm:$0xff]
    %v201 = vld [vmem:[%s3 + $0x28] sm:$0xff]
    %v202 = vld [vmem:[%s3 + $0x30] sm:$0xff]
    %v203 = vld [vmem:[%s3 + $0x38] sm:$0xff]
    %v204 = vld [vmem:[%s3 + $0x40] sm:$0xff]
    %v205 = vld [vmem:[%s3 + $0x48] sm:$0xff]
    %v206 = vld [vmem:[%s3 + $0x50] sm:$0xff]
    %v207 = vld [vmem:[%s3 + $0x58] sm:$0xff]
    %v208 = vld [vmem:[%s3 + $0x60] sm:$0xff]
    %v209 = vld [vmem:[%s3 + $0x68] sm:$0xff]
    %v210 = vld [vmem:[%s3 + $0x70] sm:$0xff]
    %v211 = vld [vmem:[%s3 + $0x78] sm:$0xff]
    %v212 = vld [vmem:[#allocation3] sm:$0x1]
    %v214 = vperm.slane %v212, 0
    %216 = vmatpush.msra.mxu0 %v211
    %217 = vmatpush.msra.mxu0 %v210
    %218 = vmatpush.msra.mxu0 %v209
    %219 = vmatpush.msra.mxu0 %v208
    %220 = vmatpush.msra.mxu0 %v207
    %221 = vmatpush.msra.mxu0 %v206
    %222 = vmatpush.msra.mxu0 %v205
    %223 = vmatpush.msra.mxu0 %v204
    %224 = vmatpush.msra.mxu0 %v203
    %225 = vmatpush.msra.mxu0 %v202
    %226 = vmatpush.msra.mxu0 %v201
    %227 = vmatpush.msra.mxu0 %v200
    %228 = vmatpush.msra.mxu0 %v199
    %229 = vmatpush.msra.mxu0 %v198
    %230 = vmatpush.msra.mxu0 %v197
    %231 = vmatpush.msra.mxu0 %v196
    %232 = vmatmul.f32.gmra.mxu0 %v79
    %v233 = vpop.f32.mrf.mxu0
    %v234 = vadd.f32 %v214, %v233
    %235 = vmatmul.f32.gmra.mxu0 %v80
    %v236 = vpop.f32.mrf.mxu0
    %v237 = vadd.f32 %v214, %v236
    %238 = vmatmul.f32.gmra.mxu0 %v81
    %v239 = vpop.f32.mrf.mxu0
    %v240 = vadd.f32 %v214, %v239
    %241 = vmatmul.f32.gmra.mxu0 %v82
    %v242 = vpop.f32.mrf.mxu0
    %v243 = vadd.f32 %v214, %v242
    %244 = vmatmul.f32.gmra.mxu0 %v83
    %v245 = vpop.f32.mrf.mxu0
    %v246 = vadd.f32 %v214, %v245
    %247 = vmatmul.f32.gmra.mxu0 %v84
    %v248 = vpop.f32.mrf.mxu0
    %v249 = vadd.f32 %v214, %v248
    %250 = vmatmul.f32.gmra.mxu0 %v85
    %v251 = vpop.f32.mrf.mxu0
    %v252 = vadd.f32 %v214, %v251
    %253 = vmatmul.f32.gmra.mxu0 %v86
    %v254 = vpop.f32.mrf.mxu0
    %v255 = vadd.f32 %v214, %v254
    %256 = vmatmul.f32.gmra.mxu0 %v87
    %v257 = vpop.f32.mrf.mxu0
    %v258 = vadd.f32 %v214, %v257
    %259 = vmatmul.f32.gmra.mxu0 %v88
    %v260 = vpop.f32.mrf.mxu0
    %v261 = vadd.f32 %v214, %v260
    %262 = vmatmul.f32.gmra.mxu0 %v89
    %v263 = vpop.f32.mrf.mxu0
    %v264 = vadd.f32 %v214, %v263
    %265 = vmatmul.f32.gmra.mxu0 %v90
    %v266 = vpop.f32.mrf.mxu0
    %v267 = vadd.f32 %v214, %v266
    %268 = vmatmul.f32.gmra.mxu0 %v91
    %v269 = vpop.f32.mrf.mxu0
    %v270 = vadd.f32 %v214, %v269
    %271 = vmatmul.f32.gmra.mxu0 %v92
    %v272 = vpop.f32.mrf.mxu0
    %v273 = vadd.f32 %v214, %v272
    %274 = vmatmul.f32.gmra.mxu0 %v93
    %v275 = vpop.f32.mrf.mxu0
    %v276 = vadd.f32 %v214, %v275
    %277 = vmatmul.f32.gmra.mxu0 %v94
    %v278 = vpop.f32.mrf.mxu0
    %v279 = vadd.f32 %v214, %v278
    %280 = vdwg.mxu0
    %v281 = vmax.f32 %v234, 0.0
    %v282 = vmax.f32 %v237, 0.0
    %v283 = vmax.f32 %v240, 0.0
    %v284 = vmax.f32 %v243, 0.0
    %v285 = vmax.f32 %v246, 0.0
    %v286 = vmax.f32 %v249, 0.0
    %v287 = vmax.f32 %v252, 0.0
    %v288 = vmax.f32 %v255, 0.0
    %v289 = vmax.f32 %v258, 0.0
    %v290 = vmax.f32 %v261, 0.0
    %v291 = vmax.f32 %v264, 0.0
    %v292 = vmax.f32 %v267, 0.0
    %v293 = vmax.f32 %v270, 0.0
    %v294 = vmax.f32 %v273, 0.0
    %v295 = vmax.f32 %v276, 0.0
    %v296 = vmax.f32 %v279, 0.0
    %vm297 = vcmask 261120
    %298 = vst.msk [vmem:[%s10] sm:$0xff] %vm297, %v281
    %299 = vst.msk [vmem:[%s10 + $0x8] sm:$0xff] %vm297, %v282
    %300 = vst.msk [vmem:[%s10 + $0x10] sm:$0xff] %vm297, %v283
    %301 = vst.msk [vmem:[%s10 + $0x18] sm:$0xff] %vm297, %v284
    %302 = vst.msk [vmem:[%s10 + $0x20] sm:$0xff] %vm297, %v285
    %303 = vst.msk [vmem:[%s10 + $0x28] sm:$0xff] %vm297, %v286
    %304 = vst.msk [vmem:[%s10 + $0x30] sm:$0xff] %vm297, %v287
    %305 = vst.msk [vmem:[%s10 + $0x38] sm:$0xff] %vm297, %v288
    %306 = vst.msk [vmem:[%s10 + $0x40] sm:$0xff] %vm297, %v289
    %307 = vst.msk [vmem:[%s10 + $0x48] sm:$0xff] %vm297, %v290
    %308 = vst.msk [vmem:[%s10 + $0x50] sm:$0xff] %vm297, %v291
    %309 = vst.msk [vmem:[%s10 + $0x58] sm:$0xff] %vm297, %v292
    %310 = vst.msk [vmem:[%s10 + $0x60] sm:$0xff] %vm297, %v293
    %311 = vst.msk [vmem:[%s10 + $0x68] sm:$0xff] %vm297, %v294
    %312 = vst.msk [vmem:[%s10 + $0x70] sm:$0xff] %vm297, %v295
    %313 = vst.msk [vmem:[%s10 + $0x78] sm:$0xff] %vm297, %v296
    %v314 = vld [vmem:[#allocation5] sm:$0xff]
    %v315 = vld [vmem:[#allocation5 + $0x8] sm:$0xff]
    %v316 = vld [vmem:[#allocation5 + $0x10] sm:$0xff]
    %v317 = vld [vmem:[#allocation5 + $0x18] sm:$0xff]
    %v318 = vld [vmem:[#allocation5 + $0x20] sm:$0xff]
    %v319 = vld [vmem:[#allocation5 + $0x28] sm:$0xff]
    %v320 = vld [vmem:[#allocation5 + $0x30] sm:$0xff]
    %v321 = vld [vmem:[#allocation5 + $0x38] sm:$0xff]
    %v322 = vld [vmem:[%s6] sm:$0xff]
    %v323 = vld [vmem:[%s6 + $0x8] sm:$0xff]
    %v324 = vld [vmem:[%s6 + $0x10] sm:$0xff]
    %v325 = vld [vmem:[%s6 + $0x18] sm:$0xff]
    %v326 = vld [vmem:[%s6 + $0x20] sm:$0xff]
    %v327 = vld [vmem:[%s6 + $0x28] sm:$0xff]
    %v328 = vld [vmem:[%s6 + $0x30] sm:$0xff]
    %v329 = vld [vmem:[%s6 + $0x38] sm:$0xff]
    %330 = vmatpush.msra.mxu0 %v195
    %331 = vmatpush.msra.mxu0 %v194
    %332 = vmatpush.msra.mxu0 %v193
    %333 = vmatpush.msra.mxu0 %v192
    %334 = vmatpush.msra.mxu0 %v191
    %335 = vmatpush.msra.mxu0 %v190
    %336 = vmatpush.msra.mxu0 %v189
    %337 = vmatpush.msra.mxu0 %v188
    %338 = vmatpush.msra.mxu0 %v187
    %339 = vmatpush.msra.mxu0 %v186
    %340 = vmatpush.msra.mxu0 %v185
    %341 = vmatpush.msra.mxu0 %v184
    %342 = vmatpush.msra.mxu0 %v183
    %343 = vmatpush.msra.mxu0 %v182
    %344 = vmatpush.msra.mxu0 %v181
    %345 = vmatpush.msra.mxu0 %v180
    %346 = vmatmul.f32.gmra.mxu0 %v314
    %v347 = vpop.f32.mrf.mxu0
    %v348 = vadd.f32 %v322, %v347
    %349 = vmatmul.f32.gmra.mxu0 %v315
    %v350 = vpop.f32.mrf.mxu0
    %v351 = vadd.f32 %v323, %v350
    %352 = vmatmul.f32.gmra.mxu0 %v316
    %v353 = vpop.f32.mrf.mxu0
    %v354 = vadd.f32 %v324, %v353
    %355 = vmatmul.f32.gmra.mxu0 %v317
    %v356 = vpop.f32.mrf.mxu0
    %v357 = vadd.f32 %v325, %v356
    %358 = vmatmul.f32.gmra.mxu0 %v318
    %v359 = vpop.f32.mrf.mxu0
    %v360 = vadd.f32 %v326, %v359
    %361 = vmatmul.f32.gmra.mxu0 %v319
    %v362 = vpop.f32.mrf.mxu0
    %v363 = vadd.f32 %v327, %v362
    %364 = vmatmul.f32.gmra.mxu0 %v320
    %v365 = vpop.f32.mrf.mxu0
    %v366 = vadd.f32 %v328, %v365
    %367 = vmatmul.f32.gmra.mxu0 %v321
    %v368 = vpop.f32.mrf.mxu0
    %v369 = vadd.f32 %v329, %v368
    %370 = vdwg.mxu0
    %v371 = vmax.f32 %v348, 0.0
    %v372 = vmax.f32 %v351, 0.0
    %v373 = vmax.f32 %v354, 0.0
    %v374 = vmax.f32 %v357, 0.0
    %v375 = vmax.f32 %v360, 0.0
    %v376 = vmax.f32 %v363, 0.0
    %v377 = vmax.f32 %v366, 0.0
    %v378 = vmax.f32 %v369, 0.0
    %v379 = vld [vmem:[#allocation7] sm:$0x3]
    %v380 = vld [vmem:[%s8] sm:$0x3]
    %vm381 = vcmask 523264
    %v383 = vsel %vm381, %v379, 0
    %385 = vmatpush.msra.mxu0 0.0
    %386 = vmatpush.msra.mxu0 0.0
    %387 = vmatpush.msra.mxu0 0.0
    %388 = vmatpush.msra.mxu0 0.0
    %389 = vmatpush.msra.mxu0 0.0
    %390 = vmatpush.msra.mxu0 0.0
    %391 = vmatpush.msra.mxu0 0.0
    %392 = vmatpush.msra.mxu0 0.0
    %393 = vmatpush.msra.mxu0 %v378
    %394 = vmatpush.msra.mxu0 %v377
    %395 = vmatpush.msra.mxu0 %v376
    %396 = vmatpush.msra.mxu0 %v375
    %397 = vmatpush.msra.mxu0 %v374
    %398 = vmatpush.msra.mxu0 %v373
    %399 = vmatpush.msra.mxu0 %v372
    %400 = vmatpush.msra.mxu0 %v371
    %401 = vmatmul.f32.gmra.mxu0 %v383
    %v402 = vpop.f32.mrf.mxu0
    %v403 = vadd.f32 %v380, %v402
    %404 = vdwg.mxu0
    %v405 = vtanh.pop %v403
    %vm406 = vcmask 1024
    %407 = vst.msk [vmem:[%s9] sm:$0x3] %vm406, %v405
    // Predicated region
    $region50: #{alphazero_forward.4} parent=1 // pred_check
      _
    $region51: #{alphazero_forward.4} parent=1 // pred_check_branch
      %409 = sbr.rel (0) target = $region53
    $region52: #{alphazero_forward.4} parent=1 // pred_region
      _
    $region53: #{alphazero_forward.4} parent=1 // pred_fallthru
      _
    // Predicated region
    $region54: #{alphazero_forward.4} parent=1 // pred_check
      _
    $region55: #{alphazero_forward.4} parent=1 // pred_check_branch
      %411 = sbr.rel (0) target = $region57
    $region56: #{alphazero_forward.4} parent=1 // pred_region
      _
    $region57: #{alphazero_forward.4} parent=1 // pred_fallthru
      _
    // Predicated region
    $region58: #{alphazero_forward.4} parent=1 // pred_check
      _
    $region59: #{alphazero_forward.4} parent=1 // pred_check_branch
      %413 = sbr.rel (0) target = $region61
    $region60: #{alphazero_forward.4} parent=1 // pred_region
      _
    $region61: #{alphazero_forward.4} parent=1 // pred_fallthru
      _
    // Predicated region
    $region62: #{alphazero_forward.4} parent=1 // pred_check
      _
    $region63: #{alphazero_forward.4} parent=1 // pred_check_branch
      %415 = sbr.rel (0) target = $region65
    $region64: #{alphazero_forward.4} parent=1 // pred_region
      _
    $region65: #{alphazero_forward.4} parent=1 // pred_fallthru
      _
    %416 = vsyncpa [#allocation4], 1
    %417 = vsyncpa [#allocation6], 1

// kernel: alphazero_forward.3
$region0: #{alphazero_forward.3}
  #allocation0 [shape = 'u32[]', space=smem, size = 0x4, offset = 0x4, fixed_abs, tag = 'smem constant byte address 0x4 - core index']
  #allocation1 [shape = 'u32[72,128]{1,0:T(1,128)}', space=vmem, size = 0x9000, scoped, tag = 'internal scratch']
  #allocation2 [shape = 'f32[232,128]{1,0:T(8,128)}', space=vmem, size = 0x1d000, scoped, tag = 'scratch operand']
  #allocation3 [shape = 'f32[200,128]{1,0:T(8,128)}', space=vmem, size = 0x19000, scoped, tag = 'scratch operand']
  %s0 = inlined_call_operand.vmem [shape: f32[200,128], index: 0, kind: input, shape index: {}]
  %s1 = inlined_call_operand.vmem [shape: f32[200,1], index: 1, kind: input, shape index: {}]
  %s2 = inlined_call_operand.hbm [shape: bf16[11,9,128,128], index: 2, kind: input, shape index: {}]
  %s3 = inlined_call_operand.hbm [shape: f32[11,1,128], index: 3, kind: input, shape index: {}]
  %s4 = inlined_call_operand.vmem [shape: f32[200,128], index: 4, kind: output, shape index: {}]
  %s5 = sld [smem:[#allocation0]]
  $region69: #{alphazero_forward.3} parent=0
    _
  %s7 = ssub.s32 1, %s5
  %s8 = scalar_select 0, %s7, %s5
  $region1: #{alphazero_forward.3} parent=0
    #allocation4 [shape = 'u8[589824]{0}', space=vmem, size = 0x90000, scoped, tag = 'input window, operand 2']
    #allocation5 [shape = 's32[2]{0}', space=sflag, size = 0x8, scoped, tag = 'scoped memory for alphazero_forward.3']
    #allocation6 [shape = 'u8[1024]{0}', space=vmem, size = 0x400, scoped, tag = 'input window, operand 3']
    #allocation7 [shape = 's32[2]{0}', space=sflag, size = 0x8, scoped, tag = 'scoped memory for alphazero_forward.3']
    %9 = vsyncpa [#allocation5], 0
    %s10 = scalar_lea.sflag [#allocation5], 1
    %11 = vsyncpa %s10, 0
    %12 = vsyncpa [#allocation7], 0
    %s13 = scalar_lea.sflag [#allocation7], 1
    %14 = vsyncpa %s13, 0
    loop: start=0, step=1, limit=13
    $region2: #{alphazero_forward.3} parent=1 // loop_pre_header
      _
    $region3: #{alphazero_forward.3} parent=1 // loop_header
      %s16 = sphi 0, %s20
      %p17 = scmp.ge.s32.totalorder %s16, 13
      %s24 = sphi 0, %s24
      %s26 = sphi 0, %s24
      %s27 = sphi 0, %s26
      %s41 = sphi 0, %s27
      %s45 = sphi 0, %s45
      %s47 = sphi 0, %s45
      %s48 = sphi 0, %s47
      %s62 = sphi 0, %s48
      %s68 = sphi 0, %s70
      %s71 = sphi 0, %s68
      %s72 = sphi 0, %s71
      %s88 = sphi 0, %s72
      %s94 = sphi 0, %s96
      %s97 = sphi 0, %s94
      %s98 = sphi 0, %s97
      %s114 = sphi 0, %s98
      %s118 = sphi 0, %s118
      %s120 = sphi 0, %s118
      %s121 = sphi 0, %s120
      %s135 = sphi 0, %s121
    $region4: #{alphazero_forward.3} parent=1 // loop_header_branch
      %19 = sbr.rel (%p17) target = $region8
    $region5: #{alphazero_forward.3} parent=1 // loop_body
      %s21 = ssub.s32 %s16, 1
      %s22 = ssub.s32 %s16, 2
      %s23 = sadd.s32 %s16, 1
      %s25 = sadd.s32 %s24, 1
      %p28 = scmp.eq.s32.totalorder %s16, 10
      %p29 = scmp.ne.s32.totalorder %s24, %s26
      %p30 = scmp.eq.s32.totalorder %s16, 0
      %p31 = por %p29, %p30
      %p32 = scmp.ne.s32.totalorder %s24, %s26
      %p33 = scmp.eq.s32.totalorder %s21, 10
      %p34 = por %p32, %p33
      %p35 = scmp.ne.s32.totalorder %s26, %s27
      %p36 = scmp.eq.s32.totalorder %s21, 0
      %p37 = por %p35, %p36
      %p38 = scmp.ne.s32.totalorder %s26, %s27
      %p39 = scmp.eq.s32.totalorder %s22, 10
      %p40 = por %p38, %p39
      %p42 = scmp.ne.s32.totalorder %s27, %s41
      %p43 = scmp.eq.s32.totalorder %s22, 0
      %p44 = por %p42, %p43
      %s46 = sadd.s32 %s45, 1
      %p49 = scmp.eq.s32.totalorder %s16, 10
      %p50 = scmp.ne.s32.totalorder %s45, %s47
      %p51 = scmp.eq.s32.totalorder %s16, 0
      %p52 = por %p50, %p51
      %p53 = scmp.ne.s32.totalorder %s45, %s47
      %p54 = scmp.eq.s32.totalorder %s21, 10
      %p55 = por %p53, %p54
      %p56 = scmp.ne.s32.totalorder %s47, %s48
      %p57 = scmp.eq.s32.totalorder %s21, 0
      %p58 = por %p56, %p57
      %p59 = scmp.ne.s32.totalorder %s47, %s48
      %p60 = scmp.eq.s32.totalorder %s22, 10
      %p61 = por %p59, %p60
      %p63 = scmp.ne.s32.totalorder %s48, %s62
      %p64 = scmp.eq.s32.totalorder %s22, 0
      %p65 = por %p63, %p64
      %s66 = ssub.s32 %s16, %s23
      %p67 = scmp.eq.s32.totalorder %s66, 0
      %s69 = sadd.s32 %s68, 1
      %s70 = scalar_select %p67, %s68, %s69
      %p73 = pneg %p67
      %p74 = scmp.eq.s32.totalorder %s16, 10
      %p75 = por %p73, %p74
      %p76 = scmp.ne.s32.totalorder %s68, %s71
      %p77 = scmp.eq.s32.totalorder %s16, 0
      %p78 = por %p76, %p77
      %p79 = scmp.ne.s32.totalorder %s68, %s71
      %p80 = scmp.eq.s32.totalorder %s21, 10
      %p81 = por %p79, %p80
      %p82 = scmp.ne.s32.totalorder %s71, %s72
      %p83 = scmp.eq.s32.totalorder %s21, 0
      %p84 = por %p82, %p83
      %p85 = scmp.ne.s32.totalorder %s71, %s72
      %p86 = scmp.eq.s32.totalorder %s22, 10
      %p87 = por %p85, %p86
      %p89 = scmp.ne.s32.totalorder %s72, %s88
      %p90 = scmp.eq.s32.totalorder %s22, 0
      %p91 = por %p89, %p90
      %s92 = ssub.s32 %s16, %s23
      %p93 = scmp.eq.s32.totalorder %s92, 0
      %s95 = sadd.s32 %s94, 1
      %s96 = scalar_select %p93, %s94, %s95
      %p99 = pneg %p93
      %p100 = scmp.eq.s32.totalorder %s16, 10
      %p101 = por %p99, %p100
      %p102 = scmp.ne.s32.totalorder %s94, %s97
      %p103 = scmp.eq.s32.totalorder %s16, 0
      %p104 = por %p102, %p103
      %p105 = scmp.ne.s32.totalorder %s94, %s97
      %p106 = scmp.eq.s32.totalorder %s21, 10
      %p107 = por %p105, %p106
      %p108 = scmp.ne.s32.totalorder %s97, %s98
      %p109 = scmp.eq.s32.totalorder %s21, 0
      %p110 = por %p108, %p109
      %p111 = scmp.ne.s32.totalorder %s97, %s98
      %p112 = scmp.eq.s32.totalorder %s22, 10
      %p113 = por %p111, %p112
      %p115 = scmp.ne.s32.totalorder %s98, %s114
      %p116 = scmp.eq.s32.totalorder %s22, 0
      %p117 = por %p115, %p116
      %s119 = sadd.s32 %s118, 1
      %p122 = scmp.eq.s32.totalorder %s16, 10
      %p123 = scmp.ne.s32.totalorder %s118, %s120
      %p124 = scmp.eq.s32.totalorder %s16, 0
      %p125 = por %p123, %p124
      %p126 = scmp.ne.s32.totalorder %s118, %s120
      %p127 = scmp.eq.s32.totalorder %s21, 10
      %p128 = por %p126, %p127
      %p129 = scmp.ne.s32.totalorder %s120, %s121
      %p130 = scmp.eq.s32.totalorder %s21, 0
      %p131 = por %p129, %p130
      %p132 = scmp.ne.s32.totalorder %s120, %s121
      %p133 = scmp.eq.s32.totalorder %s22, 10
      %p134 = por %p132, %p133
      %p136 = scmp.ne.s32.totalorder %s121, %s135
      %p137 = scmp.eq.s32.totalorder %s22, 0
      %p138 = por %p136, %p137
      %p139 = scmp.le.s32.totalorder 1, %s16
      %p140 = scmp.lt.s32.totalorder %s16, 12
      %p141 = pnand %p139, %p140
      %p142 = pneg %p141
      // Predicated region
      $region9: #{alphazero_forward.3} parent=5 // pred_check
        _
      $region10: #{alphazero_forward.3} parent=5 // pred_check_branch
        %144 = sbr.rel (%p141) target = $region12
      $region11: #{alphazero_forward.3} parent=5 // pred_region
        %s145 = ssub.s32 %s16, 1
        // Predicated region
        $region13: #{alphazero_forward.3} parent=11 // pred_check
          %p146 = pneg %p37
        $region14: #{alphazero_forward.3} parent=11 // pred_check_branch
          %148 = sbr.rel (%p146) target = $region16
        $region15: #{alphazero_forward.3} parent=11 // pred_region
          _
        $region16: #{alphazero_forward.3} parent=11 // pred_fallthru
          _
        // Predicated region
        $region17: #{alphazero_forward.3} parent=11 // pred_check
          %p149 = pneg %p58
        $region18: #{alphazero_forward.3} parent=11 // pred_check_branch
          %151 = sbr.rel (%p149) target = $region20
        $region19: #{alphazero_forward.3} parent=11 // pred_region
          _
        $region20: #{alphazero_forward.3} parent=11 // pred_fallthru
          _
      $region12: #{alphazero_forward.3} parent=5 // pred_fallthru
        _
      %p152 = scmp.lt.s32.totalorder %s16, 11
      // Predicated region
      $region21: #{alphazero_forward.3} parent=5 // pred_check
        %p153 = pneg %p152
      $region22: #{alphazero_forward.3} parent=5 // pred_check_branch
        %155 = sbr.rel (%p153) target = $region24
      $region23: #{alphazero_forward.3} parent=5 // pred_region
        // Predicated region
        $region25: #{alphazero_forward.3} parent=23 // pred_check
          %p156 = pneg %p78
        $region26: #{alphazero_forward.3} parent=23 // pred_check_branch
          %158 = sbr.rel (%p156) target = $region28
        $region27: #{alphazero_forward.3} parent=23 // pred_region
          %s159 = sand.u32 %s68, 1
          %s160 = scalar_lea.sflag [#allocation5], %s159
          %s161 = sand.u32 %s68, 1
          %s162 = smul.addr %s161, 576
          %s163 = scalar_lea.vmem [#allocation4], %s162
          %165 = vsyncadd %s160, 0
          %s166 = smul.addr %s16, 144
          %s167 = smul.addr %s166, 4
          %s168 = scalar_lea.hbm %s2, %s167
          %s169 = sshll.u32 %s168, 4
          %s170 = int_to_ptr.hbm [resolvable:$true] %s169
          %s171 = sshll.u32 %s163, 4
          %s172 = int_to_ptr.vmem [resolvable:$true] %s171
          %177 = dma.hbm_to_vmem [thread:$0]  %s170, 9216, %s172, %s160, 64, 64, 4
        $region28: #{alphazero_forward.3} parent=23 // pred_fallthru
          _
        // Predicated region
        $region29: #{alphazero_forward.3} parent=23 // pred_check
          %p178 = pneg %p104
        $region30: #{alphazero_forward.3} parent=23 // pred_check_branch
          %180 = sbr.rel (%p178) target = $region32
        $region31: #{alphazero_forward.3} parent=23 // pred_region
          %s181 = sand.u32 %s94, 1
          %s182 = scalar_lea.sflag [#allocation7], %s181
          %s183 = sand.u32 %s94, 1
          %s184 = scalar_lea.vmem [#allocation6], %s183
          %186 = vsyncadd %s182, 0
          %s187 = scalar_lea.hbm %s3, %s16
          %s189 = sshll.u32 %s187, 4
          %s190 = int_to_ptr.hbm [resolvable:$true] %s189
          %s191 = sshll.u32 %s184, 4
          %s192 = int_to_ptr.vmem [resolvable:$true] %s191
          %194 = dma.hbm_to_vmem [thread:$0]  %s190, 16, %s192, %s182
        $region32: #{alphazero_forward.3} parent=23 // pred_fallthru
          _
      $region24: #{alphazero_forward.3} parent=5 // pred_fallthru
        _
      %p195 = scmp.le.s32.totalorder 1, %s16
      %p196 = scmp.lt.s32.totalorder %s16, 12
      %p197 = pnand %p195, %p196
      %p198 = pneg %p197
      // Predicated region
      $region33: #{alphazero_forward.3} parent=5 // pred_check
        _
      $region34: #{alphazero_forward.3} parent=5 // pred_check_branch
        %200 = sbr.rel (%p197) target = $region36
      $region35: #{alphazero_forward.3} parent=5 // pred_region
        %s201 = ssub.s32 %s16, 1
        %s202 = sand.u32 %s71, 1
        %s203 = scalar_lea.sflag [#allocation5], %s202
        %s204 = sand.u32 %s71, 1
        %s205 = smul.addr %s204, 576
        %s206 = scalar_lea.vmem [#allocation4], %s205
        // Predicated region
        $region37: #{alphazero_forward.3} parent=35 // pred_check
          %p207 = pneg %p84
        $region38: #{alphazero_forward.3} parent=35 // pred_check_branch
          %209 = sbr.rel (%p207) target = $region40
        $region39: #{alphazero_forward.3} parent=35 // pred_region
          %211 = dma.done %s203, 9216
        $region40: #{alphazero_forward.3} parent=35 // pred_fallthru
          _
        %s212 = sand.u32 %s97, 1
        %s213 = scalar_lea.sflag [#allocation7], %s212
        %s214 = sand.u32 %s97, 1
        %s215 = scalar_lea.vmem [#allocation6], %s214
        // Predicated region
        $region41: #{alphazero_forward.3} parent=35 // pred_check
          %p216 = pneg %p110
        $region42: #{alphazero_forward.3} parent=35 // pred_check_branch
          %218 = sbr.rel (%p216) target = $region44
        $region43: #{alphazero_forward.3} parent=35 // pred_region
          %220 = dma.done %s213, 16
        $region44: #{alphazero_forward.3} parent=35 // pred_fallthru
          _
        %p221 = pneg %p37
        %p222 = pneg %p34
        %p223 = pneg %p58
        %p224 = pneg %p55
        %s225 = sand.u32 %s71, 1
        %s226 = scalar_lea.sflag [#allocation5], %s225
        %s227 = sand.u32 %s71, 1
        %s228 = smul.addr %s227, 576
        %s229 = scalar_lea.vmem [#allocation4], %s228
        %p230 = pneg %p84
        %p231 = pneg %p81
        %s232 = sand.u32 %s97, 1
        %s233 = scalar_lea.sflag [#allocation7], %s232
        %s234 = sand.u32 %s97, 1
        %s235 = scalar_lea.vmem [#allocation6], %s234
        %p236 = pneg %p110
        %p237 = pneg %p107
        %p238 = pneg %p131
        %p239 = pneg %p128
        %p240 = scmp.eq.s32.totalorder %s21, 0
        // Predicated region
        $region45: #{alphazero_forward.3} parent=35 // pred_check
          %p241 = pneg %p240
        $region46: #{alphazero_forward.3} parent=35 // pred_check_branch
          %243 = sbr.rel (%p241) target = $region48
        $region47: #{alphazero_forward.3} parent=35 // pred_region
          %244 = vst [vmem:[#allocation2] sm:$0xff] 0.0
          %245 = vst [vmem:[#allocation2 + $0x8] sm:$0xff] 0.0
          %246 = vst [vmem:[#allocation2 + $0x10] sm:$0xff] 0.0
          %247 = vst [vmem:[#allocation2 + $0x18] sm:$0xff] 0.0
          %248 = vst [vmem:[#allocation2 + $0x20] sm:$0xff] 0.0
          %249 = vst [vmem:[#allocation2 + $0x28] sm:$0xff] 0.0
          %250 = vst [vmem:[#allocation2 + $0x30] sm:$0xff] 0.0
          %251 = vst [vmem:[#allocation2 + $0x38] sm:$0xff] 0.0
          %252 = vst [vmem:[#allocation2 + $0x40] sm:$0xff] 0.0
          %253 = vst [vmem:[#allocation2 + $0x48] sm:$0xff] 0.0
          %254 = vst [vmem:[#allocation2 + $0x50] sm:$0xff] 0.0
          %255 = vst [vmem:[#allocation2 + $0x58] sm:$0xff] 0.0
          %256 = vst [vmem:[#allocation2 + $0x60] sm:$0xff] 0.0
          %257 = vst [vmem:[#allocation2 + $0x68] sm:$0xff] 0.0
          %258 = vst [vmem:[#allocation2 + $0x70] sm:$0xff] 0.0
          %259 = vst [vmem:[#allocation2 + $0x78] sm:$0xff] 0.0
          %260 = vst [vmem:[#allocation2 + $0x80] sm:$0xff] 0.0
          %261 = vst [vmem:[#allocation2 + $0x88] sm:$0xff] 0.0
          %262 = vst [vmem:[#allocation2 + $0x90] sm:$0xff] 0.0
          %263 = vst [vmem:[#allocation2 + $0x98] sm:$0xff] 0.0
          %264 = vst [vmem:[#allocation2 + $0xa0] sm:$0xff] 0.0
          %265 = vst [vmem:[#allocation2 + $0xa8] sm:$0xff] 0.0
          %266 = vst [vmem:[#allocation2 + $0xb0] sm:$0xff] 0.0
          %267 = vst [vmem:[#allocation2 + $0xb8] sm:$0xff] 0.0
          %268 = vst [vmem:[#allocation2 + $0xc0] sm:$0xff] 0.0
          %269 = vst [vmem:[#allocation2 + $0xc8] sm:$0xff] 0.0
          %270 = vst [vmem:[#allocation2 + $0xd0] sm:$0xff] 0.0
          %271 = vst [vmem:[#allocation2 + $0xd8] sm:$0xff] 0.0
          %272 = vst [vmem:[#allocation2 + $0xe0] sm:$0xff] 0.0
          %273 = vst [vmem:[#allocation3] sm:$0xff] 0.0
          %274 = vst [vmem:[#allocation3 + $0x8] sm:$0xff] 0.0
          %275 = vst [vmem:[#allocation3 + $0x10] sm:$0xff] 0.0
          %276 = vst [vmem:[#allocation3 + $0x18] sm:$0xff] 0.0
          %277 = vst [vmem:[#allocation3 + $0x20] sm:$0xff] 0.0
          %278 = vst [vmem:[#allocation3 + $0x28] sm:$0xff] 0.0
          %279 = vst [vmem:[#allocation3 + $0x30] sm:$0xff] 0.0
          %280 = vst [vmem:[#allocation3 + $0x38] sm:$0xff] 0.0
          %281 = vst [vmem:[#allocation3 + $0x40] sm:$0xff] 0.0
          %282 = vst [vmem:[#allocation3 + $0x48] sm:$0xff] 0.0
          %283 = vst [vmem:[#allocation3 + $0x50] sm:$0xff] 0.0
          %284 = vst [vmem:[#allocation3 + $0x58] sm:$0xff] 0.0
          %285 = vst [vmem:[#allocation3 + $0x60] sm:$0xff] 0.0
          %286 = vst [vmem:[#allocation3 + $0x68] sm:$0xff] 0.0
          %287 = vst [vmem:[#allocation3 + $0x70] sm:$0xff] 0.0
          %288 = vst [vmem:[#allocation3 + $0x78] sm:$0xff] 0.0
          %289 = vst [vmem:[#allocation3 + $0x80] sm:$0xff] 0.0
          %290 = vst [vmem:[#allocation3 + $0x88] sm:$0xff] 0.0
          %291 = vst [vmem:[#allocation3 + $0x90] sm:$0xff] 0.0
          %292 = vst [vmem:[#allocation3 + $0x98] sm:$0xff] 0.0
          %293 = vst [vmem:[#allocation3 + $0xa0] sm:$0xff] 0.0
          %294 = vst [vmem:[#allocation3 + $0xa8] sm:$0xff] 0.0
          %295 = vst [vmem:[#allocation3 + $0xb0] sm:$0xff] 0.0
          %296 = vst [vmem:[#allocation3 + $0xb8] sm:$0xff] 0.0
          %297 = vst [vmem:[#allocation3 + $0xc0] sm:$0xff] 0.0
          %v298 = vld [vmem:[%s0] sm:$0xff]
          %v299 = vld [vmem:[%s0 + $0x8] sm:$0xff]
          %v300 = vld [vmem:[%s0 + $0x10] sm:$0xff]
          %v301 = vld [vmem:[%s0 + $0x18] sm:$0xff]
          %v302 = vld [vmem:[%s0 + $0x20] sm:$0xff]
          %v303 = vld [vmem:[%s0 + $0x28] sm:$0xff]
          %v304 = vld [vmem:[%s0 + $0x30] sm:$0xff]
          %v305 = vld [vmem:[%s0 + $0x38] sm:$0xff]
          %v306 = vld [vmem:[%s0 + $0x40] sm:$0xff]
          %v307 = vld [vmem:[%s0 + $0x48] sm:$0xff]
          %v308 = vld [vmem:[%s0 + $0x50] sm:$0xff]
          %v309 = vld [vmem:[%s0 + $0x58] sm:$0xff]
          %v310 = vld [vmem:[%s0 + $0x60] sm:$0xff]
          %v311 = vld [vmem:[%s0 + $0x68] sm:$0xff]
          %v312 = vld [vmem:[%s0 + $0x70] sm:$0xff]
          %v313 = vld [vmem:[%s0 + $0x78] sm:$0xff]
          %v314 = vld [vmem:[%s0 + $0x80] sm:$0xff]
          %v315 = vld [vmem:[%s0 + $0x88] sm:$0xff]
          %v316 = vld [vmem:[%s0 + $0x90] sm:$0xff]
          %v317 = vld [vmem:[%s0 + $0x98] sm:$0xff]
          %v318 = vld [vmem:[%s0 + $0xa0] sm:$0xff]
          %v319 = vld [vmem:[%s0 + $0xa8] sm:$0xff]
          %v320 = vld [vmem:[%s0 + $0xb0] sm:$0xff]
          %v321 = vld [vmem:[%s0 + $0xb8] sm:$0xff]
          %v322 = vld [vmem:[%s0 + $0xc0] sm:$0xff]
          %323 = vst [vmem:[#allocation2 + $0x10] sm:$0xff] %v298
          %324 = vst [vmem:[#allocation2 + $0x18] sm:$0xff] %v299
          %325 = vst [vmem:[#allocation2 + $0x20] sm:$0xff] %v300
          %326 = vst [vmem:[#allocation2 + $0x28] sm:$0xff] %v301
          %327 = vst [vmem:[#allocation2 + $0x30] sm:$0xff] %v302
          %328 = vst [vmem:[#allocation2 + $0x38] sm:$0xff] %v303
          %329 = vst [vmem:[#allocation2 + $0x40] sm:$0xff] %v304
          %330 = vst [vmem:[#allocation2 + $0x48] sm:$0xff] %v305
          %331 = vst [vmem:[#allocation2 + $0x50] sm:$0xff] %v306
          %332 = vst [vmem:[#allocation2 + $0x58] sm:$0xff] %v307
          %333 = vst [vmem:[#allocation2 + $0x60] sm:$0xff] %v308
          %334 = vst [vmem:[#allocation2 + $0x68] sm:$0xff] %v309
          %335 = vst [vmem:[#allocation2 + $0x70] sm:$0xff] %v310
          %336 = vst [vmem:[#allocation2 + $0x78] sm:$0xff] %v311
          %337 = vst [vmem:[#allocation2 + $0x80] sm:$0xff] %v312
          %338 = vst [vmem:[#allocation2 + $0x88] sm:$0xff] %v313
          %339 = vst [vmem:[#allocation2 + $0x90] sm:$0xff] %v314
          %340 = vst [vmem:[#allocation2 + $0x98] sm:$0xff] %v315
          %341 = vst [vmem:[#allocation2 + $0xa0] sm:$0xff] %v316
          %342 = vst [vmem:[#allocation2 + $0xa8] sm:$0xff] %v317
          %343 = vst [vmem:[#allocation2 + $0xb0] sm:$0xff] %v318
          %344 = vst [vmem:[#allocation2 + $0xb8] sm:$0xff] %v319
          %345 = vst [vmem:[#allocation2 + $0xc0] sm:$0xff] %v320
          %346 = vst [vmem:[#allocation2 + $0xc8] sm:$0xff] %v321
          %347 = vst [vmem:[#allocation2 + $0xd0] sm:$0xff] %v322
        $region48: #{alphazero_forward.3} parent=35 // pred_fallthru
          _
        %p348 = scmp.lt.s32.totalorder %s21, 0
        %s349 = ssub.s32 0, %s21
        %s350 = scalar_select %p348, %s349, %s21
        %s351 = sand.u32 %s350, 1
        %s352 = ssub.s32 0, %s351
        %s353 = scalar_select %p348, %s352, %s351
        %p354 = scmp.ne.s32.totalorder %s353, 0
        %p355 = scmp.lt.s32.totalorder %s353, 0
        %p356 = pnand %p355, %p354
        %p357 = pneg %p356
        %s358 = sadd.s32 %s353, 2
        %s359 = scalar_select %p357, %s358, %s353
        %p360 = scmp.eq.s32.totalorder %s359, 1
        // Predicated region
        $region49: #{alphazero_forward.3} parent=35 // pred_check
          %p361 = pneg %p360
        $region50: #{alphazero_forward.3} parent=35 // pred_check_branch
          %363 = sbr.rel (%p361) target = $region52
        $region51: #{alphazero_forward.3} parent=35 // pred_region
          %v364 = vld [vmem:[#allocation2 + $0x10] sm:$0xff]
          %v365 = vld [vmem:[#allocation2 + $0x18] sm:$0xff]
          %v366 = vld [vmem:[#allocation2 + $0x20] sm:$0xff]
          %v367 = vld [vmem:[#allocation2 + $0x28] sm:$0xff]
          %v368 = vld [vmem:[#allocation2 + $0x30] sm:$0xff]
          %v369 = vld [vmem:[#allocation2 + $0x38] sm:$0xff]
          %v370 = vld [vmem:[#allocation2 + $0x40] sm:$0xff]
          %v371 = vld [vmem:[#allocation2 + $0x48] sm:$0xff]
          %v372 = vld [vmem:[#allocation2 + $0x50] sm:$0xff]
          %v373 = vld [vmem:[#allocation2 + $0x58] sm:$0xff]
          %v374 = vld [vmem:[#allocation2 + $0x60] sm:$0xff]
          %v375 = vld [vmem:[#allocation2 + $0x68] sm:$0xff]
          %v376 = vld [vmem:[#allocation2 + $0x70] sm:$0xff]
          %v377 = vld [vmem:[#allocation2 + $0x78] sm:$0xff]
          %v378 = vld [vmem:[#allocation2 + $0x80] sm:$0xff]
          %v379 = vld [vmem:[#allocation2 + $0x88] sm:$0xff]
          %v380 = vld [vmem:[#allocation2 + $0x90] sm:$0xff]
          %v381 = vld [vmem:[#allocation2 + $0x98] sm:$0xff]
          %v382 = vld [vmem:[#allocation2 + $0xa0] sm:$0xff]
          %v383 = vld [vmem:[#allocation2 + $0xa8] sm:$0xff]
          %v384 = vld [vmem:[#allocation2 + $0xb0] sm:$0xff]
          %v385 = vld [vmem:[#allocation2 + $0xb8] sm:$0xff]
          %v386 = vld [vmem:[#allocation2 + $0xc0] sm:$0xff]
          %v387 = vld [vmem:[#allocation2 + $0xc8] sm:$0xff]
          %v388 = vld [vmem:[#allocation2 + $0xd0] sm:$0xff]
          %389 = vst [vmem:[#allocation3] sm:$0xff] %v364
          %390 = vst [vmem:[#allocation3 + $0x8] sm:$0xff] %v365
          %391 = vst [vmem:[#allocation3 + $0x10] sm:$0xff] %v366
          %392 = vst [vmem:[#allocation3 + $0x18] sm:$0xff] %v367
          %393 = vst [vmem:[#allocation3 + $0x20] sm:$0xff] %v368
          %394 = vst [vmem:[#allocation3 + $0x28] sm:$0xff] %v369
          %395 = vst [vmem:[#allocation3 + $0x30] sm:$0xff] %v370
          %396 = vst [vmem:[#allocation3 + $0x38] sm:$0xff] %v371
          %397 = vst [vmem:[#allocation3 + $0x40] sm:$0xff] %v372
          %398 = vst [vmem:[#allocation3 + $0x48] sm:$0xff] %v373
          %399 = vst [vmem:[#allocation3 + $0x50] sm:$0xff] %v374
          %400 = vst [vmem:[#allocation3 + $0x58] sm:$0xff] %v375
          %401 = vst [vmem:[#allocation3 + $0x60] sm:$0xff] %v376
          %402 = vst [vmem:[#allocation3 + $0x68] sm:$0xff] %v377
          %403 = vst [vmem:[#allocation3 + $0x70] sm:$0xff] %v378
          %404 = vst [vmem:[#allocation3 + $0x78] sm:$0xff] %v379
          %405 = vst [vmem:[#allocation3 + $0x80] sm:$0xff] %v380
          %406 = vst [vmem:[#allocation3 + $0x88] sm:$0xff] %v381
          %407 = vst [vmem:[#allocation3 + $0x90] sm:$0xff] %v382
          %408 = vst [vmem:[#allocation3 + $0x98] sm:$0xff] %v383
          %409 = vst [vmem:[#allocation3 + $0xa0] sm:$0xff] %v384
          %410 = vst [vmem:[#allocation3 + $0xa8] sm:$0xff] %v385
          %411 = vst [vmem:[#allocation3 + $0xb0] sm:$0xff] %v386
          %412 = vst [vmem:[#allocation3 + $0xb8] sm:$0xff] %v387
          %413 = vst [vmem:[#allocation3 + $0xc0] sm:$0xff] %v388
        $region52: #{alphazero_forward.3} parent=35 // pred_fallthru
          _
        %v414 = vld [vmem:[#allocation2 + $0x5] sm:$0xff]
        %v415 = vld [vmem:[#allocation2 + $0xd] sm:$0xff]
        %v416 = vld [vmem:[#allocation2 + $0x15] sm:$0xff]
        %v417 = vld [vmem:[#allocation2 + $0x1d] sm:$0xff]
        %v418 = vld [vmem:[#allocation2 + $0x25] sm:$0xff]
        %v419 = vld [vmem:[#allocation2 + $0x2d] sm:$0xff]
        %v420 = vld [vmem:[#allocation2 + $0x35] sm:$0xff]
        %v421 = vld [vmem:[#allocation2 + $0x3d] sm:$0xff]
        %v422 = vld [vmem:[#allocation2 + $0x45] sm:$0xff]
        %v423 = vld [vmem:[#allocation2 + $0x4d] sm:$0xff]
        %v424 = vld [vmem:[#allocation2 + $0x55] sm:$0xff]
        %v425 = vld [vmem:[#allocation2 + $0x5d] sm:$0xff]
        %v426 = vld [vmem:[#allocation2 + $0x65] sm:$0xff]
        %v427 = vld [vmem:[#allocation2 + $0x6d] sm:$0xff]
        %v428 = vld [vmem:[#allocation2 + $0x75] sm:$0xff]
        %v429 = vld [vmem:[#allocation2 + $0x7d] sm:$0xff]
        %v430 = vld [vmem:[#allocation2 + $0x85] sm:$0xff]
        %v431 = vld [vmem:[#allocation2 + $0x8d] sm:$0xff]
        %v432 = vld [vmem:[#allocation2 + $0x95] sm:$0xff]
        %v433 = vld [vmem:[#allocation2 + $0x9d] sm:$0xff]
        %v434 = vld [vmem:[#allocation2 + $0xa5] sm:$0xff]
        %v435 = vld [vmem:[#allocation2 + $0xad] sm:$0xff]
        %v436 = vld [vmem:[#allocation2 + $0xb5] sm:$0xff]
        %v437 = vld [vmem:[#allocation2 + $0xbd] sm:$0xff]
        %v438 = vld [vmem:[#allocation2 + $0xc5] sm:$0xff]
        %v439 = vpack.c.bf16 %v415, %v414
        %v440 = vpack.c.bf16 %v417, %v416
        %v441 = vpack.c.bf16 %v419, %v418
        %v442 = vpack.c.bf16 %v421, %v420
        %v443 = vpack.c.bf16 %v423, %v422
        %v444 = vpack.c.bf16 %v425, %v424
        %v445 = vpack.c.bf16 %v427, %v426
        %v446 = vpack.c.bf16 %v429, %v428
        %v447 = vpack.c.bf16 %v431, %v430
        %v448 = vpack.c.bf16 %v433, %v432
        %v449 = vpack.c.bf16 %v435, %v434
        %v450 = vpack.c.bf16 %v437, %v436
        %v451 = vpack.c.bf16 %v438, %v438
        %v452 = vld [vmem:[%s206] sm:$0xf]
        %v453 = vld [vmem:[%s206 + $0x4] sm:$0xf]
        %v454 = vld [vmem:[%s206 + $0x8] sm:$0xf]
        %v455 = vld [vmem:[%s206 + $0xc] sm:$0xf]
        %v456 = vld [vmem:[%s206 + $0x10] sm:$0xf]
        %v457 = vld [vmem:[%s206 + $0x14] sm:$0xf]
        %v458 = vld [vmem:[%s206 + $0x18] sm:$0xf]
        %v459 = vld [vmem:[%s206 + $0x1c] sm:$0xf]
        %v460 = vld [vmem:[%s206 + $0x20] sm:$0xf]
        %v461 = vld [vmem:[%s206 + $0x24] sm:$0xf]
        %v462 = vld [vmem:[%s206 + $0x28] sm:$0xf]
        %v463 = vld [vmem:[%s206 + $0x2c] sm:$0xf]
        %v464 = vld [vmem:[%s206 + $0x30] sm:$0xf]
        %v465 = vld [vmem:[%s206 + $0x34] sm:$0xf]
        %v466 = vld [vmem:[%s206 + $0x38] sm:$0xf]
        %v467 = vld [vmem:[%s206 + $0x3c] sm:$0xf]
        %v468 = vld [vmem:[#allocation2 + $0x6] sm:$0xff]
        %v469 = vld [vmem:[#allocation2 + $0xe] sm:$0xff]
        %v470 = vld [vmem:[#allocation2 + $0x16] sm:$0xff]
        %v471 = vld [vmem:[#allocation2 + $0x1e] sm:$0xff]
        %v472 = vld [vmem:[#allocation2 + $0x26] sm:$0xff]
        %v473 = vld [vmem:[#allocation2 + $0x2e] sm:$0xff]
        %v474 = vld [vmem:[#allocation2 + $0x36] sm:$0xff]
        %v475 = vld [vmem:[#allocation2 + $0x3e] sm:$0xff]
        %v476 = vld [vmem:[#allocation2 + $0x46] sm:$0xff]
        %v477 = vld [vmem:[#allocation2 + $0x4e] sm:$0xff]
        %v478 = vld [vmem:[#allocation2 + $0x56] sm:$0xff]
        %v479 = vld [vmem:[#allocation2 + $0x5e] sm:$0xff]
        %v480 = vld [vmem:[#allocation2 + $0x66] sm:$0xff]
        %v481 = vld [vmem:[#allocation2 + $0x6e] sm:$0xff]
        %v482 = vld [vmem:[#allocation2 + $0x76] sm:$0xff]
        %v483 = vld [vmem:[#allocation2 + $0x7e] sm:$0xff]
        %v484 = vld [vmem:[#allocation2 + $0x86] sm:$0xff]
        %v485 = vld [vmem:[#allocation2 + $0x8e] sm:$0xff]
        %v486 = vld [vmem:[#allocation2 + $0x96] sm:$0xff]
        %v487 = vld [vmem:[#allocation2 + $0x9e] sm:$0xff]
        %v488 = vld [vmem:[#allocation2 + $0xa6] sm:$0xff]
        %v489 = vld [vmem:[#allocation2 + $0xae] sm:$0xff]
        %v490 = vld [vmem:[#allocation2 + $0xb6] sm:$0xff]
        %v491 = vld [vmem:[#allocation2 + $0xbe] sm:$0xff]
        %v492 = vld [vmem:[#allocation2 + $0xc6] sm:$0xff]
        %v493 = vpack.c.bf16 %v469, %v468
        %v494 = vpack.c.bf16 %v471, %v470
        %v495 = vpack.c.bf16 %v473, %v472
        %v496 = vpack.c.bf16 %v475, %v474
        %v497 = vpack.c.bf16 %v477, %v476
        %v498 = vpack.c.bf16 %v479, %v478
        %v499 = vpack.c.bf16 %v481, %v480
        %v500 = vpack.c.bf16 %v483, %v482
        %v501 = vpack.c.bf16 %v485, %v484
        %v502 = vpack.c.bf16 %v487, %v486
        %v503 = vpack.c.bf16 %v489, %v488
        %v504 = vpack.c.bf16 %v491, %v490
        %v505 = vpack.c.bf16 %v492, %v492
        %s506 = scalar_lea.vmem %s206, 64 [#allocation4]
        %v507 = vld [vmem:[%s506] sm:$0xf]
        %v508 = vld [vmem:[%s506 + $0x4] sm:$0xf]
        %v509 = vld [vmem:[%s506 + $0x8] sm:$0xf]
        %v510 = vld [vmem:[%s506 + $0xc] sm:$0xf]
        %v511 = vld [vmem:[%s506 + $0x10] sm:$0xf]
        %v512 = vld [vmem:[%s506 + $0x14] sm:$0xf]
        %v513 = vld [vmem:[%s506 + $0x18] sm:$0xf]
        %v514 = vld [vmem:[%s506 + $0x1c] sm:$0xf]
        %v515 = vld [vmem:[%s506 + $0x20] sm:$0xf]
        %v516 = vld [vmem:[%s506 + $0x24] sm:$0xf]
        %v517 = vld [vmem:[%s506 + $0x28] sm:$0xf]
        %v518 = vld [vmem:[%s506 + $0x2c] sm:$0xf]
        %v519 = vld [vmem:[%s506 + $0x30] sm:$0xf]
        %v520 = vld [vmem:[%s506 + $0x34] sm:$0xf]
        %v521 = vld [vmem:[%s506 + $0x38] sm:$0xf]
        %v522 = vld [vmem:[%s506 + $0x3c] sm:$0xf]
        %v539 = vunpack.c.l.b16 %v507
        %v540 = vunpack.c.l.b16 %v508
        %v541 = vunpack.c.l.b16 %v509
        %v542 = vunpack.c.l.b16 %v510
        %v543 = vunpack.c.l.b16 %v511
        %v544 = vunpack.c.l.b16 %v512
        %v545 = vunpack.c.l.b16 %v513
        %v546 = vunpack.c.l.b16 %v514
        %v547 = vunpack.c.l.b16 %v515
        %v548 = vunpack.c.l.b16 %v516
        %v549 = vunpack.c.l.b16 %v517
        %v550 = vunpack.c.l.b16 %v518
        %v551 = vunpack.c.l.b16 %v519
        %v552 = vunpack.c.l.b16 %v520
        %v553 = vunpack.c.l.b16 %v521
        %v554 = vunpack.c.l.b16 %v522
        %v555 = vpack.c.b16 %v540, %v539
        %v556 = vpack.c.b16 %v542, %v541
        %v557 = vpack.c.b16 %v544, %v543
        %v558 = vpack.c.b16 %v546, %v545
        %v559 = vpack.c.b16 %v548, %v547
        %v560 = vpack.c.b16 %v550, %v549
        %v561 = vpack.c.b16 %v552, %v551
        %v562 = vpack.c.b16 %v554, %v553
        %571 = vmatpush.bf16.msra.mxu0 %v562
        %572 = vmatpush.bf16.msra.mxu0 %v561
        %573 = vmatpush.bf16.msra.mxu0 %v560
        %574 = vmatpush.bf16.msra.mxu0 %v559
        %575 = vmatpush.bf16.msra.mxu0 %v558
        %576 = vmatpush.bf16.msra.mxu0 %v557
        %577 = vmatpush.bf16.msra.mxu0 %v556
        %578 = vmatpush.bf16.msra.mxu0 %v555
        %579 = vmatmul.bf16.gmra.mxu0 %v493
        %v580 = vpop.f32.mrf.mxu0
        %v581 = vadd.f32 0.0, %v580
        %v582 = vpop.f32.mrf.mxu0
        %v583 = vadd.f32 0.0, %v582
        %584 = vmatmul.bf16.gmra.mxu0 %v494
        %v585 = vpop.f32.mrf.mxu0
        %v586 = vadd.f32 0.0, %v585
        %v587 = vpop.f32.mrf.mxu0
        %v588 = vadd.f32 0.0, %v587
        %589 = vmatmul.bf16.gmra.mxu0 %v495
        %v590 = vpop.f32.mrf.mxu0
        %v591 = vadd.f32 0.0, %v590
        %v592 = vpop.f32.mrf.mxu0
        %v593 = vadd.f32 0.0, %v592
        %594 = vmatmul.bf16.gmra.mxu0 %v496
        %v595 = vpop.f32.mrf.mxu0
        %v596 = vadd.f32 0.0, %v595
        %v597 = vpop.f32.mrf.mxu0
        %v598 = vadd.f32 0.0, %v597
        %599 = vmatmul.bf16.gmra.mxu0 %v497
        %v600 = vpop.f32.mrf.mxu0
        %v601 = vadd.f32 0.0, %v600
        %v602 = vpop.f32.mrf.mxu0
        %v603 = vadd.f32 0.0, %v602
        %604 = vmatmul.bf16.gmra.mxu0 %v498
        %v605 = vpop.f32.mrf.mxu0
        %v606 = vadd.f32 0.0, %v605
        %v607 = vpop.f32.mrf.mxu0
        %v608 = vadd.f32 0.0, %v607
        %609 = vmatmul.bf16.gmra.mxu0 %v499
        %v610 = vpop.f32.mrf.mxu0
        %v611 = vadd.f32 0.0, %v610
        %v612 = vpop.f32.mrf.mxu0
        %v613 = vadd.f32 0.0, %v612
        %614 = vmatmul.bf16.gmra.mxu0 %v500
        %v615 = vpop.f32.mrf.mxu0
        %v616 = vadd.f32 0.0, %v615
        %v617 = vpop.f32.mrf.mxu0
        %v618 = vadd.f32 0.0, %v617
        %619 = vmatmul.bf16.gmra.mxu0 %v501
        %v620 = vpop.f32.mrf.mxu0
        %v621 = vadd.f32 0.0, %v620
        %v622 = vpop.f32.mrf.mxu0
        %v623 = vadd.f32 0.0, %v622
        %624 = vmatmul.bf16.gmra.mxu0 %v502
        %v625 = vpop.f32.mrf.mxu0
        %v626 = vadd.f32 0.0, %v625
        %v627 = vpop.f32.mrf.mxu0
        %v628 = vadd.f32 0.0, %v627
        %629 = vmatmul.bf16.gmra.mxu0 %v503
        %v630 = vpop.f32.mrf.mxu0
        %v631 = vadd.f32 0.0, %v630
        %v632 = vpop.f32.mrf.mxu0
        %v633 = vadd.f32 0.0, %v632
        %634 = vmatmul.bf16.gmra.mxu0 %v504
        %v635 = vpop.f32.mrf.mxu0
        %v636 = vadd.f32 0.0, %v635
        %v637 = vpop.f32.mrf.mxu0
        %v638 = vadd.f32 0.0, %v637
        %639 = vmatmul.bf16.gmra.mxu0 %v505
        %v640 = vpop.f32.mrf.mxu0
        %v641 = vadd.f32 0.0, %v640
        %v642 = vpop.f32.mrf.mxu0
        %643 = vdwg.mxu0
        %v660 = vunpack.c.l.b16 %v452
        %v661 = vunpack.c.l.b16 %v453
        %v662 = vunpack.c.l.b16 %v454
        %v663 = vunpack.c.l.b16 %v455
        %v664 = vunpack.c.l.b16 %v456
        %v665 = vunpack.c.l.b16 %v457
        %v666 = vunpack.c.l.b16 %v458
        %v667 = vunpack.c.l.b16 %v459
        %v668 = vunpack.c.l.b16 %v460
        %v669 = vunpack.c.l.b16 %v461
        %v670 = vunpack.c.l.b16 %v462
        %v671 = vunpack.c.l.b16 %v463
        %v672 = vunpack.c.l.b16 %v464
        %v673 = vunpack.c.l.b16 %v465
        %v674 = vunpack.c.l.b16 %v466
        %v675 = vunpack.c.l.b16 %v467
        %v676 = vpack.c.b16 %v661, %v660
        %v677 = vpack.c.b16 %v663, %v662
        %v678 = vpack.c.b16 %v665, %v664
        %v679 = vpack.c.b16 %v667, %v666
        %v680 = vpack.c.b16 %v669, %v668
        %v681 = vpack.c.b16 %v671, %v670
        %v682 = vpack.c.b16 %v673, %v672
        %v683 = vpack.c.b16 %v675, %v674
        %692 = vmatpush.bf16.msra.mxu0 %v683
        %693 = vmatpush.bf16.msra.mxu0 %v682
        %694 = vmatpush.bf16.msra.mxu0 %v681
        %695 = vmatpush.bf16.msra.mxu0 %v680
        %696 = vmatpush.bf16.msra.mxu0 %v679
        %697 = vmatpush.bf16.msra.mxu0 %v678
        %698 = vmatpush.bf16.msra.mxu0 %v677
        %699 = vmatpush.bf16.msra.mxu0 %v676
        %700 = vmatmul.bf16.gmra.mxu0 %v439
        %v701 = vpop.f32.mrf.mxu0
        %v702 = vadd.f32 %v581, %v701
        %v703 = vpop.f32.mrf.mxu0
        %v704 = vadd.f32 %v583, %v703
        %705 = vmatmul.bf16.gmra.mxu0 %v440
        %v706 = vpop.f32.mrf.mxu0
        %v707 = vadd.f32 %v586, %v706
        %v708 = vpop.f32.mrf.mxu0
        %v709 = vadd.f32 %v588, %v708
        %710 = vmatmul.bf16.gmra.mxu0 %v441
        %v711 = vpop.f32.mrf.mxu0
        %v712 = vadd.f32 %v591, %v711
        %v713 = vpop.f32.mrf.mxu0
        %v714 = vadd.f32 %v593, %v713
        %715 = vmatmul.bf16.gmra.mxu0 %v442
        %v716 = vpop.f32.mrf.mxu0
        %v717 = vadd.f32 %v596, %v716
        %v718 = vpop.f32.mrf.mxu0
        %v719 = vadd.f32 %v598, %v718
        %720 = vmatmul.bf16.gmra.mxu0 %v443
        %v721 = vpop.f32.mrf.mxu0
        %v722 = vadd.f32 %v601, %v721
        %v723 = vpop.f32.mrf.mxu0
        %v724 = vadd.f32 %v603, %v723
        %725 = vmatmul.bf16.gmra.mxu0 %v444
        %v726 = vpop.f32.mrf.mxu0
        %v727 = vadd.f32 %v606, %v726
        %v728 = vpop.f32.mrf.mxu0
        %v729 = vadd.f32 %v608, %v728
        %730 = vmatmul.bf16.gmra.mxu0 %v445
        %v731 = vpop.f32.mrf.mxu0
        %v732 = vadd.f32 %v611, %v731
        %v733 = vpop.f32.mrf.mxu0
        %v734 = vadd.f32 %v613, %v733
        %735 = vmatmul.bf16.gmra.mxu0 %v446
        %v736 = vpop.f32.mrf.mxu0
        %v737 = vadd.f32 %v616, %v736
        %v738 = vpop.f32.mrf.mxu0
        %v739 = vadd.f32 %v618, %v738
        %740 = vmatmul.bf16.gmra.mxu0 %v447
        %v741 = vpop.f32.mrf.mxu0
        %v742 = vadd.f32 %v621, %v741
        %v743 = vpop.f32.mrf.mxu0
        %v744 = vadd.f32 %v623, %v743
        %745 = vmatmul.bf16.gmra.mxu0 %v448
        %v746 = vpop.f32.mrf.mxu0
        %v747 = vadd.f32 %v626, %v746
        %v748 = vpop.f32.mrf.mxu0
        %v749 = vadd.f32 %v628, %v748
        %750 = vmatmul.bf16.gmra.mxu0 %v449
        %v751 = vpop.f32.mrf.mxu0
        %v752 = vadd.f32 %v631, %v751
        %v753 = vpop.f32.mrf.mxu0
        %v754 = vadd.f32 %v633, %v753
        %755 = vmatmul.bf16.gmra.mxu0 %v450
        %v756 = vpop.f32.mrf.mxu0
        %v757 = vadd.f32 %v636, %v756
        %v758 = vpop.f32.mrf.mxu0
        %v759 = vadd.f32 %v638, %v758
        %760 = vmatmul.bf16.gmra.mxu0 %v451
        %v761 = vpop.f32.mrf.mxu0
        %v762 = vadd.f32 %v641, %v761
        %v763 = vpop.f32.mrf.mxu0
        %764 = vdwg.mxu0
        %v765 = vld [vmem:[#allocation2 + $0x7] sm:$0xff]
        %v766 = vld [vmem:[#allocation2 + $0xf] sm:$0xff]
        %v767 = vld [vmem:[#allocation2 + $0x17] sm:$0xff]
        %v768 = vld [vmem:[#allocation2 + $0x1f] sm:$0xff]
        %v769 = vld [vmem:[#allocation2 + $0x27] sm:$0xff]
        %v770 = vld [vmem:[#allocation2 + $0x2f] sm:$0xff]
        %v771 = vld [vmem:[#allocation2 + $0x37] sm:$0xff]
        %v772 = vld [vmem:[#allocation2 + $0x3f] sm:$0xff]
        %v773 = vld [vmem:[#allocation2 + $0x47] sm:$0xff]
        %v774 = vld [vmem:[#allocation2 + $0x4f] sm:$0xff]
        %v775 = vld [vmem:[#allocation2 + $0x57] sm:$0xff]
        %v776 = vld [vmem:[#allocation2 + $0x5f] sm:$0xff]
        %v777 = vld [vmem:[#allocation2 + $0x67] sm:$0xff]
        %v778 = vld [vmem:[#allocation2 + $0x6f] sm:$0xff]
        %v779 = vld [vmem:[#allocation2 + $0x77] sm:$0xff]
        %v780 = vld [vmem:[#allocation2 + $0x7f] sm:$0xff]
        %v781 = vld [vmem:[#allocation2 + $0x87] sm:$0xff]
        %v782 = vld [vmem:[#allocation2 + $0x8f] sm:$0xff]
        %v783 = vld [vmem:[#allocation2 + $0x97] sm:$0xff]
        %v784 = vld [vmem:[#allocation2 + $0x9f] sm:$0xff]
        %v785 = vld [vmem:[#allocation2 + $0xa7] sm:$0xff]
        %v786 = vld [vmem:[#allocation2 + $0xaf] sm:$0xff]
        %v787 = vld [vmem:[#allocation2 + $0xb7] sm:$0xff]
        %v788 = vld [vmem:[#allocation2 + $0xbf] sm:$0xff]
        %v789 = vld [vmem:[#allocation2 + $0xc7] sm:$0xff]
        %v790 = vpack.c.bf16 %v766, %v765
        %v791 = vpack.c.bf16 %v768, %v767
        %v792 = vpack.c.bf16 %v770, %v769
        %v793 = vpack.c.bf16 %v772, %v771
        %v794 = vpack.c.bf16 %v774, %v773
        %v795 = vpack.c.bf16 %v776, %v775
        %v796 = vpack.c.bf16 %v778, %v777
        %v797 = vpack.c.bf16 %v780, %v779
        %v798 = vpack.c.bf16 %v782, %v781
        %v799 = vpack.c.bf16 %v784, %v783
        %v800 = vpack.c.bf16 %v786, %v785
        %v801 = vpack.c.bf16 %v788, %v787
        %v802 = vpack.c.bf16 %v789, %v789
        %s803 = scalar_lea.vmem %s206, 128 [#allocation4]
        %v804 = vld [vmem:[%s803] sm:$0xf]
        %v805 = vld [vmem:[%s803 + $0x4] sm:$0xf]
        %v806 = vld [vmem:[%s803 + $0x8] sm:$0xf]
        %v807 = vld [vmem:[%s803 + $0xc] sm:$0xf]
        %v808 = vld [vmem:[%s803 + $0x10] sm:$0xf]
        %v809 = vld [vmem:[%s803 + $0x14] sm:$0xf]
        %v810 = vld [vmem:[%s803 + $0x18] sm:$0xf]
        %v811 = vld [vmem:[%s803 + $0x1c] sm:$0xf]
        %v812 = vld [vmem:[%s803 + $0x20] sm:$0xf]
        %v813 = vld [vmem:[%s803 + $0x24] sm:$0xf]
        %v814 = vld [vmem:[%s803 + $0x28] sm:$0xf]
        %v815 = vld [vmem:[%s803 + $0x2c] sm:$0xf]
        %v816 = vld [vmem:[%s803 + $0x30] sm:$0xf]
        %v817 = vld [vmem:[%s803 + $0x34] sm:$0xf]
        %v818 = vld [vmem:[%s803 + $0x38] sm:$0xf]
        %v819 = vld [vmem:[%s803 + $0x3c] sm:$0xf]
        %v836 = vunpack.c.l.b16 %v804
        %v837 = vunpack.c.l.b16 %v805
        %v838 = vunpack.c.l.b16 %v806
        %v839 = vunpack.c.l.b16 %v807
        %v840 = vunpack.c.l.b16 %v808
        %v841 = vunpack.c.l.b16 %v809
        %v842 = vunpack.c.l.b16 %v810
        %v843 = vunpack.c.l.b16 %v811
        %v844 = vunpack.c.l.b16 %v812
        %v845 = vunpack.c.l.b16 %v813
        %v846 = vunpack.c.l.b16 %v814
        %v847 = vunpack.c.l.b16 %v815
        %v848 = vunpack.c.l.b16 %v816
        %v849 = vunpack.c.l.b16 %v817
        %v850 = vunpack.c.l.b16 %v818
        %v851 = vunpack.c.l.b16 %v819
        %v852 = vpack.c.b16 %v837, %v836
        %v853 = vpack.c.b16 %v839, %v838
        %v854 = vpack.c.b16 %v841, %v840
        %v855 = vpack.c.b16 %v843, %v842
        %v856 = vpack.c.b16 %v845, %v844
        %v857 = vpack.c.b16 %v847, %v846
        %v858 = vpack.c.b16 %v849, %v848
        %v859 = vpack.c.b16 %v851, %v850
        %868 = vmatpush.bf16.msra.mxu0 %v859
        %869 = vmatpush.bf16.msra.mxu0 %v858
        %870 = vmatpush.bf16.msra.mxu0 %v857
        %871 = vmatpush.bf16.msra.mxu0 %v856
        %872 = vmatpush.bf16.msra.mxu0 %v855
        %873 = vmatpush.bf16.msra.mxu0 %v854
        %874 = vmatpush.bf16.msra.mxu0 %v853
        %875 = vmatpush.bf16.msra.mxu0 %v852
        %876 = vmatmul.bf16.gmra.mxu0 %v790
        %v877 = vpop.f32.mrf.mxu0
        %v878 = vadd.f32 0.0, %v877
        %v879 = vpop.f32.mrf.mxu0
        %v880 = vadd.f32 0.0, %v879
        %881 = vmatmul.bf16.gmra.mxu0 %v791
        %v882 = vpop.f32.mrf.mxu0
        %v883 = vadd.f32 0.0, %v882
        %v884 = vpop.f32.mrf.mxu0
        %v885 = vadd.f32 0.0, %v884
        %886 = vmatmul.bf16.gmra.mxu0 %v792
        %v887 = vpop.f32.mrf.mxu0
        %v888 = vadd.f32 0.0, %v887
        %v889 = vpop.f32.mrf.mxu0
        %v890 = vadd.f32 0.0, %v889
        %891 = vmatmul.bf16.gmra.mxu0 %v793
        %v892 = vpop.f32.mrf.mxu0
        %v893 = vadd.f32 0.0, %v892
        %v894 = vpop.f32.mrf.mxu0
        %v895 = vadd.f32 0.0, %v894
        %896 = vmatmul.bf16.gmra.mxu0 %v794
        %v897 = vpop.f32.mrf.mxu0
        %v898 = vadd.f32 0.0, %v897
        %v899 = vpop.f32.mrf.mxu0
        %v900 = vadd.f32 0.0, %v899
        %901 = vmatmul.bf16.gmra.mxu0 %v795
        %v902 = vpop.f32.mrf.mxu0
        %v903 = vadd.f32 0.0, %v902
        %v904 = vpop.f32.mrf.mxu0
        %v905 = vadd.f32 0.0, %v904
        %906 = vmatmul.bf16.gmra.mxu0 %v796
        %v907 = vpop.f32.mrf.mxu0
        %v908 = vadd.f32 0.0, %v907
        %v909 = vpop.f32.mrf.mxu0
        %v910 = vadd.f32 0.0, %v909
        %911 = vmatmul.bf16.gmra.mxu0 %v797
        %v912 = vpop.f32.mrf.mxu0
        %v913 = vadd.f32 0.0, %v912
        %v914 = vpop.f32.mrf.mxu0
        %v915 = vadd.f32 0.0, %v914
        %916 = vmatmul.bf16.gmra.mxu0 %v798
        %v917 = vpop.f32.mrf.mxu0
        %v918 = vadd.f32 0.0, %v917
        %v919 = vpop.f32.mrf.mxu0
        %v920 = vadd.f32 0.0, %v919
        %921 = vmatmul.bf16.gmra.mxu0 %v799
        %v922 = vpop.f32.mrf.mxu0
        %v923 = vadd.f32 0.0, %v922
        %v924 = vpop.f32.mrf.mxu0
        %v925 = vadd.f32 0.0, %v924
        %926 = vmatmul.bf16.gmra.mxu0 %v800
        %v927 = vpop.f32.mrf.mxu0
        %v928 = vadd.f32 0.0, %v927
        %v929 = vpop.f32.mrf.mxu0
        %v930 = vadd.f32 0.0, %v929
        %931 = vmatmul.bf16.gmra.mxu0 %v801
        %v932 = vpop.f32.mrf.mxu0
        %v933 = vadd.f32 0.0, %v932
        %v934 = vpop.f32.mrf.mxu0
        %v935 = vadd.f32 0.0, %v934
        %936 = vmatmul.bf16.gmra.mxu0 %v802
        %v937 = vpop.f32.mrf.mxu0
        %v938 = vadd.f32 0.0, %v937
        %v939 = vpop.f32.mrf.mxu0
        %940 = vdwg.mxu0
        %v941 = vadd.f32 %v702, %v878
        %v942 = vadd.f32 %v704, %v880
        %v943 = vadd.f32 %v707, %v883
        %v944 = vadd.f32 %v709, %v885
        %v945 = vadd.f32 %v712, %v888
        %v946 = vadd.f32 %v714, %v890
        %v947 = vadd.f32 %v717, %v893
        %v948 = vadd.f32 %v719, %v895
        %v949 = vadd.f32 %v722, %v898
        %v950 = vadd.f32 %v724, %v900
        %v951 = vadd.f32 %v727, %v903
        %v952 = vadd.f32 %v729, %v905
        %v953 = vadd.f32 %v732, %v908
        %v954 = vadd.f32 %v734, %v910
        %v955 = vadd.f32 %v737, %v913
        %v956 = vadd.f32 %v739, %v915
        %v957 = vadd.f32 %v742, %v918
        %v958 = vadd.f32 %v744, %v920
        %v959 = vadd.f32 %v747, %v923
        %v960 = vadd.f32 %v749, %v925
        %v961 = vadd.f32 %v752, %v928
        %v962 = vadd.f32 %v754, %v930
        %v963 = vadd.f32 %v757, %v933
        %v964 = vadd.f32 %v759, %v935
        %v965 = vadd.f32 %v762, %v938
        %v966 = vld [vmem:[#allocation2 + $0xf] sm:$0xff]
        %v967 = vld [vmem:[#allocation2 + $0x17] sm:$0xff]
        %v968 = vld [vmem:[#allocation2 + $0x1f] sm:$0xff]
        %v969 = vld [vmem:[#allocation2 + $0x27] sm:$0xff]
        %v970 = vld [vmem:[#allocation2 + $0x2f] sm:$0xff]
        %v971 = vld [vmem:[#allocation2 + $0x37] sm:$0xff]
        %v972 = vld [vmem:[#allocation2 + $0x3f] sm:$0xff]
        %v973 = vld [vmem:[#allocation2 + $0x47] sm:$0xff]
        %v974 = vld [vmem:[#allocation2 + $0x4f] sm:$0xff]
        %v975 = vld [vmem:[#allocation2 + $0x57] sm:$0xff]
        %v976 = vld [vmem:[#allocation2 + $0x5f] sm:$0xff]
        %v977 = vld [vmem:[#allocation2 + $0x67] sm:$0xff]
        %v978 = vld [vmem:[#allocation2 + $0x6f] sm:$0xff]
        %v979 = vld [vmem:[#allocation2 + $0x77] sm:$0xff]
        %v980 = vld [vmem:[#allocation2 + $0x7f] sm:$0xff]
        %v981 = vld [vmem:[#allocation2 + $0x87] sm:$0xff]
        %v982 = vld [vmem:[#allocation2 + $0x8f] sm:$0xff]
        %v983 = vld [vmem:[#allocation2 + $0x97] sm:$0xff]
        %v984 = vld [vmem:[#allocation2 + $0x9f] sm:$0xff]
        %v985 = vld [vmem:[#allocation2 + $0xa7] sm:$0xff]
        %v986 = vld [vmem:[#allocation2 + $0xaf] sm:$0xff]
        %v987 = vld [vmem:[#allocation2 + $0xb7] sm:$0xff]
        %v988 = vld [vmem:[#allocation2 + $0xbf] sm:$0xff]
        %v989 = vld [vmem:[#allocation2 + $0xc7] sm:$0xff]
        %v990 = vld [vmem:[#allocation2 + $0xcf] sm:$0xff]
        %v991 = vpack.c.bf16 %v967, %v966
        %v992 = vpack.c.bf16 %v969, %v968
        %v993 = vpack.c.bf16 %v971, %v970
        %v994 = vpack.c.bf16 %v973, %v972
        %v995 = vpack.c.bf16 %v975, %v974
        %v996 = vpack.c.bf16 %v977, %v976
        %v997 = vpack.c.bf16 %v979, %v978
        %v998 = vpack.c.bf16 %v981, %v980
        %v999 = vpack.c.bf16 %v983, %v982
        %v1000 = vpack.c.bf16 %v985, %v984
        %v1001 = vpack.c.bf16 %v987, %v986
        %v1002 = vpack.c.bf16 %v989, %v988
        %v1003 = vpack.c.bf16 %v990, %v990
        %s1004 = scalar_lea.vmem %s206, 192 [#allocation4]
        %v1005 = vld [vmem:[%s1004] sm:$0xf]
        %v1006 = vld [vmem:[%s1004 + $0x4] sm:$0xf]
        %v1007 = vld [vmem:[%s1004 + $0x8] sm:$0xf]
        %v1008 = vld [vmem:[%s1004 + $0xc] sm:$0xf]
        %v1009 = vld [vmem:[%s1004 + $0x10] sm:$0xf]
        %v1010 = vld [vmem:[%s1004 + $0x14] sm:$0xf]
        %v1011 = vld [vmem:[%s1004 + $0x18] sm:$0xf]
        %v1012 = vld [vmem:[%s1004 + $0x1c] sm:$0xf]
        %v1013 = vld [vmem:[%s1004 + $0x20] sm:$0xf]
        %v1014 = vld [vmem:[%s1004 + $0x24] sm:$0xf]
        %v1015 = vld [vmem:[%s1004 + $0x28] sm:$0xf]
        %v1016 = vld [vmem:[%s1004 + $0x2c] sm:$0xf]
        %v1017 = vld [vmem:[%s1004 + $0x30] sm:$0xf]
        %v1018 = vld [vmem:[%s1004 + $0x34] sm:$0xf]
        %v1019 = vld [vmem:[%s1004 + $0x38] sm:$0xf]
        %v1020 = vld [vmem:[%s1004 + $0x3c] sm:$0xf]
        %v1037 = vunpack.c.l.b16 %v1005
        %v1038 = vunpack.c.l.b16 %v1006
        %v1039 = vunpack.c.l.b16 %v1007
        %v1040 = vunpack.c.l.b16 %v1008
        %v1041 = vunpack.c.l.b16 %v1009
        %v1042 = vunpack.c.l.b16 %v1010
        %v1043 = vunpack.c.l.b16 %v1011
        %v1044 = vunpack.c.l.b16 %v1012
        %v1045 = vunpack.c.l.b16 %v1013
        %v1046 = vunpack.c.l.b16 %v1014
        %v1047 = vunpack.c.l.b16 %v1015
        %v1048 = vunpack.c.l.b16 %v1016
        %v1049 = vunpack.c.l.b16 %v1017
        %v1050 = vunpack.c.l.b16 %v1018
        %v1051 = vunpack.c.l.b16 %v1019
        %v1052 = vunpack.c.l.b16 %v1020
        %v1053 = vpack.c.b16 %v1038, %v1037
        %v1054 = vpack.c.b16 %v1040, %v1039
        %v1055 = vpack.c.b16 %v1042, %v1041
        %v1056 = vpack.c.b16 %v1044, %v1043
        %v1057 = vpack.c.b16 %v1046, %v1045
        %v1058 = vpack.c.b16 %v1048, %v1047
        %v1059 = vpack.c.b16 %v1050, %v1049
        %v1060 = vpack.c.b16 %v1052, %v1051
        %1069 = vmatpush.bf16.msra.mxu0 %v1060
        %1070 = vmatpush.bf16.msra.mxu0 %v1059
        %1071 = vmatpush.bf16.msra.mxu0 %v1058
        %1072 = vmatpush.bf16.msra.mxu0 %v1057
        %1073 = vmatpush.bf16.msra.mxu0 %v1056
        %1074 = vmatpush.bf16.msra.mxu0 %v1055
        %1075 = vmatpush.bf16.msra.mxu0 %v1054
        %1076 = vmatpush.bf16.msra.mxu0 %v1053
        %1077 = vmatmul.bf16.gmra.mxu0 %v991
        %v1078 = vpop.f32.mrf.mxu0
        %v1079 = vadd.f32 0.0, %v1078
        %v1080 = vpop.f32.mrf.mxu0
        %v1081 = vadd.f32 0.0, %v1080
        %1082 = vmatmul.bf16.gmra.mxu0 %v992
        %v1083 = vpop.f32.mrf.mxu0
        %v1084 = vadd.f32 0.0, %v1083
        %v1085 = vpop.f32.mrf.mxu0
        %v1086 = vadd.f32 0.0, %v1085
        %1087 = vmatmul.bf16.gmra.mxu0 %v993
        %v1088 = vpop.f32.mrf.mxu0
        %v1089 = vadd.f32 0.0, %v1088
        %v1090 = vpop.f32.mrf.mxu0
        %v1091 = vadd.f32 0.0, %v1090
        %1092 = vmatmul.bf16.gmra.mxu0 %v994
        %v1093 = vpop.f32.mrf.mxu0
        %v1094 = vadd.f32 0.0, %v1093
        %v1095 = vpop.f32.mrf.mxu0
        %v1096 = vadd.f32 0.0, %v1095
        %1097 = vmatmul.bf16.gmra.mxu0 %v995
        %v1098 = vpop.f32.mrf.mxu0
        %v1099 = vadd.f32 0.0, %v1098
        %v1100 = vpop.f32.mrf.mxu0
        %v1101 = vadd.f32 0.0, %v1100
        %1102 = vmatmul.bf16.gmra.mxu0 %v996
        %v1103 = vpop.f32.mrf.mxu0
        %v1104 = vadd.f32 0.0, %v1103
        %v1105 = vpop.f32.mrf.mxu0
        %v1106 = vadd.f32 0.0, %v1105
        %1107 = vmatmul.bf16.gmra.mxu0 %v997
        %v1108 = vpop.f32.mrf.mxu0
        %v1109 = vadd.f32 0.0, %v1108
        %v1110 = vpop.f32.mrf.mxu0
        %v1111 = vadd.f32 0.0, %v1110
        %1112 = vmatmul.bf16.gmra.mxu0 %v998
        %v1113 = vpop.f32.mrf.mxu0
        %v1114 = vadd.f32 0.0, %v1113
        %v1115 = vpop.f32.mrf.mxu0
        %v1116 = vadd.f32 0.0, %v1115
        %1117 = vmatmul.bf16.gmra.mxu0 %v999
        %v1118 = vpop.f32.mrf.mxu0
        %v1119 = vadd.f32 0.0, %v1118
        %v1120 = vpop.f32.mrf.mxu0
        %v1121 = vadd.f32 0.0, %v1120
        %1122 = vmatmul.bf16.gmra.mxu0 %v1000
        %v1123 = vpop.f32.mrf.mxu0
        %v1124 = vadd.f32 0.0, %v1123
        %v1125 = vpop.f32.mrf.mxu0
        %v1126 = vadd.f32 0.0, %v1125
        %1127 = vmatmul.bf16.gmra.mxu0 %v1001
        %v1128 = vpop.f32.mrf.mxu0
        %v1129 = vadd.f32 0.0, %v1128
        %v1130 = vpop.f32.mrf.mxu0
        %v1131 = vadd.f32 0.0, %v1130
        %1132 = vmatmul.bf16.gmra.mxu0 %v1002
        %v1133 = vpop.f32.mrf.mxu0
        %v1134 = vadd.f32 0.0, %v1133
        %v1135 = vpop.f32.mrf.mxu0
        %v1136 = vadd.f32 0.0, %v1135
        %1137 = vmatmul.bf16.gmra.mxu0 %v1003
        %v1138 = vpop.f32.mrf.mxu0
        %v1139 = vadd.f32 0.0, %v1138
        %v1140 = vpop.f32.mrf.mxu0
        %1141 = vdwg.mxu0
        %v1142 = vadd.f32 %v941, %v1079
        %v1143 = vadd.f32 %v942, %v1081
        %v1144 = vadd.f32 %v943, %v1084
        %v1145 = vadd.f32 %v944, %v1086
        %v1146 = vadd.f32 %v945, %v1089
        %v1147 = vadd.f32 %v946, %v1091
        %v1148 = vadd.f32 %v947, %v1094
        %v1149 = vadd.f32 %v948, %v1096
        %v1150 = vadd.f32 %v949, %v1099
        %v1151 = vadd.f32 %v950, %v1101
        %v1152 = vadd.f32 %v951, %v1104
        %v1153 = vadd.f32 %v952, %v1106
        %v1154 = vadd.f32 %v953, %v1109
        %v1155 = vadd.f32 %v954, %v1111
        %v1156 = vadd.f32 %v955, %v1114
        %v1157 = vadd.f32 %v956, %v1116
        %v1158 = vadd.f32 %v957, %v1119
        %v1159 = vadd.f32 %v958, %v1121
        %v1160 = vadd.f32 %v959, %v1124
        %v1161 = vadd.f32 %v960, %v1126
        %v1162 = vadd.f32 %v961, %v1129
        %v1163 = vadd.f32 %v962, %v1131
        %v1164 = vadd.f32 %v963, %v1134
        %v1165 = vadd.f32 %v964, %v1136
        %v1166 = vadd.f32 %v965, %v1139
        %v1167 = vld [vmem:[#allocation2 + $0x10] sm:$0xff]
        %v1168 = vld [vmem:[#allocation2 + $0x18] sm:$0xff]
        %v1169 = vld [vmem:[#allocation2 + $0x20] sm:$0xff]
        %v1170 = vld [vmem:[#allocation2 + $0x28] sm:$0xff]
        %v1171 = vld [vmem:[#allocation2 + $0x30] sm:$0xff]
        %v1172 = vld [vmem:[#allocation2 + $0x38] sm:$0xff]
        %v1173 = vld [vmem:[#allocation2 + $0x40] sm:$0xff]
        %v1174 = vld [vmem:[#allocation2 + $0x48] sm:$0xff]
        %v1175 = vld [vmem:[#allocation2 + $0x50] sm:$0xff]
        %v1176 = vld [vmem:[#allocation2 + $0x58] sm:$0xff]
        %v1177 = vld [vmem:[#allocation2 + $0x60] sm:$0xff]
        %v1178 = vld [vmem:[#allocation2 + $0x68] sm:$0xff]
        %v1179 = vld [vmem:[#allocation2 + $0x70] sm:$0xff]
        %v1180 = vld [vmem:[#allocation2 + $0x78] sm:$0xff]
        %v1181 = vld [vmem:[#allocation2 + $0x80] sm:$0xff]
        %v1182 = vld [vmem:[#allocation2 + $0x88] sm:$0xff]
        %v1183 = vld [vmem:[#allocation2 + $0x90] sm:$0xff]
        %v1184 = vld [vmem:[#allocation2 + $0x98] sm:$0xff]
        %v1185 = vld [vmem:[#allocation2 + $0xa0] sm:$0xff]
        %v1186 = vld [vmem:[#allocation2 + $0xa8] sm:$0xff]
        %v1187 = vld [vmem:[#allocation2 + $0xb0] sm:$0xff]
        %v1188 = vld [vmem:[#allocation2 + $0xb8] sm:$0xff]
        %v1189 = vld [vmem:[#allocation2 + $0xc0] sm:$0xff]
        %v1190 = vld [vmem:[#allocation2 + $0xc8] sm:$0xff]
        %v1191 = vld [vmem:[#allocation2 + $0xd0] sm:$0xff]
        %v1192 = vpack.c.bf16 %v1168, %v1167
        %v1193 = vpack.c.bf16 %v1170, %v1169
        %v1194 = vpack.c.bf16 %v1172, %v1171
        %v1195 = vpack.c.bf16 %v1174, %v1173
        %v1196 = vpack.c.bf16 %v1176, %v1175
        %v1197 = vpack.c.bf16 %v1178, %v1177
        %v1198 = vpack.c.bf16 %v1180, %v1179
        %v1199 = vpack.c.bf16 %v1182, %v1181
        %v1200 = vpack.c.bf16 %v1184, %v1183
        %v1201 = vpack.c.bf16 %v1186, %v1185
        %v1202 = vpack.c.bf16 %v1188, %v1187
        %v1203 = vpack.c.bf16 %v1190, %v1189
        %v1204 = vpack.c.bf16 %v1191, %v1191
        %s1205 = scalar_lea.vmem %s206, 256 [#allocation4]
        %v1206 = vld [vmem:[%s1205] sm:$0xf]
        %v1207 = vld [vmem:[%s1205 + $0x4] sm:$0xf]
        %v1208 = vld [vmem:[%s1205 + $0x8] sm:$0xf]
        %v1209 = vld [vmem:[%s1205 + $0xc] sm:$0xf]
        %v1210 = vld [vmem:[%s1205 + $0x10] sm:$0xf]
        %v1211 = vld [vmem:[%s1205 + $0x14] sm:$0xf]
        %v1212 = vld [vmem:[%s1205 + $0x18] sm:$0xf]
        %v1213 = vld [vmem:[%s1205 + $0x1c] sm:$0xf]
        %v1214 = vld [vmem:[%s1205 + $0x20] sm:$0xf]
        %v1215 = vld [vmem:[%s1205 + $0x24] sm:$0xf]
        %v1216 = vld [vmem:[%s1205 + $0x28] sm:$0xf]
        %v1217 = vld [vmem:[%s1205 + $0x2c] sm:$0xf]
        %v1218 = vld [vmem:[%s1205 + $0x30] sm:$0xf]
        %v1219 = vld [vmem:[%s1205 + $0x34] sm:$0xf]
        %v1220 = vld [vmem:[%s1205 + $0x38] sm:$0xf]
        %v1221 = vld [vmem:[%s1205 + $0x3c] sm:$0xf]
        %v1238 = vunpack.c.l.b16 %v1206
        %v1239 = vunpack.c.l.b16 %v1207
        %v1240 = vunpack.c.l.b16 %v1208
        %v1241 = vunpack.c.l.b16 %v1209
        %v1242 = vunpack.c.l.b16 %v1210
        %v1243 = vunpack.c.l.b16 %v1211
        %v1244 = vunpack.c.l.b16 %v1212
        %v1245 = vunpack.c.l.b16 %v1213
        %v1246 = vunpack.c.l.b16 %v1214
        %v1247 = vunpack.c.l.b16 %v1215
        %v1248 = vunpack.c.l.b16 %v1216
        %v1249 = vunpack.c.l.b16 %v1217
        %v1250 = vunpack.c.l.b16 %v1218
        %v1251 = vunpack.c.l.b16 %v1219
        %v1252 = vunpack.c.l.b16 %v1220
        %v1253 = vunpack.c.l.b16 %v1221
        %v1254 = vpack.c.b16 %v1239, %v1238
        %v1255 = vpack.c.b16 %v1241, %v1240
        %v1256 = vpack.c.b16 %v1243, %v1242
        %v1257 = vpack.c.b16 %v1245, %v1244
        %v1258 = vpack.c.b16 %v1247, %v1246
        %v1259 = vpack.c.b16 %v1249, %v1248
        %v1260 = vpack.c.b16 %v1251, %v1250
        %v1261 = vpack.c.b16 %v1253, %v1252
        %1270 = vmatpush.bf16.msra.mxu0 %v1261
        %1271 = vmatpush.bf16.msra.mxu0 %v1260
        %1272 = vmatpush.bf16.msra.mxu0 %v1259
        %1273 = vmatpush.bf16.msra.mxu0 %v1258
        %1274 = vmatpush.bf16.msra.mxu0 %v1257
        %1275 = vmatpush.bf16.msra.mxu0 %v1256
        %1276 = vmatpush.bf16.msra.mxu0 %v1255
        %1277 = vmatpush.bf16.msra.mxu0 %v1254
        %1278 = vmatmul.bf16.gmra.mxu0 %v1192
        %v1279 = vpop.f32.mrf.mxu0
        %v1280 = vadd.f32 0.0, %v1279
        %v1281 = vpop.f32.mrf.mxu0
        %v1282 = vadd.f32 0.0, %v1281
        %1283 = vmatmul.bf16.gmra.mxu0 %v1193
        %v1284 = vpop.f32.mrf.mxu0
        %v1285 = vadd.f32 0.0, %v1284
        %v1286 = vpop.f32.mrf.mxu0
        %v1287 = vadd.f32 0.0, %v1286
        %1288 = vmatmul.bf16.gmra.mxu0 %v1194
        %v1289 = vpop.f32.mrf.mxu0
        %v1290 = vadd.f32 0.0, %v1289
        %v1291 = vpop.f32.mrf.mxu0
        %v1292 = vadd.f32 0.0, %v1291
        %1293 = vmatmul.bf16.gmra.mxu0 %v1195
        %v1294 = vpop.f32.mrf.mxu0
        %v1295 = vadd.f32 0.0, %v1294
        %v1296 = vpop.f32.mrf.mxu0
        %v1297 = vadd.f32 0.0, %v1296
        %1298 = vmatmul.bf16.gmra.mxu0 %v1196
        %v1299 = vpop.f32.mrf.mxu0
        %v1300 = vadd.f32 0.0, %v1299
        %v1301 = vpop.f32.mrf.mxu0
        %v1302 = vadd.f32 0.0, %v1301
        %1303 = vmatmul.bf16.gmra.mxu0 %v1197
        %v1304 = vpop.f32.mrf.mxu0
        %v1305 = vadd.f32 0.0, %v1304
        %v1306 = vpop.f32.mrf.mxu0
        %v1307 = vadd.f32 0.0, %v1306
        %1308 = vmatmul.bf16.gmra.mxu0 %v1198
        %v1309 = vpop.f32.mrf.mxu0
        %v1310 = vadd.f32 0.0, %v1309
        %v1311 = vpop.f32.mrf.mxu0
        %v1312 = vadd.f32 0.0, %v1311
        %1313 = vmatmul.bf16.gmra.mxu0 %v1199
        %v1314 = vpop.f32.mrf.mxu0
        %v1315 = vadd.f32 0.0, %v1314
        %v1316 = vpop.f32.mrf.mxu0
        %v1317 = vadd.f32 0.0, %v1316
        %1318 = vmatmul.bf16.gmra.mxu0 %v1200
        %v1319 = vpop.f32.mrf.mxu0
        %v1320 = vadd.f32 0.0, %v1319
        %v1321 = vpop.f32.mrf.mxu0
        %v1322 = vadd.f32 0.0, %v1321
        %1323 = vmatmul.bf16.gmra.mxu0 %v1201
        %v1324 = vpop.f32.mrf.mxu0
        %v1325 = vadd.f32 0.0, %v1324
        %v1326 = vpop.f32.mrf.mxu0
        %v1327 = vadd.f32 0.0, %v1326
        %1328 = vmatmul.bf16.gmra.mxu0 %v1202
        %v1329 = vpop.f32.mrf.mxu0
        %v1330 = vadd.f32 0.0, %v1329
        %v1331 = vpop.f32.mrf.mxu0
        %v1332 = vadd.f32 0.0, %v1331
        %1333 = vmatmul.bf16.gmra.mxu0 %v1203
        %v1334 = vpop.f32.mrf.mxu0
        %v1335 = vadd.f32 0.0, %v1334
        %v1336 = vpop.f32.mrf.mxu0
        %v1337 = vadd.f32 0.0, %v1336
        %1338 = vmatmul.bf16.gmra.mxu0 %v1204
        %v1339 = vpop.f32.mrf.mxu0
        %v1340 = vadd.f32 0.0, %v1339
        %v1341 = vpop.f32.mrf.mxu0
        %1342 = vdwg.mxu0
        %v1343 = vadd.f32 %v1142, %v1280
        %v1344 = vadd.f32 %v1143, %v1282
        %v1345 = vadd.f32 %v1144, %v1285
        %v1346 = vadd.f32 %v1145, %v1287
        %v1347 = vadd.f32 %v1146, %v1290
        %v1348 = vadd.f32 %v1147, %v1292
        %v1349 = vadd.f32 %v1148, %v1295
        %v1350 = vadd.f32 %v1149, %v1297
        %v1351 = vadd.f32 %v1150, %v1300
        %v1352 = vadd.f32 %v1151, %v1302
        %v1353 = vadd.f32 %v1152, %v1305
        %v1354 = vadd.f32 %v1153, %v1307
        %v1355 = vadd.f32 %v1154, %v1310
        %v1356 = vadd.f32 %v1155, %v1312
        %v1357 = vadd.f32 %v1156, %v1315
        %v1358 = vadd.f32 %v1157, %v1317
        %v1359 = vadd.f32 %v1158, %v1320
        %v1360 = vadd.f32 %v1159, %v1322
        %v1361 = vadd.f32 %v1160, %v1325
        %v1362 = vadd.f32 %v1161, %v1327
        %v1363 = vadd.f32 %v1162, %v1330
        %v1364 = vadd.f32 %v1163, %v1332
        %v1365 = vadd.f32 %v1164, %v1335
        %v1366 = vadd.f32 %v1165, %v1337
        %v1367 = vadd.f32 %v1166, %v1340
        %v1368 = vld [vmem:[#allocation2 + $0x11] sm:$0xff]
        %v1369 = vld [vmem:[#allocation2 + $0x19] sm:$0xff]
        %v1370 = vld [vmem:[#allocation2 + $0x21] sm:$0xff]
        %v1371 = vld [vmem:[#allocation2 + $0x29] sm:$0xff]
        %v1372 = vld [vmem:[#allocation2 + $0x31] sm:$0xff]
        %v1373 = vld [vmem:[#allocation2 + $0x39] sm:$0xff]
        %v1374 = vld [vmem:[#allocation2 + $0x41] sm:$0xff]
        %v1375 = vld [vmem:[#allocation2 + $0x49] sm:$0xff]
        %v1376 = vld [vmem:[#allocation2 + $0x51] sm:$0xff]
        %v1377 = vld [vmem:[#allocation2 + $0x59] sm:$0xff]
        %v1378 = vld [vmem:[#allocation2 + $0x61] sm:$0xff]
        %v1379 = vld [vmem:[#allocation2 + $0x69] sm:$0xff]
        %v1380 = vld [vmem:[#allocation2 + $0x71] sm:$0xff]
        %v1381 = vld [vmem:[#allocation2 + $0x79] sm:$0xff]
        %v1382 = vld [vmem:[#allocation2 + $0x81] sm:$0xff]
        %v1383 = vld [vmem:[#allocation2 + $0x89] sm:$0xff]
        %v1384 = vld [vmem:[#allocation2 + $0x91] sm:$0xff]
        %v1385 = vld [vmem:[#allocation2 + $0x99] sm:$0xff]
        %v1386 = vld [vmem:[#allocation2 + $0xa1] sm:$0xff]
        %v1387 = vld [vmem:[#allocation2 + $0xa9] sm:$0xff]
        %v1388 = vld [vmem:[#allocation2 + $0xb1] sm:$0xff]
        %v1389 = vld [vmem:[#allocation2 + $0xb9] sm:$0xff]
        %v1390 = vld [vmem:[#allocation2 + $0xc1] sm:$0xff]
        %v1391 = vld [vmem:[#allocation2 + $0xc9] sm:$0xff]
        %v1392 = vld [vmem:[#allocation2 + $0xd1] sm:$0xff]
        %v1393 = vpack.c.bf16 %v1369, %v1368
        %v1394 = vpack.c.bf16 %v1371, %v1370
        %v1395 = vpack.c.bf16 %v1373, %v1372
        %v1396 = vpack.c.bf16 %v1375, %v1374
        %v1397 = vpack.c.bf16 %v1377, %v1376
        %v1398 = vpack.c.bf16 %v1379, %v1378
        %v1399 = vpack.c.bf16 %v1381, %v1380
        %v1400 = vpack.c.bf16 %v1383, %v1382
        %v1401 = vpack.c.bf16 %v1385, %v1384
        %v1402 = vpack.c.bf16 %v1387, %v1386
        %v1403 = vpack.c.bf16 %v1389, %v1388
        %v1404 = vpack.c.bf16 %v1391, %v1390
        %v1405 = vpack.c.bf16 %v1392, %v1392
        %s1406 = scalar_lea.vmem %s206, 320 [#allocation4]
        %v1407 = vld [vmem:[%s1406] sm:$0xf]
        %v1408 = vld [vmem:[%s1406 + $0x4] sm:$0xf]
        %v1409 = vld [vmem:[%s1406 + $0x8] sm:$0xf]
        %v1410 = vld [vmem:[%s1406 + $0xc] sm:$0xf]
        %v1411 = vld [vmem:[%s1406 + $0x10] sm:$0xf]
        %v1412 = vld [vmem:[%s1406 + $0x14] sm:$0xf]
        %v1413 = vld [vmem:[%s1406 + $0x18] sm:$0xf]
        %v1414 = vld [vmem:[%s1406 + $0x1c] sm:$0xf]
        %v1415 = vld [vmem:[%s1406 + $0x20] sm:$0xf]
        %v1416 = vld [vmem:[%s1406 + $0x24] sm:$0xf]
        %v1417 = vld [vmem:[%s1406 + $0x28] sm:$0xf]
        %v1418 = vld [vmem:[%s1406 + $0x2c] sm:$0xf]
        %v1419 = vld [vmem:[%s1406 + $0x30] sm:$0xf]
        %v1420 = vld [vmem:[%s1406 + $0x34] sm:$0xf]
        %v1421 = vld [vmem:[%s1406 + $0x38] sm:$0xf]
        %v1422 = vld [vmem:[%s1406 + $0x3c] sm:$0xf]
        %v1439 = vunpack.c.l.b16 %v1407
        %v1440 = vunpack.c.l.b16 %v1408
        %v1441 = vunpack.c.l.b16 %v1409
        %v1442 = vunpack.c.l.b16 %v1410
        %v1443 = vunpack.c.l.b16 %v1411
        %v1444 = vunpack.c.l.b16 %v1412
        %v1445 = vunpack.c.l.b16 %v1413
        %v1446 = vunpack.c.l.b16 %v1414
        %v1447 = vunpack.c.l.b16 %v1415
        %v1448 = vunpack.c.l.b16 %v1416
        %v1449 = vunpack.c.l.b16 %v1417
        %v1450 = vunpack.c.l.b16 %v1418
        %v1451 = vunpack.c.l.b16 %v1419
        %v1452 = vunpack.c.l.b16 %v1420
        %v1453 = vunpack.c.l.b16 %v1421
        %v1454 = vunpack.c.l.b16 %v1422
        %v1455 = vpack.c.b16 %v1440, %v1439
        %v1456 = vpack.c.b16 %v1442, %v1441
        %v1457 = vpack.c.b16 %v1444, %v1443
        %v1458 = vpack.c.b16 %v1446, %v1445
        %v1459 = vpack.c.b16 %v1448, %v1447
        %v1460 = vpack.c.b16 %v1450, %v1449
        %v1461 = vpack.c.b16 %v1452, %v1451
        %v1462 = vpack.c.b16 %v1454, %v1453
        %1471 = vmatpush.bf16.msra.mxu0 %v1462
        %1472 = vmatpush.bf16.msra.mxu0 %v1461
        %1473 = vmatpush.bf16.msra.mxu0 %v1460
        %1474 = vmatpush.bf16.msra.mxu0 %v1459
        %1475 = vmatpush.bf16.msra.mxu0 %v1458
        %1476 = vmatpush.bf16.msra.mxu0 %v1457
        %1477 = vmatpush.bf16.msra.mxu0 %v1456
        %1478 = vmatpush.bf16.msra.mxu0 %v1455
        %1479 = vmatmul.bf16.gmra.mxu0 %v1393
        %v1480 = vpop.f32.mrf.mxu0
        %v1481 = vadd.f32 0.0, %v1480
        %v1482 = vpop.f32.mrf.mxu0
        %v1483 = vadd.f32 0.0, %v1482
        %1484 = vmatmul.bf16.gmra.mxu0 %v1394
        %v1485 = vpop.f32.mrf.mxu0
        %v1486 = vadd.f32 0.0, %v1485
        %v1487 = vpop.f32.mrf.mxu0
        %v1488 = vadd.f32 0.0, %v1487
        %1489 = vmatmul.bf16.gmra.mxu0 %v1395
        %v1490 = vpop.f32.mrf.mxu0
        %v1491 = vadd.f32 0.0, %v1490
        %v1492 = vpop.f32.mrf.mxu0
        %v1493 = vadd.f32 0.0, %v1492
        %1494 = vmatmul.bf16.gmra.mxu0 %v1396
        %v1495 = vpop.f32.mrf.mxu0
        %v1496 = vadd.f32 0.0, %v1495
        %v1497 = vpop.f32.mrf.mxu0
        %v1498 = vadd.f32 0.0, %v1497
        %1499 = vmatmul.bf16.gmra.mxu0 %v1397
        %v1500 = vpop.f32.mrf.mxu0
        %v1501 = vadd.f32 0.0, %v1500
        %v1502 = vpop.f32.mrf.mxu0
        %v1503 = vadd.f32 0.0, %v1502
        %1504 = vmatmul.bf16.gmra.mxu0 %v1398
        %v1505 = vpop.f32.mrf.mxu0
        %v1506 = vadd.f32 0.0, %v1505
        %v1507 = vpop.f32.mrf.mxu0
        %v1508 = vadd.f32 0.0, %v1507
        %1509 = vmatmul.bf16.gmra.mxu0 %v1399
        %v1510 = vpop.f32.mrf.mxu0
        %v1511 = vadd.f32 0.0, %v1510
        %v1512 = vpop.f32.mrf.mxu0
        %v1513 = vadd.f32 0.0, %v1512
        %1514 = vmatmul.bf16.gmra.mxu0 %v1400
        %v1515 = vpop.f32.mrf.mxu0
        %v1516 = vadd.f32 0.0, %v1515
        %v1517 = vpop.f32.mrf.mxu0
        %v1518 = vadd.f32 0.0, %v1517
        %1519 = vmatmul.bf16.gmra.mxu0 %v1401
        %v1520 = vpop.f32.mrf.mxu0
        %v1521 = vadd.f32 0.0, %v1520
        %v1522 = vpop.f32.mrf.mxu0
        %v1523 = vadd.f32 0.0, %v1522
        %1524 = vmatmul.bf16.gmra.mxu0 %v1402
        %v1525 = vpop.f32.mrf.mxu0
        %v1526 = vadd.f32 0.0, %v1525
        %v1527 = vpop.f32.mrf.mxu0
        %v1528 = vadd.f32 0.0, %v1527
        %1529 = vmatmul.bf16.gmra.mxu0 %v1403
        %v1530 = vpop.f32.mrf.mxu0
        %v1531 = vadd.f32 0.0, %v1530
        %v1532 = vpop.f32.mrf.mxu0
        %v1533 = vadd.f32 0.0, %v1532
        %1534 = vmatmul.bf16.gmra.mxu0 %v1404
        %v1535 = vpop.f32.mrf.mxu0
        %v1536 = vadd.f32 0.0, %v1535
        %v1537 = vpop.f32.mrf.mxu0
        %v1538 = vadd.f32 0.0, %v1537
        %1539 = vmatmul.bf16.gmra.mxu0 %v1405
        %v1540 = vpop.f32.mrf.mxu0
        %v1541 = vadd.f32 0.0, %v1540
        %v1542 = vpop.f32.mrf.mxu0
        %1543 = vdwg.mxu0
        %v1544 = vadd.f32 %v1343, %v1481
        %v1545 = vadd.f32 %v1344, %v1483
        %v1546 = vadd.f32 %v1345, %v1486
        %v1547 = vadd.f32 %v1346, %v1488
        %v1548 = vadd.f32 %v1347, %v1491
        %v1549 = vadd.f32 %v1348, %v1493
        %v1550 = vadd.f32 %v1349, %v1496
        %v1551 = vadd.f32 %v1350, %v1498
        %v1552 = vadd.f32 %v1351, %v1501
        %v1553 = vadd.f32 %v1352, %v1503
        %v1554 = vadd.f32 %v1353, %v1506
        %v1555 = vadd.f32 %v1354, %v1508
        %v1556 = vadd.f32 %v1355, %v1511
        %v1557 = vadd.f32 %v1356, %v1513
        %v1558 = vadd.f32 %v1357, %v1516
        %v1559 = vadd.f32 %v1358, %v1518
        %v1560 = vadd.f32 %v1359, %v1521
        %v1561 = vadd.f32 %v1360, %v1523
        %v1562 = vadd.f32 %v1361, %v1526
        %v1563 = vadd.f32 %v1362, %v1528
        %v1564 = vadd.f32 %v1363, %v1531
        %v1565 = vadd.f32 %v1364, %v1533
        %v1566 = vadd.f32 %v1365, %v1536
        %v1567 = vadd.f32 %v1366, %v1538
        %v1568 = vadd.f32 %v1367, %v1541
        %v1569 = vld [vmem:[#allocation2 + $0x19] sm:$0xff]
        %v1570 = vld [vmem:[#allocation2 + $0x21] sm:$0xff]
        %v1571 = vld [vmem:[#allocation2 + $0x29] sm:$0xff]
        %v1572 = vld [vmem:[#allocation2 + $0x31] sm:$0xff]
        %v1573 = vld [vmem:[#allocation2 + $0x39] sm:$0xff]
        %v1574 = vld [vmem:[#allocation2 + $0x41] sm:$0xff]
        %v1575 = vld [vmem:[#allocation2 + $0x49] sm:$0xff]
        %v1576 = vld [vmem:[#allocation2 + $0x51] sm:$0xff]
        %v1577 = vld [vmem:[#allocation2 + $0x59] sm:$0xff]
        %v1578 = vld [vmem:[#allocation2 + $0x61] sm:$0xff]
        %v1579 = vld [vmem:[#allocation2 + $0x69] sm:$0xff]
        %v1580 = vld [vmem:[#allocation2 + $0x71] sm:$0xff]
        %v1581 = vld [vmem:[#allocation2 + $0x79] sm:$0xff]
        %v1582 = vld [vmem:[#allocation2 + $0x81] sm:$0xff]
        %v1583 = vld [vmem:[#allocation2 + $0x89] sm:$0xff]
        %v1584 = vld [vmem:[#allocation2 + $0x91] sm:$0xff]
        %v1585 = vld [vmem:[#allocation2 + $0x99] sm:$0xff]
        %v1586 = vld [vmem:[#allocation2 + $0xa1] sm:$0xff]
        %v1587 = vld [vmem:[#allocation2 + $0xa9] sm:$0xff]
        %v1588 = vld [vmem:[#allocation2 + $0xb1] sm:$0xff]
        %v1589 = vld [vmem:[#allocation2 + $0xb9] sm:$0xff]
        %v1590 = vld [vmem:[#allocation2 + $0xc1] sm:$0xff]
        %v1591 = vld [vmem:[#allocation2 + $0xc9] sm:$0xff]
        %v1592 = vld [vmem:[#allocation2 + $0xd1] sm:$0xff]
        %v1593 = vld [vmem:[#allocation2 + $0xd9] sm:$0xff]
        %v1594 = vpack.c.bf16 %v1570, %v1569
        %v1595 = vpack.c.bf16 %v1572, %v1571
        %v1596 = vpack.c.bf16 %v1574, %v1573
        %v1597 = vpack.c.bf16 %v1576, %v1575
        %v1598 = vpack.c.bf16 %v1578, %v1577
        %v1599 = vpack.c.bf16 %v1580, %v1579
        %v1600 = vpack.c.bf16 %v1582, %v1581
        %v1601 = vpack.c.bf16 %v1584, %v1583
        %v1602 = vpack.c.bf16 %v1586, %v1585
        %v1603 = vpack.c.bf16 %v1588, %v1587
        %v1604 = vpack.c.bf16 %v1590, %v1589
        %v1605 = vpack.c.bf16 %v1592, %v1591
        %v1606 = vpack.c.bf16 %v1593, %v1593
        %s1607 = scalar_lea.vmem %s206, 384 [#allocation4]
        %v1608 = vld [vmem:[%s1607] sm:$0xf]
        %v1609 = vld [vmem:[%s1607 + $0x4] sm:$0xf]
        %v1610 = vld [vmem:[%s1607 + $0x8] sm:$0xf]
        %v1611 = vld [vmem:[%s1607 + $0xc] sm:$0xf]
        %v1612 = vld [vmem:[%s1607 + $0x10] sm:$0xf]
        %v1613 = vld [vmem:[%s1607 + $0x14] sm:$0xf]
        %v1614 = vld [vmem:[%s1607 + $0x18] sm:$0xf]
        %v1615 = vld [vmem:[%s1607 + $0x1c] sm:$0xf]
        %v1616 = vld [vmem:[%s1607 + $0x20] sm:$0xf]
        %v1617 = vld [vmem:[%s1607 + $0x24] sm:$0xf]
        %v1618 = vld [vmem:[%s1607 + $0x28] sm:$0xf]
        %v1619 = vld [vmem:[%s1607 + $0x2c] sm:$0xf]
        %v1620 = vld [vmem:[%s1607 + $0x30] sm:$0xf]
        %v1621 = vld [vmem:[%s1607 + $0x34] sm:$0xf]
        %v1622 = vld [vmem:[%s1607 + $0x38] sm:$0xf]
        %v1623 = vld [vmem:[%s1607 + $0x3c] sm:$0xf]
        %v1640 = vunpack.c.l.b16 %v1608
        %v1641 = vunpack.c.l.b16 %v1609
        %v1642 = vunpack.c.l.b16 %v1610
        %v1643 = vunpack.c.l.b16 %v1611
        %v1644 = vunpack.c.l.b16 %v1612
        %v1645 = vunpack.c.l.b16 %v1613
        %v1646 = vunpack.c.l.b16 %v1614
        %v1647 = vunpack.c.l.b16 %v1615
        %v1648 = vunpack.c.l.b16 %v1616
        %v1649 = vunpack.c.l.b16 %v1617
        %v1650 = vunpack.c.l.b16 %v1618
        %v1651 = vunpack.c.l.b16 %v1619
        %v1652 = vunpack.c.l.b16 %v1620
        %v1653 = vunpack.c.l.b16 %v1621
        %v1654 = vunpack.c.l.b16 %v1622
        %v1655 = vunpack.c.l.b16 %v1623
        %v1656 = vpack.c.b16 %v1641, %v1640
        %v1657 = vpack.c.b16 %v1643, %v1642
        %v1658 = vpack.c.b16 %v1645, %v1644
        %v1659 = vpack.c.b16 %v1647, %v1646
        %v1660 = vpack.c.b16 %v1649, %v1648
        %v1661 = vpack.c.b16 %v1651, %v1650
        %v1662 = vpack.c.b16 %v1653, %v1652
        %v1663 = vpack.c.b16 %v1655, %v1654
        %1672 = vmatpush.bf16.msra.mxu0 %v1663
        %1673 = vmatpush.bf16.msra.mxu0 %v1662
        %1674 = vmatpush.bf16.msra.mxu0 %v1661
        %1675 = vmatpush.bf16.msra.mxu0 %v1660
        %1676 = vmatpush.bf16.msra.mxu0 %v1659
        %1677 = vmatpush.bf16.msra.mxu0 %v1658
        %1678 = vmatpush.bf16.msra.mxu0 %v1657
        %1679 = vmatpush.bf16.msra.mxu0 %v1656
        %1680 = vmatmul.bf16.gmra.mxu0 %v1594
        %v1681 = vpop.f32.mrf.mxu0
        %v1682 = vadd.f32 0.0, %v1681
        %v1683 = vpop.f32.mrf.mxu0
        %v1684 = vadd.f32 0.0, %v1683
        %1685 = vmatmul.bf16.gmra.mxu0 %v1595
        %v1686 = vpop.f32.mrf.mxu0
        %v1687 = vadd.f32 0.0, %v1686
        %v1688 = vpop.f32.mrf.mxu0
        %v1689 = vadd.f32 0.0, %v1688
        %1690 = vmatmul.bf16.gmra.mxu0 %v1596
        %v1691 = vpop.f32.mrf.mxu0
        %v1692 = vadd.f32 0.0, %v1691
        %v1693 = vpop.f32.mrf.mxu0
        %v1694 = vadd.f32 0.0, %v1693
        %1695 = vmatmul.bf16.gmra.mxu0 %v1597
        %v1696 = vpop.f32.mrf.mxu0
        %v1697 = vadd.f32 0.0, %v1696
        %v1698 = vpop.f32.mrf.mxu0
        %v1699 = vadd.f32 0.0, %v1698
        %1700 = vmatmul.bf16.gmra.mxu0 %v1598
        %v1701 = vpop.f32.mrf.mxu0
        %v1702 = vadd.f32 0.0, %v1701
        %v1703 = vpop.f32.mrf.mxu0
        %v1704 = vadd.f32 0.0, %v1703
        %1705 = vmatmul.bf16.gmra.mxu0 %v1599
        %v1706 = vpop.f32.mrf.mxu0
        %v1707 = vadd.f32 0.0, %v1706
        %v1708 = vpop.f32.mrf.mxu0
        %v1709 = vadd.f32 0.0, %v1708
        %1710 = vmatmul.bf16.gmra.mxu0 %v1600
        %v1711 = vpop.f32.mrf.mxu0
        %v1712 = vadd.f32 0.0, %v1711
        %v1713 = vpop.f32.mrf.mxu0
        %v1714 = vadd.f32 0.0, %v1713
        %1715 = vmatmul.bf16.gmra.mxu0 %v1601
        %v1716 = vpop.f32.mrf.mxu0
        %v1717 = vadd.f32 0.0, %v1716
        %v1718 = vpop.f32.mrf.mxu0
        %v1719 = vadd.f32 0.0, %v1718
        %1720 = vmatmul.bf16.gmra.mxu0 %v1602
        %v1721 = vpop.f32.mrf.mxu0
        %v1722 = vadd.f32 0.0, %v1721
        %v1723 = vpop.f32.mrf.mxu0
        %v1724 = vadd.f32 0.0, %v1723
        %1725 = vmatmul.bf16.gmra.mxu0 %v1603
        %v1726 = vpop.f32.mrf.mxu0
        %v1727 = vadd.f32 0.0, %v1726
        %v1728 = vpop.f32.mrf.mxu0
        %v1729 = vadd.f32 0.0, %v1728
        %1730 = vmatmul.bf16.gmra.mxu0 %v1604
        %v1731 = vpop.f32.mrf.mxu0
        %v1732 = vadd.f32 0.0, %v1731
        %v1733 = vpop.f32.mrf.mxu0
        %v1734 = vadd.f32 0.0, %v1733
        %1735 = vmatmul.bf16.gmra.mxu0 %v1605
        %v1736 = vpop.f32.mrf.mxu0
        %v1737 = vadd.f32 0.0, %v1736
        %v1738 = vpop.f32.mrf.mxu0
        %v1739 = vadd.f32 0.0, %v1738
        %1740 = vmatmul.bf16.gmra.mxu0 %v1606
        %v1741 = vpop.f32.mrf.mxu0
        %v1742 = vadd.f32 0.0, %v1741
        %v1743 = vpop.f32.mrf.mxu0
        %1744 = vdwg.mxu0
        %v1745 = vadd.f32 %v1544, %v1682
        %v1746 = vadd.f32 %v1545, %v1684
        %v1747 = vadd.f32 %v1546, %v1687
        %v1748 = vadd.f32 %v1547, %v1689
        %v1749 = vadd.f32 %v1548, %v1692
        %v1750 = vadd.f32 %v1549, %v1694
        %v1751 = vadd.f32 %v1550, %v1697
        %v1752 = vadd.f32 %v1551, %v1699
        %v1753 = vadd.f32 %v1552, %v1702
        %v1754 = vadd.f32 %v1553, %v1704
        %v1755 = vadd.f32 %v1554, %v1707
        %v1756 = vadd.f32 %v1555, %v1709
        %v1757 = vadd.f32 %v1556, %v1712
        %v1758 = vadd.f32 %v1557, %v1714
        %v1759 = vadd.f32 %v1558, %v1717
        %v1760 = vadd.f32 %v1559, %v1719
        %v1761 = vadd.f32 %v1560, %v1722
        %v1762 = vadd.f32 %v1561, %v1724
        %v1763 = vadd.f32 %v1562, %v1727
        %v1764 = vadd.f32 %v1563, %v1729
        %v1765 = vadd.f32 %v1564, %v1732
        %v1766 = vadd.f32 %v1565, %v1734
        %v1767 = vadd.f32 %v1566, %v1737
        %v1768 = vadd.f32 %v1567, %v1739
        %v1769 = vadd.f32 %v1568, %v1742
        %v1770 = vld [vmem:[#allocation2 + $0x1a] sm:$0xff]
        %v1771 = vld [vmem:[#allocation2 + $0x22] sm:$0xff]
        %v1772 = vld [vmem:[#allocation2 + $0x2a] sm:$0xff]
        %v1773 = vld [vmem:[#allocation2 + $0x32] sm:$0xff]
        %v1774 = vld [vmem:[#allocation2 + $0x3a] sm:$0xff]
        %v1775 = vld [vmem:[#allocation2 + $0x42] sm:$0xff]
        %v1776 = vld [vmem:[#allocation2 + $0x4a] sm:$0xff]
        %v1777 = vld [vmem:[#allocation2 + $0x52] sm:$0xff]
        %v1778 = vld [vmem:[#allocation2 + $0x5a] sm:$0xff]
        %v1779 = vld [vmem:[#allocation2 + $0x62] sm:$0xff]
        %v1780 = vld [vmem:[#allocation2 + $0x6a] sm:$0xff]
        %v1781 = vld [vmem:[#allocation2 + $0x72] sm:$0xff]
        %v1782 = vld [vmem:[#allocation2 + $0x7a] sm:$0xff]
        %v1783 = vld [vmem:[#allocation2 + $0x82] sm:$0xff]
        %v1784 = vld [vmem:[#allocation2 + $0x8a] sm:$0xff]
        %v1785 = vld [vmem:[#allocation2 + $0x92] sm:$0xff]
        %v1786 = vld [vmem:[#allocation2 + $0x9a] sm:$0xff]
        %v1787 = vld [vmem:[#allocation2 + $0xa2] sm:$0xff]
        %v1788 = vld [vmem:[#allocation2 + $0xaa] sm:$0xff]
        %v1789 = vld [vmem:[#allocation2 + $0xb2] sm:$0xff]
        %v1790 = vld [vmem:[#allocation2 + $0xba] sm:$0xff]
        %v1791 = vld [vmem:[#allocation2 + $0xc2] sm:$0xff]
        %v1792 = vld [vmem:[#allocation2 + $0xca] sm:$0xff]
        %v1793 = vld [vmem:[#allocation2 + $0xd2] sm:$0xff]
        %v1794 = vld [vmem:[#allocation2 + $0xda] sm:$0xff]
        %v1795 = vpack.c.bf16 %v1771, %v1770
        %v1796 = vpack.c.bf16 %v1773, %v1772
        %v1797 = vpack.c.bf16 %v1775, %v1774
        %v1798 = vpack.c.bf16 %v1777, %v1776
        %v1799 = vpack.c.bf16 %v1779, %v1778
        %v1800 = vpack.c.bf16 %v1781, %v1780
        %v1801 = vpack.c.bf16 %v1783, %v1782
        %v1802 = vpack.c.bf16 %v1785, %v1784
        %v1803 = vpack.c.bf16 %v1787, %v1786
        %v1804 = vpack.c.bf16 %v1789, %v1788
        %v1805 = vpack.c.bf16 %v1791, %v1790
        %v1806 = vpack.c.bf16 %v1793, %v1792
        %v1807 = vpack.c.bf16 %v1794, %v1794
        %s1808 = scalar_lea.vmem %s206, 448 [#allocation4]
        %v1809 = vld [vmem:[%s1808] sm:$0xf]
        %v1810 = vld [vmem:[%s1808 + $0x4] sm:$0xf]
        %v1811 = vld [vmem:[%s1808 + $0x8] sm:$0xf]
        %v1812 = vld [vmem:[%s1808 + $0xc] sm:$0xf]
        %v1813 = vld [vmem:[%s1808 + $0x10] sm:$0xf]
        %v1814 = vld [vmem:[%s1808 + $0x14] sm:$0xf]
        %v1815 = vld [vmem:[%s1808 + $0x18] sm:$0xf]
        %v1816 = vld [vmem:[%s1808 + $0x1c] sm:$0xf]
        %v1817 = vld [vmem:[%s1808 + $0x20] sm:$0xf]
        %v1818 = vld [vmem:[%s1808 + $0x24] sm:$0xf]
        %v1819 = vld [vmem:[%s1808 + $0x28] sm:$0xf]
        %v1820 = vld [vmem:[%s1808 + $0x2c] sm:$0xf]
        %v1821 = vld [vmem:[%s1808 + $0x30] sm:$0xf]
        %v1822 = vld [vmem:[%s1808 + $0x34] sm:$0xf]
        %v1823 = vld [vmem:[%s1808 + $0x38] sm:$0xf]
        %v1824 = vld [vmem:[%s1808 + $0x3c] sm:$0xf]
        %v1841 = vunpack.c.l.b16 %v1809
        %v1842 = vunpack.c.l.b16 %v1810
        %v1843 = vunpack.c.l.b16 %v1811
        %v1844 = vunpack.c.l.b16 %v1812
        %v1845 = vunpack.c.l.b16 %v1813
        %v1846 = vunpack.c.l.b16 %v1814
        %v1847 = vunpack.c.l.b16 %v1815
        %v1848 = vunpack.c.l.b16 %v1816
        %v1849 = vunpack.c.l.b16 %v1817
        %v1850 = vunpack.c.l.b16 %v1818
        %v1851 = vunpack.c.l.b16 %v1819
        %v1852 = vunpack.c.l.b16 %v1820
        %v1853 = vunpack.c.l.b16 %v1821
        %v1854 = vunpack.c.l.b16 %v1822
        %v1855 = vunpack.c.l.b16 %v1823
        %v1856 = vunpack.c.l.b16 %v1824
        %v1857 = vpack.c.b16 %v1842, %v1841
        %v1858 = vpack.c.b16 %v1844, %v1843
        %v1859 = vpack.c.b16 %v1846, %v1845
        %v1860 = vpack.c.b16 %v1848, %v1847
        %v1861 = vpack.c.b16 %v1850, %v1849
        %v1862 = vpack.c.b16 %v1852, %v1851
        %v1863 = vpack.c.b16 %v1854, %v1853
        %v1864 = vpack.c.b16 %v1856, %v1855
        %1873 = vmatpush.bf16.msra.mxu0 %v1864
        %1874 = vmatpush.bf16.msra.mxu0 %v1863
        %1875 = vmatpush.bf16.msra.mxu0 %v1862
        %1876 = vmatpush.bf16.msra.mxu0 %v1861
        %1877 = vmatpush.bf16.msra.mxu0 %v1860
        %1878 = vmatpush.bf16.msra.mxu0 %v1859
        %1879 = vmatpush.bf16.msra.mxu0 %v1858
        %1880 = vmatpush.bf16.msra.mxu0 %v1857
        %1881 = vmatmul.bf16.gmra.mxu0 %v1795
        %v1882 = vpop.f32.mrf.mxu0
        %v1883 = vadd.f32 0.0, %v1882
        %v1884 = vpop.f32.mrf.mxu0
        %v1885 = vadd.f32 0.0, %v1884
        %1886 = vmatmul.bf16.gmra.mxu0 %v1796
        %v1887 = vpop.f32.mrf.mxu0
        %v1888 = vadd.f32 0.0, %v1887
        %v1889 = vpop.f32.mrf.mxu0
        %v1890 = vadd.f32 0.0, %v1889
        %1891 = vmatmul.bf16.gmra.mxu0 %v1797
        %v1892 = vpop.f32.mrf.mxu0
        %v1893 = vadd.f32 0.0, %v1892
        %v1894 = vpop.f32.mrf.mxu0
        %v1895 = vadd.f32 0.0, %v1894
        %1896 = vmatmul.bf16.gmra.mxu0 %v1798
        %v1897 = vpop.f32.mrf.mxu0
        %v1898 = vadd.f32 0.0, %v1897
        %v1899 = vpop.f32.mrf.mxu0
        %v1900 = vadd.f32 0.0, %v1899
        %1901 = vmatmul.bf16.gmra.mxu0 %v1799
        %v1902 = vpop.f32.mrf.mxu0
        %v1903 = vadd.f32 0.0, %v1902
        %v1904 = vpop.f32.mrf.mxu0
        %v1905 = vadd.f32 0.0, %v1904
        %1906 = vmatmul.bf16.gmra.mxu0 %v1800
        %v1907 = vpop.f32.mrf.mxu0
        %v1908 = vadd.f32 0.0, %v1907
        %v1909 = vpop.f32.mrf.mxu0
        %v1910 = vadd.f32 0.0, %v1909
        %1911 = vmatmul.bf16.gmra.mxu0 %v1801
        %v1912 = vpop.f32.mrf.mxu0
        %v1913 = vadd.f32 0.0, %v1912
        %v1914 = vpop.f32.mrf.mxu0
        %v1915 = vadd.f32 0.0, %v1914
        %1916 = vmatmul.bf16.gmra.mxu0 %v1802
        %v1917 = vpop.f32.mrf.mxu0
        %v1918 = vadd.f32 0.0, %v1917
        %v1919 = vpop.f32.mrf.mxu0
        %v1920 = vadd.f32 0.0, %v1919
        %1921 = vmatmul.bf16.gmra.mxu0 %v1803
        %v1922 = vpop.f32.mrf.mxu0
        %v1923 = vadd.f32 0.0, %v1922
        %v1924 = vpop.f32.mrf.mxu0
        %v1925 = vadd.f32 0.0, %v1924
        %1926 = vmatmul.bf16.gmra.mxu0 %v1804
        %v1927 = vpop.f32.mrf.mxu0
        %v1928 = vadd.f32 0.0, %v1927
        %v1929 = vpop.f32.mrf.mxu0
        %v1930 = vadd.f32 0.0, %v1929
        %1931 = vmatmul.bf16.gmra.mxu0 %v1805
        %v1932 = vpop.f32.mrf.mxu0
        %v1933 = vadd.f32 0.0, %v1932
        %v1934 = vpop.f32.mrf.mxu0
        %v1935 = vadd.f32 0.0, %v1934
        %1936 = vmatmul.bf16.gmra.mxu0 %v1806
        %v1937 = vpop.f32.mrf.mxu0
        %v1938 = vadd.f32 0.0, %v1937
        %v1939 = vpop.f32.mrf.mxu0
        %v1940 = vadd.f32 0.0, %v1939
        %1941 = vmatmul.bf16.gmra.mxu0 %v1807
        %v1942 = vpop.f32.mrf.mxu0
        %v1943 = vadd.f32 0.0, %v1942
        %v1944 = vpop.f32.mrf.mxu0
        %1945 = vdwg.mxu0
        %v1946 = vadd.f32 %v1745, %v1883
        %v1947 = vadd.f32 %v1746, %v1885
        %v1948 = vadd.f32 %v1747, %v1888
        %v1949 = vadd.f32 %v1748, %v1890
        %v1950 = vadd.f32 %v1749, %v1893
        %v1951 = vadd.f32 %v1750, %v1895
        %v1952 = vadd.f32 %v1751, %v1898
        %v1953 = vadd.f32 %v1752, %v1900
        %v1954 = vadd.f32 %v1753, %v1903
        %v1955 = vadd.f32 %v1754, %v1905
        %v1956 = vadd.f32 %v1755, %v1908
        %v1957 = vadd.f32 %v1756, %v1910
        %v1958 = vadd.f32 %v1757, %v1913
        %v1959 = vadd.f32 %v1758, %v1915
        %v1960 = vadd.f32 %v1759, %v1918
        %v1961 = vadd.f32 %v1760, %v1920
        %v1962 = vadd.f32 %v1761, %v1923
        %v1963 = vadd.f32 %v1762, %v1925
        %v1964 = vadd.f32 %v1763, %v1928
        %v1965 = vadd.f32 %v1764, %v1930
        %v1966 = vadd.f32 %v1765, %v1933
        %v1967 = vadd.f32 %v1766, %v1935
        %v1968 = vadd.f32 %v1767, %v1938
        %v1969 = vadd.f32 %v1768, %v1940
        %v1970 = vadd.f32 %v1769, %v1943
        %v1971 = vld [vmem:[#allocation2 + $0x1b] sm:$0xff]
        %v1972 = vld [vmem:[#allocation2 + $0x23] sm:$0xff]
        %v1973 = vld [vmem:[#allocation2 + $0x2b] sm:$0xff]
        %v1974 = vld [vmem:[#allocation2 + $0x33] sm:$0xff]
        %v1975 = vld [vmem:[#allocation2 + $0x3b] sm:$0xff]
        %v1976 = vld [vmem:[#allocation2 + $0x43] sm:$0xff]
        %v1977 = vld [vmem:[#allocation2 + $0x4b] sm:$0xff]
        %v1978 = vld [vmem:[#allocation2 + $0x53] sm:$0xff]
        %v1979 = vld [vmem:[#allocation2 + $0x5b] sm:$0xff]
        %v1980 = vld [vmem:[#allocation2 + $0x63] sm:$0xff]
        %v1981 = vld [vmem:[#allocation2 + $0x6b] sm:$0xff]
        %v1982 = vld [vmem:[#allocation2 + $0x73] sm:$0xff]
        %v1983 = vld [vmem:[#allocation2 + $0x7b] sm:$0xff]
        %v1984 = vld [vmem:[#allocation2 + $0x83] sm:$0xff]
        %v1985 = vld [vmem:[#allocation2 + $0x8b] sm:$0xff]
        %v1986 = vld [vmem:[#allocation2 + $0x93] sm:$0xff]
        %v1987 = vld [vmem:[#allocation2 + $0x9b] sm:$0xff]
        %v1988 = vld [vmem:[#allocation2 + $0xa3] sm:$0xff]
        %v1989 = vld [vmem:[#allocation2 + $0xab] sm:$0xff]
        %v1990 = vld [vmem:[#allocation2 + $0xb3] sm:$0xff]
        %v1991 = vld [vmem:[#allocation2 + $0xbb] sm:$0xff]
        %v1992 = vld [vmem:[#allocation2 + $0xc3] sm:$0xff]
        %v1993 = vld [vmem:[#allocation2 + $0xcb] sm:$0xff]
        %v1994 = vld [vmem:[#allocation2 + $0xd3] sm:$0xff]
        %v1995 = vld [vmem:[#allocation2 + $0xdb] sm:$0xff]
        %v1996 = vpack.c.bf16 %v1972, %v1971
        %v1997 = vpack.c.bf16 %v1974, %v1973
        %v1998 = vpack.c.bf16 %v1976, %v1975
        %v1999 = vpack.c.bf16 %v1978, %v1977
        %v2000 = vpack.c.bf16 %v1980, %v1979
        %v2001 = vpack.c.bf16 %v1982, %v1981
        %v2002 = vpack.c.bf16 %v1984, %v1983
        %v2003 = vpack.c.bf16 %v1986, %v1985
        %v2004 = vpack.c.bf16 %v1988, %v1987
        %v2005 = vpack.c.bf16 %v1990, %v1989
        %v2006 = vpack.c.bf16 %v1992, %v1991
        %v2007 = vpack.c.bf16 %v1994, %v1993
        %v2008 = vpack.c.bf16 %v1995, %v1995
        %s2009 = scalar_lea.vmem %s206, 512 [#allocation4]
        %v2010 = vld [vmem:[%s2009] sm:$0xf]
        %v2011 = vld [vmem:[%s2009 + $0x4] sm:$0xf]
        %v2012 = vld [vmem:[%s2009 + $0x8] sm:$0xf]
        %v2013 = vld [vmem:[%s2009 + $0xc] sm:$0xf]
        %v2014 = vld [vmem:[%s2009 + $0x10] sm:$0xf]
        %v2015 = vld [vmem:[%s2009 + $0x14] sm:$0xf]
        %v2016 = vld [vmem:[%s2009 + $0x18] sm:$0xf]
        %v2017 = vld [vmem:[%s2009 + $0x1c] sm:$0xf]
        %v2018 = vld [vmem:[%s2009 + $0x20] sm:$0xf]
        %v2019 = vld [vmem:[%s2009 + $0x24] sm:$0xf]
        %v2020 = vld [vmem:[%s2009 + $0x28] sm:$0xf]
        %v2021 = vld [vmem:[%s2009 + $0x2c] sm:$0xf]
        %v2022 = vld [vmem:[%s2009 + $0x30] sm:$0xf]
        %v2023 = vld [vmem:[%s2009 + $0x34] sm:$0xf]
        %v2024 = vld [vmem:[%s2009 + $0x38] sm:$0xf]
        %v2025 = vld [vmem:[%s2009 + $0x3c] sm:$0xf]
        %v2042 = vunpack.c.l.b16 %v2010
        %v2043 = vunpack.c.l.b16 %v2011
        %v2044 = vunpack.c.l.b16 %v2012
        %v2045 = vunpack.c.l.b16 %v2013
        %v2046 = vunpack.c.l.b16 %v2014
        %v2047 = vunpack.c.l.b16 %v2015
        %v2048 = vunpack.c.l.b16 %v2016
        %v2049 = vunpack.c.l.b16 %v2017
        %v2050 = vunpack.c.l.b16 %v2018
        %v2051 = vunpack.c.l.b16 %v2019
        %v2052 = vunpack.c.l.b16 %v2020
        %v2053 = vunpack.c.l.b16 %v2021
        %v2054 = vunpack.c.l.b16 %v2022
        %v2055 = vunpack.c.l.b16 %v2023
        %v2056 = vunpack.c.l.b16 %v2024
        %v2057 = vunpack.c.l.b16 %v2025
        %v2058 = vpack.c.b16 %v2043, %v2042
        %v2059 = vpack.c.b16 %v2045, %v2044
        %v2060 = vpack.c.b16 %v2047, %v2046
        %v2061 = vpack.c.b16 %v2049, %v2048
        %v2062 = vpack.c.b16 %v2051, %v2050
        %v2063 = vpack.c.b16 %v2053, %v2052
        %v2064 = vpack.c.b16 %v2055, %v2054
        %v2065 = vpack.c.b16 %v2057, %v2056
        %2074 = vmatpush.bf16.msra.mxu0 %v2065
        %2075 = vmatpush.bf16.msra.mxu0 %v2064
        %2076 = vmatpush.bf16.msra.mxu0 %v2063
        %2077 = vmatpush.bf16.msra.mxu0 %v2062
        %2078 = vmatpush.bf16.msra.mxu0 %v2061
        %2079 = vmatpush.bf16.msra.mxu0 %v2060
        %2080 = vmatpush.bf16.msra.mxu0 %v2059
        %2081 = vmatpush.bf16.msra.mxu0 %v2058
        %2082 = vmatmul.bf16.gmra.mxu0 %v1996
        %v2083 = vpop.f32.mrf.mxu0
        %v2084 = vadd.f32 0.0, %v2083
        %v2085 = vpop.f32.mrf.mxu0
        %v2086 = vadd.f32 0.0, %v2085
        %2087 = vmatmul.bf16.gmra.mxu0 %v1997
        %v2088 = vpop.f32.mrf.mxu0
        %v2089 = vadd.f32 0.0, %v2088
        %v2090 = vpop.f32.mrf.mxu0
        %v2091 = vadd.f32 0.0, %v2090
        %2092 = vmatmul.bf16.gmra.mxu0 %v1998
        %v2093 = vpop.f32.mrf.mxu0
        %v2094 = vadd.f32 0.0, %v2093
        %v2095 = vpop.f32.mrf.mxu0
        %v2096 = vadd.f32 0.0, %v2095
        %2097 = vmatmul.bf16.gmra.mxu0 %v1999
        %v2098 = vpop.f32.mrf.mxu0
        %v2099 = vadd.f32 0.0, %v2098
        %v2100 = vpop.f32.mrf.mxu0
        %v2101 = vadd.f32 0.0, %v2100
        %2102 = vmatmul.bf16.gmra.mxu0 %v2000
        %v2103 = vpop.f32.mrf.mxu0
        %v2104 = vadd.f32 0.0, %v2103
        %v2105 = vpop.f32.mrf.mxu0
        %v2106 = vadd.f32 0.0, %v2105
        %2107 = vmatmul.bf16.gmra.mxu0 %v2001
        %v2108 = vpop.f32.mrf.mxu0
        %v2109 = vadd.f32 0.0, %v2108
        %v2110 = vpop.f32.mrf.mxu0
        %v2111 = vadd.f32 0.0, %v2110
        %2112 = vmatmul.bf16.gmra.mxu0 %v2002
        %v2113 = vpop.f32.mrf.mxu0
        %v2114 = vadd.f32 0.0, %v2113
        %v2115 = vpop.f32.mrf.mxu0
        %v2116 = vadd.f32 0.0, %v2115
        %2117 = vmatmul.bf16.gmra.mxu0 %v2003
        %v2118 = vpop.f32.mrf.mxu0
        %v2119 = vadd.f32 0.0, %v2118
        %v2120 = vpop.f32.mrf.mxu0
        %v2121 = vadd.f32 0.0, %v2120
        %2122 = vmatmul.bf16.gmra.mxu0 %v2004
        %v2123 = vpop.f32.mrf.mxu0
        %v2124 = vadd.f32 0.0, %v2123
        %v2125 = vpop.f32.mrf.mxu0
        %v2126 = vadd.f32 0.0, %v2125
        %2127 = vmatmul.bf16.gmra.mxu0 %v2005
        %v2128 = vpop.f32.mrf.mxu0
        %v2129 = vadd.f32 0.0, %v2128
        %v2130 = vpop.f32.mrf.mxu0
        %v2131 = vadd.f32 0.0, %v2130
        %2132 = vmatmul.bf16.gmra.mxu0 %v2006
        %v2133 = vpop.f32.mrf.mxu0
        %v2134 = vadd.f32 0.0, %v2133
        %v2135 = vpop.f32.mrf.mxu0
        %v2136 = vadd.f32 0.0, %v2135
        %2137 = vmatmul.bf16.gmra.mxu0 %v2007
        %v2138 = vpop.f32.mrf.mxu0
        %v2139 = vadd.f32 0.0, %v2138
        %v2140 = vpop.f32.mrf.mxu0
        %v2141 = vadd.f32 0.0, %v2140
        %2142 = vmatmul.bf16.gmra.mxu0 %v2008
        %v2143 = vpop.f32.mrf.mxu0
        %v2144 = vadd.f32 0.0, %v2143
        %v2145 = vpop.f32.mrf.mxu0
        %2146 = vdwg.mxu0
        %v2147 = vadd.f32 %v1946, %v2084
        %v2148 = vadd.f32 %v1947, %v2086
        %v2149 = vadd.f32 %v1948, %v2089
        %v2150 = vadd.f32 %v1949, %v2091
        %v2151 = vadd.f32 %v1950, %v2094
        %v2152 = vadd.f32 %v1951, %v2096
        %v2153 = vadd.f32 %v1952, %v2099
        %v2154 = vadd.f32 %v1953, %v2101
        %v2155 = vadd.f32 %v1954, %v2104
        %v2156 = vadd.f32 %v1955, %v2106
        %v2157 = vadd.f32 %v1956, %v2109
        %v2158 = vadd.f32 %v1957, %v2111
        %v2159 = vadd.f32 %v1958, %v2114
        %v2160 = vadd.f32 %v1959, %v2116
        %v2161 = vadd.f32 %v1960, %v2119
        %v2162 = vadd.f32 %v1961, %v2121
        %v2163 = vadd.f32 %v1962, %v2124
        %v2164 = vadd.f32 %v1963, %v2126
        %v2165 = vadd.f32 %v1964, %v2129
        %v2166 = vadd.f32 %v1965, %v2131
        %v2167 = vadd.f32 %v1966, %v2134
        %v2168 = vadd.f32 %v1967, %v2136
        %v2169 = vadd.f32 %v1968, %v2139
        %v2170 = vadd.f32 %v1969, %v2141
        %v2171 = vadd.f32 %v1970, %v2144
        %v2172 = vld [vmem:[%s215] sm:$0x1]
        %v2174 = vperm.slane %v2172, 0
        %v2176 = vadd.f32 %v2147, %v2174
        %v2177 = vadd.f32 %v2148, %v2174
        %v2178 = vadd.f32 %v2149, %v2174
        %v2179 = vadd.f32 %v2150, %v2174
        %v2180 = vadd.f32 %v2151, %v2174
        %v2181 = vadd.f32 %v2152, %v2174
        %v2182 = vadd.f32 %v2153, %v2174
        %v2183 = vadd.f32 %v2154, %v2174
        %v2184 = vadd.f32 %v2155, %v2174
        %v2185 = vadd.f32 %v2156, %v2174
        %v2186 = vadd.f32 %v2157, %v2174
        %v2187 = vadd.f32 %v2158, %v2174
        %v2188 = vadd.f32 %v2159, %v2174
        %v2189 = vadd.f32 %v2160, %v2174
        %v2190 = vadd.f32 %v2161, %v2174
        %v2191 = vadd.f32 %v2162, %v2174
        %v2192 = vadd.f32 %v2163, %v2174
        %v2193 = vadd.f32 %v2164, %v2174
        %v2194 = vadd.f32 %v2165, %v2174
        %v2195 = vadd.f32 %v2166, %v2174
        %v2196 = vadd.f32 %v2167, %v2174
        %v2197 = vadd.f32 %v2168, %v2174
        %v2198 = vadd.f32 %v2169, %v2174
        %v2199 = vadd.f32 %v2170, %v2174
        %v2200 = vadd.f32 %v2171, %v2174
        %p2201 = scmp.ge.s32.totalorder %s21, 2
        %p2202 = scmp.eq.s32.totalorder %s359, 0
        %p2203 = pnand %p2201, %p2202
        %p2204 = pneg %p2203
        %v2205 = vld [vmem:[#allocation3] sm:$0xff]
        %v2206 = vld [vmem:[#allocation3 + $0x8] sm:$0xff]
        %v2207 = vld [vmem:[#allocation3 + $0x10] sm:$0xff]
        %v2208 = vld [vmem:[#allocation3 + $0x18] sm:$0xff]
        %v2209 = vld [vmem:[#allocation3 + $0x20] sm:$0xff]
        %v2210 = vld [vmem:[#allocation3 + $0x28] sm:$0xff]
        %v2211 = vld [vmem:[#allocation3 + $0x30] sm:$0xff]
        %v2212 = vld [vmem:[#allocation3 + $0x38] sm:$0xff]
        %v2213 = vld [vmem:[#allocation3 + $0x40] sm:$0xff]
        %v2214 = vld [vmem:[#allocation3 + $0x48] sm:$0xff]
        %v2215 = vld [vmem:[#allocation3 + $0x50] sm:$0xff]
        %v2216 = vld [vmem:[#allocation3 + $0x58] sm:$0xff]
        %v2217 = vld [vmem:[#allocation3 + $0x60] sm:$0xff]
        %v2218 = vld [vmem:[#allocation3 + $0x68] sm:$0xff]
        %v2219 = vld [vmem:[#allocation3 + $0x70] sm:$0xff]
        %v2220 = vld [vmem:[#allocation3 + $0x78] sm:$0xff]
        %v2221 = vld [vmem:[#allocation3 + $0x80] sm:$0xff]
        %v2222 = vld [vmem:[#allocation3 + $0x88] sm:$0xff]
        %v2223 = vld [vmem:[#allocation3 + $0x90] sm:$0xff]
        %v2224 = vld [vmem:[#allocation3 + $0x98] sm:$0xff]
        %v2225 = vld [vmem:[#allocation3 + $0xa0] sm:$0xff]
        %v2226 = vld [vmem:[#allocation3 + $0xa8] sm:$0xff]
        %v2227 = vld [vmem:[#allocation3 + $0xb0] sm:$0xff]
        %v2228 = vld [vmem:[#allocation3 + $0xb8] sm:$0xff]
        %v2229 = vld [vmem:[#allocation3 + $0xc0] sm:$0xff]
        %v2230 = vadd.f32 %v2176, %v2205
        %v2231 = vadd.f32 %v2177, %v2206
        %v2232 = vadd.f32 %v2178, %v2207
        %v2233 = vadd.f32 %v2179, %v2208
        %v2234 = vadd.f32 %v2180, %v2209
        %v2235 = vadd.f32 %v2181, %v2210
        %v2236 = vadd.f32 %v2182, %v2211
        %v2237 = vadd.f32 %v2183, %v2212
        %v2238 = vadd.f32 %v2184, %v2213
        %v2239 = vadd.f32 %v2185, %v2214
        %v2240 = vadd.f32 %v2186, %v2215
        %v2241 = vadd.f32 %v2187, %v2216
        %v2242 = vadd.f32 %v2188, %v2217
        %v2243 = vadd.f32 %v2189, %v2218
        %v2244 = vadd.f32 %v2190, %v2219
        %v2245 = vadd.f32 %v2191, %v2220
        %v2246 = vadd.f32 %v2192, %v2221
        %v2247 = vadd.f32 %v2193, %v2222
        %v2248 = vadd.f32 %v2194, %v2223
        %v2249 = vadd.f32 %v2195, %v2224
        %v2250 = vadd.f32 %v2196, %v2225
        %v2251 = vadd.f32 %v2197, %v2226
        %v2252 = vadd.f32 %v2198, %v2227
        %v2253 = vadd.f32 %v2199, %v2228
        %v2254 = vadd.f32 %v2200, %v2229
        %s2255 = scalar_select %p2204, 1, 0
        %v2256 = vstv %s2255
        %vm2257 = vcmp.eq.s32.totalorder %v2256, 1
        %v2258 = vsel %vm2257, %v2230, %v2176
        %v2259 = vsel %vm2257, %v2231, %v2177
        %v2260 = vsel %vm2257, %v2232, %v2178
        %v2261 = vsel %vm2257, %v2233, %v2179
        %v2262 = vsel %vm2257, %v2234, %v2180
        %v2263 = vsel %vm2257, %v2235, %v2181
        %v2264 = vsel %vm2257, %v2236, %v2182
        %v2265 = vsel %vm2257, %v2237, %v2183
        %v2266 = vsel %vm2257, %v2238, %v2184
        %v2267 = vsel %vm2257, %v2239, %v2185
        %v2268 = vsel %vm2257, %v2240, %v2186
        %v2269 = vsel %vm2257, %v2241, %v2187
        %v2270 = vsel %vm2257, %v2242, %v2188
        %v2271 = vsel %vm2257, %v2243, %v2189
        %v2272 = vsel %vm2257, %v2244, %v2190
        %v2273 = vsel %vm2257, %v2245, %v2191
        %v2274 = vsel %vm2257, %v2246, %v2192
        %v2275 = vsel %vm2257, %v2247, %v2193
        %v2276 = vsel %vm2257, %v2248, %v2194
        %v2277 = vsel %vm2257, %v2249, %v2195
        %v2278 = vsel %vm2257, %v2250, %v2196
        %v2279 = vsel %vm2257, %v2251, %v2197
        %v2280 = vsel %vm2257, %v2252, %v2198
        %v2281 = vsel %vm2257, %v2253, %v2199
        %v2282 = vsel %vm2257, %v2254, %v2200
        %v2283 = vmax.f32 %v2258, 0.0
        %v2284 = vmax.f32 %v2259, 0.0
        %v2285 = vmax.f32 %v2260, 0.0
        %v2286 = vmax.f32 %v2261, 0.0
        %v2287 = vmax.f32 %v2262, 0.0
        %v2288 = vmax.f32 %v2263, 0.0
        %v2289 = vmax.f32 %v2264, 0.0
        %v2290 = vmax.f32 %v2265, 0.0
        %v2291 = vmax.f32 %v2266, 0.0
        %v2292 = vmax.f32 %v2267, 0.0
        %v2293 = vmax.f32 %v2268, 0.0
        %v2294 = vmax.f32 %v2269, 0.0
        %v2295 = vmax.f32 %v2270, 0.0
        %v2296 = vmax.f32 %v2271, 0.0
        %v2297 = vmax.f32 %v2272, 0.0
        %v2298 = vmax.f32 %v2273, 0.0
        %v2299 = vmax.f32 %v2274, 0.0
        %v2300 = vmax.f32 %v2275, 0.0
        %v2301 = vmax.f32 %v2276, 0.0
        %v2302 = vmax.f32 %v2277, 0.0
        %v2303 = vmax.f32 %v2278, 0.0
        %v2304 = vmax.f32 %v2279, 0.0
        %v2305 = vmax.f32 %v2280, 0.0
        %v2306 = vmax.f32 %v2281, 0.0
        %v2307 = vmax.f32 %v2282, 0.0
        %v2308 = vld [vmem:[%s1] sm:$0xff]
        %v2309 = vld [vmem:[%s1 + $0x8] sm:$0xff]
        %v2310 = vld [vmem:[%s1 + $0x10] sm:$0xff]
        %v2311 = vld [vmem:[%s1 + $0x18] sm:$0xff]
        %v2312 = vld [vmem:[%s1 + $0x20] sm:$0xff]
        %v2313 = vld [vmem:[%s1 + $0x28] sm:$0xff]
        %v2314 = vld [vmem:[%s1 + $0x30] sm:$0xff]
        %v2315 = vld [vmem:[%s1 + $0x38] sm:$0xff]
        %v2316 = vld [vmem:[%s1 + $0x40] sm:$0xff]
        %v2317 = vld [vmem:[%s1 + $0x48] sm:$0xff]
        %v2318 = vld [vmem:[%s1 + $0x50] sm:$0xff]
        %v2319 = vld [vmem:[%s1 + $0x58] sm:$0xff]
        %v2320 = vld [vmem:[%s1 + $0x60] sm:$0xff]
        %v2321 = vld [vmem:[%s1 + $0x68] sm:$0xff]
        %v2322 = vld [vmem:[%s1 + $0x70] sm:$0xff]
        %v2323 = vld [vmem:[%s1 + $0x78] sm:$0xff]
        %v2324 = vld [vmem:[%s1 + $0x80] sm:$0xff]
        %v2325 = vld [vmem:[%s1 + $0x88] sm:$0xff]
        %v2326 = vld [vmem:[%s1 + $0x90] sm:$0xff]
        %v2327 = vld [vmem:[%s1 + $0x98] sm:$0xff]
        %v2328 = vld [vmem:[%s1 + $0xa0] sm:$0xff]
        %v2329 = vld [vmem:[%s1 + $0xa8] sm:$0xff]
        %v2330 = vld [vmem:[%s1 + $0xb0] sm:$0xff]
        %v2331 = vld [vmem:[%s1 + $0xb8] sm:$0xff]
        %v2332 = vld [vmem:[%s1 + $0xc0] sm:$0xff]
        %2334 = vset.pattern.permute.xlu0 0
        %2335 = vperm.xlu0 %2334, %v2308
        %v2336 = vpop.permute.xlu0 %2335
        %2339 = vset.pattern.permute.xlu0 0
        %2340 = vperm.xlu0 %2339, %v2309
        %v2341 = vpop.permute.xlu0 %2340
        %2344 = vset.pattern.permute.xlu0 0
        %2345 = vperm.xlu0 %2344, %v2310
        %v2346 = vpop.permute.xlu0 %2345
        %2349 = vset.pattern.permute.xlu0 0
        %2350 = vperm.xlu0 %2349, %v2311
        %v2351 = vpop.permute.xlu0 %2350
        %2354 = vset.pattern.permute.xlu0 0
        %2355 = vperm.xlu0 %2354, %v2312
        %v2356 = vpop.permute.xlu0 %2355
        %2359 = vset.pattern.permute.xlu0 0
        %2360 = vperm.xlu0 %2359, %v2313
        %v2361 = vpop.permute.xlu0 %2360
        %2364 = vset.pattern.permute.xlu0 0
        %2365 = vperm.xlu0 %2364, %v2314
        %v2366 = vpop.permute.xlu0 %2365
        %2369 = vset.pattern.permute.xlu0 0
        %2370 = vperm.xlu0 %2369, %v2315
        %v2371 = vpop.permute.xlu0 %2370
        %2374 = vset.pattern.permute.xlu0 0
        %2375 = vperm.xlu0 %2374, %v2316
        %v2376 = vpop.permute.xlu0 %2375
        %2379 = vset.pattern.permute.xlu0 0
        %2380 = vperm.xlu0 %2379, %v2317
        %v2381 = vpop.permute.xlu0 %2380
        %2384 = vset.pattern.permute.xlu0 0
        %2385 = vperm.xlu0 %2384, %v2318
        %v2386 = vpop.permute.xlu0 %2385
        %2389 = vset.pattern.permute.xlu0 0
        %2390 = vperm.xlu0 %2389, %v2319
        %v2391 = vpop.permute.xlu0 %2390
        %2394 = vset.pattern.permute.xlu0 0
        %2395 = vperm.xlu0 %2394, %v2320
        %v2396 = vpop.permute.xlu0 %2395
        %2399 = vset.pattern.permute.xlu0 0
        %2400 = vperm.xlu0 %2399, %v2321
        %v2401 = vpop.permute.xlu0 %2400
        %2404 = vset.pattern.permute.xlu0 0
        %2405 = vperm.xlu0 %2404, %v2322
        %v2406 = vpop.permute.xlu0 %2405
        %2409 = vset.pattern.permute.xlu0 0
        %2410 = vperm.xlu0 %2409, %v2323
        %v2411 = vpop.permute.xlu0 %2410
        %2414 = vset.pattern.permute.xlu0 0
        %2415 = vperm.xlu0 %2414, %v2324
        %v2416 = vpop.permute.xlu0 %2415
        %2419 = vset.pattern.permute.xlu0 0
        %2420 = vperm.xlu0 %2419, %v2325
        %v2421 = vpop.permute.xlu0 %2420
        %2424 = vset.pattern.permute.xlu0 0
        %2425 = vperm.xlu0 %2424, %v2326
        %v2426 = vpop.permute.xlu0 %2425
        %2429 = vset.pattern.permute.xlu0 0
        %2430 = vperm.xlu0 %2429, %v2327
        %v2431 = vpop.permute.xlu0 %2430
        %2434 = vset.pattern.permute.xlu0 0
        %2435 = vperm.xlu0 %2434, %v2328
        %v2436 = vpop.permute.xlu0 %2435
        %2439 = vset.pattern.permute.xlu0 0
        %2440 = vperm.xlu0 %2439, %v2329
        %v2441 = vpop.permute.xlu0 %2440
        %2444 = vset.pattern.permute.xlu0 0
        %2445 = vperm.xlu0 %2444, %v2330
        %v2446 = vpop.permute.xlu0 %2445
        %2449 = vset.pattern.permute.xlu0 0
        %2450 = vperm.xlu0 %2449, %v2331
        %v2451 = vpop.permute.xlu0 %2450
        %2454 = vset.pattern.permute.xlu0 0
        %2455 = vperm.xlu0 %2454, %v2332
        %v2456 = vpop.permute.xlu0 %2455
        %v2458 = vmul.f32 %v2283, %v2336
        %v2459 = vmul.f32 %v2284, %v2341
        %v2460 = vmul.f32 %v2285, %v2346
        %v2461 = vmul.f32 %v2286, %v2351
        %v2462 = vmul.f32 %v2287, %v2356
        %v2463 = vmul.f32 %v2288, %v2361
        %v2464 = vmul.f32 %v2289, %v2366
        %v2465 = vmul.f32 %v2290, %v2371
        %v2466 = vmul.f32 %v2291, %v2376
        %v2467 = vmul.f32 %v2292, %v2381
        %v2468 = vmul.f32 %v2293, %v2386
        %v2469 = vmul.f32 %v2294, %v2391
        %v2470 = vmul.f32 %v2295, %v2396
        %v2471 = vmul.f32 %v2296, %v2401
        %v2472 = vmul.f32 %v2297, %v2406
        %v2473 = vmul.f32 %v2298, %v2411
        %v2474 = vmul.f32 %v2299, %v2416
        %v2475 = vmul.f32 %v2300, %v2421
        %v2476 = vmul.f32 %v2301, %v2426
        %v2477 = vmul.f32 %v2302, %v2431
        %v2478 = vmul.f32 %v2303, %v2436
        %v2479 = vmul.f32 %v2304, %v2441
        %v2480 = vmul.f32 %v2305, %v2446
        %v2481 = vmul.f32 %v2306, %v2451
        %v2482 = vmul.f32 %v2307, %v2456
        %2483 = vst [vmem:[#allocation2 + $0x10] sm:$0xff] %v2458
        %2484 = vst [vmem:[#allocation2 + $0x18] sm:$0xff] %v2459
        %2485 = vst [vmem:[#allocation2 + $0x20] sm:$0xff] %v2460
        %2486 = vst [vmem:[#allocation2 + $0x28] sm:$0xff] %v2461
        %2487 = vst [vmem:[#allocation2 + $0x30] sm:$0xff] %v2462
        %2488 = vst [vmem:[#allocation2 + $0x38] sm:$0xff] %v2463
        %2489 = vst [vmem:[#allocation2 + $0x40] sm:$0xff] %v2464
        %2490 = vst [vmem:[#allocation2 + $0x48] sm:$0xff] %v2465
        %2491 = vst [vmem:[#allocation2 + $0x50] sm:$0xff] %v2466
        %2492 = vst [vmem:[#allocation2 + $0x58] sm:$0xff] %v2467
        %2493 = vst [vmem:[#allocation2 + $0x60] sm:$0xff] %v2468
        %2494 = vst [vmem:[#allocation2 + $0x68] sm:$0xff] %v2469
        %2495 = vst [vmem:[#allocation2 + $0x70] sm:$0xff] %v2470
        %2496 = vst [vmem:[#allocation2 + $0x78] sm:$0xff] %v2471
        %2497 = vst [vmem:[#allocation2 + $0x80] sm:$0xff] %v2472
        %2498 = vst [vmem:[#allocation2 + $0x88] sm:$0xff] %v2473
        %2499 = vst [vmem:[#allocation2 + $0x90] sm:$0xff] %v2474
        %2500 = vst [vmem:[#allocation2 + $0x98] sm:$0xff] %v2475
        %2501 = vst [vmem:[#allocation2 + $0xa0] sm:$0xff] %v2476
        %2502 = vst [vmem:[#allocation2 + $0xa8] sm:$0xff] %v2477
        %2503 = vst [vmem:[#allocation2 + $0xb0] sm:$0xff] %v2478
        %2504 = vst [vmem:[#allocation2 + $0xb8] sm:$0xff] %v2479
        %2505 = vst [vmem:[#allocation2 + $0xc0] sm:$0xff] %v2480
        %2506 = vst [vmem:[#allocation2 + $0xc8] sm:$0xff] %v2481
        %2507 = vst [vmem:[#allocation2 + $0xd0] sm:$0xff] %v2482
        %p2508 = scmp.eq.s32.totalorder %s21, 10
        // Predicated region
        $region53: #{alphazero_forward.3} parent=35 // pred_check
          %p2509 = pneg %p2508
        $region54: #{alphazero_forward.3} parent=35 // pred_check_branch
          %2511 = sbr.rel (%p2509) target = $region56
        $region55: #{alphazero_forward.3} parent=35 // pred_region
          %2512 = vst [vmem:[%s4] sm:$0xff] %v2458
          %2513 = vst [vmem:[%s4 + $0x8] sm:$0xff] %v2459
          %2514 = vst [vmem:[%s4 + $0x10] sm:$0xff] %v2460
          %2515 = vst [vmem:[%s4 + $0x18] sm:$0xff] %v2461
          %2516 = vst [vmem:[%s4 + $0x20] sm:$0xff] %v2462
          %2517 = vst [vmem:[%s4 + $0x28] sm:$0xff] %v2463
          %2518 = vst [vmem:[%s4 + $0x30] sm:$0xff] %v2464
          %2519 = vst [vmem:[%s4 + $0x38] sm:$0xff] %v2465
          %2520 = vst [vmem:[%s4 + $0x40] sm:$0xff] %v2466
          %2521 = vst [vmem:[%s4 + $0x48] sm:$0xff] %v2467
          %2522 = vst [vmem:[%s4 + $0x50] sm:$0xff] %v2468
          %2523 = vst [vmem:[%s4 + $0x58] sm:$0xff] %v2469
          %2524 = vst [vmem:[%s4 + $0x60] sm:$0xff] %v2470
          %2525 = vst [vmem:[%s4 + $0x68] sm:$0xff] %v2471
          %2526 = vst [vmem:[%s4 + $0x70] sm:$0xff] %v2472
          %2527 = vst [vmem:[%s4 + $0x78] sm:$0xff] %v2473
          %2528 = vst [vmem:[%s4 + $0x80] sm:$0xff] %v2474
          %2529 = vst [vmem:[%s4 + $0x88] sm:$0xff] %v2475
          %2530 = vst [vmem:[%s4 + $0x90] sm:$0xff] %v2476
          %2531 = vst [vmem:[%s4 + $0x98] sm:$0xff] %v2477
          %2532 = vst [vmem:[%s4 + $0xa0] sm:$0xff] %v2478
          %2533 = vst [vmem:[%s4 + $0xa8] sm:$0xff] %v2479
          %2534 = vst [vmem:[%s4 + $0xb0] sm:$0xff] %v2480
          %2535 = vst [vmem:[%s4 + $0xb8] sm:$0xff] %v2481
          %2536 = vst [vmem:[%s4 + $0xc0] sm:$0xff] %v2482
        $region56: #{alphazero_forward.3} parent=35 // pred_fallthru
          _
        // Predicated region
        $region57: #{alphazero_forward.3} parent=35 // pred_check
          %p2537 = pneg %p128
        $region58: #{alphazero_forward.3} parent=35 // pred_check_branch
          %2539 = sbr.rel (%p2537) target = $region60
        $region59: #{alphazero_forward.3} parent=35 // pred_region
          _
        $region60: #{alphazero_forward.3} parent=35 // pred_fallthru
          _
        // Predicated region
        $region61: #{alphazero_forward.3} parent=35 // pred_check
          %p2540 = pneg %p128
        $region62: #{alphazero_forward.3} parent=35 // pred_check_branch
          %2542 = sbr.rel (%p2540) target = $region64
        $region63: #{alphazero_forward.3} parent=35 // pred_region
          _
        $region64: #{alphazero_forward.3} parent=35 // pred_fallthru
          _
      $region36: #{alphazero_forward.3} parent=5 // pred_fallthru
        _
      %p2543 = scmp.le.s32.totalorder 2, %s16
      // Predicated region
      $region65: #{alphazero_forward.3} parent=5 // pred_check
        %p2544 = pneg %p2543
      $region66: #{alphazero_forward.3} parent=5 // pred_check_branch
        %2546 = sbr.rel (%p2544) target = $region68
      $region67: #{alphazero_forward.3} parent=5 // pred_region
        %s2547 = ssub.s32 %s16, 2
      $region68: #{alphazero_forward.3} parent=5 // pred_fallthru
        _
    $region6: #{alphazero_forward.3} parent=1 // loop_footer
      %s20 = sadd.s32 1, %s16
    $region7: #{alphazero_forward.3} parent=1 // loop_footer_branch
      %15 = sbr.rel target = $region3
    $region8: #{alphazero_forward.3} parent=1 // loop_exit
      _
    %2548 = vsyncpa [#allocation5], 1
    %s2549 = scalar_lea.sflag [#allocation5], 1
    %2550 = vsyncpa %s2549, 1
    %2551 = vsyncpa [#allocation7], 1
    %s2552 = scalar_lea.sflag [#allocation7], 1
    %2553 = vsyncpa %s2552, 1

// kernel: alphazero_forward.5
$region0: #{alphazero_forward.5}
  #allocation0 [shape = 'u32[]', space=smem, size = 0x4, offset = 0x4, fixed_abs, tag = 'smem constant byte address 0x4 - core index']
  #allocation1 [shape = 'u32[72,128]{1,0:T(1,128)}', space=vmem, size = 0x9000, scoped, tag = 'internal scratch']
  %s0 = inlined_call_operand.vmem [shape: f32[2,2048], index: 0, kind: input, shape index: {}]
  %s1 = inlined_call_operand.vmem [shape: f32[2048,64], index: 1, kind: input, shape index: {}]
  %s2 = inlined_call_operand.hbm [shape: f32[1,64], index: 2, kind: input, shape index: {}]
  %s3 = inlined_call_operand.hbm [shape: f32[2,64], index: 3, kind: output, shape index: {}]
  %s4 = sld [smem:[#allocation0]]
  $region26: #{alphazero_forward.5} parent=0
    _
  %s6 = ssub.s32 1, %s4
  %s7 = scalar_select 0, %s6, %s4
  $region1: #{alphazero_forward.5} parent=0
    #allocation2 [shape = 'u8[512]{0}', space=vmem, size = 0x400, scoped, tag = 'input window, operand 2, single buffered']
    #allocation3 [shape = 's32[1]{0}', space=sflag, size = 0x4, scoped, tag = 'scoped memory for alphazero_forward.5']
    #allocation4 [shape = 's32[1]{0}', space=sflag, size = 0x4, scoped, tag = 'scoped memory for alphazero_forward.5']
    #allocation5 [shape = 'u8[1024]{0}', space=vmem, size = 0x400, scoped, tag = 'output window, operand 0, single buffered']
    %8 = vsyncpa [#allocation3], 0
    %9 = vsyncpa [#allocation4], 0
    // Predicated region
    $region2: #{alphazero_forward.5} parent=1 // pred_check
      _
    $region3: #{alphazero_forward.5} parent=1 // pred_check_branch
      %11 = sbr.rel (0) target = $region5
    $region4: #{alphazero_forward.5} parent=1 // pred_region
      _
    $region5: #{alphazero_forward.5} parent=1 // pred_fallthru
      _
    // Predicated region
    $region6: #{alphazero_forward.5} parent=1 // pred_check
      _
    $region7: #{alphazero_forward.5} parent=1 // pred_check_branch
      %13 = sbr.rel (0) target = $region9
    $region8: #{alphazero_forward.5} parent=1 // pred_region
      _
    $region9: #{alphazero_forward.5} parent=1 // pred_fallthru
      _
    // Predicated region
    $region10: #{alphazero_forward.5} parent=1 // pred_check
      _
    $region11: #{alphazero_forward.5} parent=1 // pred_check_branch
      %15 = sbr.rel (0) target = $region13
    $region12: #{alphazero_forward.5} parent=1 // pred_region
      %17 = vsyncadd [#allocation3], 0
      %s19 = sshll.u32 %s2, 4
      %s20 = int_to_ptr.hbm [resolvable:$true] %s19
      %s21 = sshll.u32 [#allocation2], 4
      %s22 = int_to_ptr.vmem [resolvable:$true] %s21
      %24 = dma.hbm_to_vmem [thread:$0]  %s20, 16, %s22, [#allocation3]
    $region13: #{alphazero_forward.5} parent=1 // pred_fallthru
      _
    // Predicated region
    $region14: #{alphazero_forward.5} parent=1 // pred_check
      _
    $region15: #{alphazero_forward.5} parent=1 // pred_check_branch
      %26 = sbr.rel (0) target = $region17
    $region16: #{alphazero_forward.5} parent=1 // pred_region
      %28 = dma.done [#allocation3], 16
    $region17: #{alphazero_forward.5} parent=1 // pred_fallthru
      _
    %v29 = vld [vmem:[%s0] sm:$0xff]
    %v30 = vld [vmem:[%s0 + $0x8] sm:$0xff]
    %v31 = vld [vmem:[%s0 + $0x10] sm:$0xff]
    %v32 = vld [vmem:[%s0 + $0x18] sm:$0xff]
    %v33 = vld [vmem:[%s1] sm:$0xff]
    %v34 = vld [vmem:[%s1 + $0x8] sm:$0xff]
    %v35 = vld [vmem:[%s1 + $0x10] sm:$0xff]
    %v36 = vld [vmem:[%s1 + $0x18] sm:$0xff]
    %v37 = vld [vmem:[%s1 + $0x20] sm:$0xff]
    %v38 = vld [vmem:[%s1 + $0x28] sm:$0xff]
    %v39 = vld [vmem:[%s1 + $0x30] sm:$0xff]
    %v40 = vld [vmem:[%s1 + $0x38] sm:$0xff]
    %v41 = vld [vmem:[%s1 + $0x40] sm:$0xff]
    %v42 = vld [vmem:[%s1 + $0x48] sm:$0xff]
    %v43 = vld [vmem:[%s1 + $0x50] sm:$0xff]
    %v44 = vld [vmem:[%s1 + $0x58] sm:$0xff]
    %v45 = vld [vmem:[%s1 + $0x60] sm:$0xff]
    %v46 = vld [vmem:[%s1 + $0x68] sm:$0xff]
    %v47 = vld [vmem:[%s1 + $0x70] sm:$0xff]
    %v48 = vld [vmem:[%s1 + $0x78] sm:$0xff]
    %v49 = vld [vmem:[%s1 + $0x80] sm:$0xff]
    %v50 = vld [vmem:[%s1 + $0x88] sm:$0xff]
    %v51 = vld [vmem:[%s1 + $0x90] sm:$0xff]
    %v52 = vld [vmem:[%s1 + $0x98] sm:$0xff]
    %v53 = vld [vmem:[%s1 + $0xa0] sm:$0xff]
    %v54 = vld [vmem:[%s1 + $0xa8] sm:$0xff]
    %v55 = vld [vmem:[%s1 + $0xb0] sm:$0xff]
    %v56 = vld [vmem:[%s1 + $0xb8] sm:$0xff]
    %v57 = vld [vmem:[%s1 + $0xc0] sm:$0xff]
    %v58 = vld [vmem:[%s1 + $0xc8] sm:$0xff]
    %v59 = vld [vmem:[%s1 + $0xd0] sm:$0xff]
    %v60 = vld [vmem:[%s1 + $0xd8] sm:$0xff]
    %v61 = vld [vmem:[%s1 + $0xe0] sm:$0xff]
    %v62 = vld [vmem:[%s1 + $0xe8] sm:$0xff]
    %v63 = vld [vmem:[%s1 + $0xf0] sm:$0xff]
    %v64 = vld [vmem:[%s1 + $0xf8] sm:$0xff]
    %v65 = vld [vmem:[%s1 + $0x100] sm:$0xff]
    %v66 = vld [vmem:[%s1 + $0x108] sm:$0xff]
    %v67 = vld [vmem:[%s1 + $0x110] sm:$0xff]
    %v68 = vld [vmem:[%s1 + $0x118] sm:$0xff]
    %v69 = vld [vmem:[%s1 + $0x120] sm:$0xff]
    %v70 = vld [vmem:[%s1 + $0x128] sm:$0xff]
    %v71 = vld [vmem:[%s1 + $0x130] sm:$0xff]
    %v72 = vld [vmem:[%s1 + $0x138] sm:$0xff]
    %v73 = vld [vmem:[%s1 + $0x140] sm:$0xff]
    %v74 = vld [vmem:[%s1 + $0x148] sm:$0xff]
    %v75 = vld [vmem:[%s1 + $0x150] sm:$0xff]
    %v76 = vld [vmem:[%s1 + $0x158] sm:$0xff]
    %v77 = vld [vmem:[%s1 + $0x160] sm:$0xff]
    %v78 = vld [vmem:[%s1 + $0x168] sm:$0xff]
    %v79 = vld [vmem:[%s1 + $0x170] sm:$0xff]
    %v80 = vld [vmem:[%s1 + $0x178] sm:$0xff]
    %v81 = vld [vmem:[%s1 + $0x180] sm:$0xff]
    %v82 = vld [vmem:[%s1 + $0x188] sm:$0xff]
    %v83 = vld [vmem:[%s1 + $0x190] sm:$0xff]
    %v84 = vld [vmem:[%s1 + $0x198] sm:$0xff]
    %v85 = vld [vmem:[%s1 + $0x1a0] sm:$0xff]
    %v86 = vld [vmem:[%s1 + $0x1a8] sm:$0xff]
    %v87 = vld [vmem:[%s1 + $0x1b0] sm:$0xff]
    %v88 = vld [vmem:[%s1 + $0x1b8] sm:$0xff]
    %v89 = vld [vmem:[%s1 + $0x1c0] sm:$0xff]
    %v90 = vld [vmem:[%s1 + $0x1c8] sm:$0xff]
    %v91 = vld [vmem:[%s1 + $0x1d0] sm:$0xff]
    %v92 = vld [vmem:[%s1 + $0x1d8] sm:$0xff]
    %v93 = vld [vmem:[%s1 + $0x1e0] sm:$0xff]
    %v94 = vld [vmem:[%s1 + $0x1e8] sm:$0xff]
    %v95 = vld [vmem:[%s1 + $0x1f0] sm:$0xff]
    %v96 = vld [vmem:[%s1 + $0x1f8] sm:$0xff]
    %v97 = vld [vmem:[%s1 + $0x200] sm:$0xff]
    %v98 = vld [vmem:[%s1 + $0x208] sm:$0xff]
    %v99 = vld [vmem:[%s1 + $0x210] sm:$0xff]
    %v100 = vld [vmem:[%s1 + $0x218] sm:$0xff]
    %v101 = vld [vmem:[%s1 + $0x220] sm:$0xff]
    %v102 = vld [vmem:[%s1 + $0x228] sm:$0xff]
    %v103 = vld [vmem:[%s1 + $0x230] sm:$0xff]
    %v104 = vld [vmem:[%s1 + $0x238] sm:$0xff]
    %v105 = vld [vmem:[%s1 + $0x240] sm:$0xff]
    %v106 = vld [vmem:[%s1 + $0x248] sm:$0xff]
    %v107 = vld [vmem:[%s1 + $0x250] sm:$0xff]
    %v108 = vld [vmem:[%s1 + $0x258] sm:$0xff]
    %v109 = vld [vmem:[%s1 + $0x260] sm:$0xff]
    %v110 = vld [vmem:[%s1 + $0x268] sm:$0xff]
    %v111 = vld [vmem:[%s1 + $0x270] sm:$0xff]
    %v112 = vld [vmem:[%s1 + $0x278] sm:$0xff]
    %v113 = vld [vmem:[%s1 + $0x280] sm:$0xff]
    %v114 = vld [vmem:[%s1 + $0x288] sm:$0xff]
    %v115 = vld [vmem:[%s1 + $0x290] sm:$0xff]
    %v116 = vld [vmem:[%s1 + $0x298] sm:$0xff]
    %v117 = vld [vmem:[%s1 + $0x2a0] sm:$0xff]
    %v118 = vld [vmem:[%s1 + $0x2a8] sm:$0xff]
    %v119 = vld [vmem:[%s1 + $0x2b0] sm:$0xff]
    %v120 = vld [vmem:[%s1 + $0x2b8] sm:$0xff]
    %v121 = vld [vmem:[%s1 + $0x2c0] sm:$0xff]
    %v122 = vld [vmem:[%s1 + $0x2c8] sm:$0xff]
    %v123 = vld [vmem:[%s1 + $0x2d0] sm:$0xff]
    %v124 = vld [vmem:[%s1 + $0x2d8] sm:$0xff]
    %v125 = vld [vmem:[%s1 + $0x2e0] sm:$0xff]
    %v126 = vld [vmem:[%s1 + $0x2e8] sm:$0xff]
    %v127 = vld [vmem:[%s1 + $0x2f0] sm:$0xff]
    %v128 = vld [vmem:[%s1 + $0x2f8] sm:$0xff]
    %v129 = vld [vmem:[%s1 + $0x300] sm:$0xff]
    %v130 = vld [vmem:[%s1 + $0x308] sm:$0xff]
    %v131 = vld [vmem:[%s1 + $0x310] sm:$0xff]
    %v132 = vld [vmem:[%s1 + $0x318] sm:$0xff]
    %v133 = vld [vmem:[%s1 + $0x320] sm:$0xff]
    %v134 = vld [vmem:[%s1 + $0x328] sm:$0xff]
    %v135 = vld [vmem:[%s1 + $0x330] sm:$0xff]
    %v136 = vld [vmem:[%s1 + $0x338] sm:$0xff]
    %v137 = vld [vmem:[%s1 + $0x340] sm:$0xff]
    %v138 = vld [vmem:[%s1 + $0x348] sm:$0xff]
    %v139 = vld [vmem:[%s1 + $0x350] sm:$0xff]
    %v140 = vld [vmem:[%s1 + $0x358] sm:$0xff]
    %v141 = vld [vmem:[%s1 + $0x360] sm:$0xff]
    %v142 = vld [vmem:[%s1 + $0x368] sm:$0xff]
    %v143 = vld [vmem:[%s1 + $0x370] sm:$0xff]
    %v144 = vld [vmem:[%s1 + $0x378] sm:$0xff]
    %v145 = vld [vmem:[%s1 + $0x380] sm:$0xff]
    %v146 = vld [vmem:[%s1 + $0x388] sm:$0xff]
    %v147 = vld [vmem:[%s1 + $0x390] sm:$0xff]
    %v148 = vld [vmem:[%s1 + $0x398] sm:$0xff]
    %v149 = vld [vmem:[%s1 + $0x3a0] sm:$0xff]
    %v150 = vld [vmem:[%s1 + $0x3a8] sm:$0xff]
    %v151 = vld [vmem:[%s1 + $0x3b0] sm:$0xff]
    %v152 = vld [vmem:[%s1 + $0x3b8] sm:$0xff]
    %v153 = vld [vmem:[%s1 + $0x3c0] sm:$0xff]
    %v154 = vld [vmem:[%s1 + $0x3c8] sm:$0xff]
    %v155 = vld [vmem:[%s1 + $0x3d0] sm:$0xff]
    %v156 = vld [vmem:[%s1 + $0x3d8] sm:$0xff]
    %v157 = vld [vmem:[%s1 + $0x3e0] sm:$0xff]
    %v158 = vld [vmem:[%s1 + $0x3e8] sm:$0xff]
    %v159 = vld [vmem:[%s1 + $0x3f0] sm:$0xff]
    %v160 = vld [vmem:[%s1 + $0x3f8] sm:$0xff]
    %v161 = vld [vmem:[%s1 + $0x400] sm:$0xff]
    %v162 = vld [vmem:[%s1 + $0x408] sm:$0xff]
    %v163 = vld [vmem:[%s1 + $0x410] sm:$0xff]
    %v164 = vld [vmem:[%s1 + $0x418] sm:$0xff]
    %v165 = vld [vmem:[%s1 + $0x420] sm:$0xff]
    %v166 = vld [vmem:[%s1 + $0x428] sm:$0xff]
    %v167 = vld [vmem:[%s1 + $0x430] sm:$0xff]
    %v168 = vld [vmem:[%s1 + $0x438] sm:$0xff]
    %v169 = vld [vmem:[%s1 + $0x440] sm:$0xff]
    %v170 = vld [vmem:[%s1 + $0x448] sm:$0xff]
    %v171 = vld [vmem:[%s1 + $0x450] sm:$0xff]
    %v172 = vld [vmem:[%s1 + $0x458] sm:$0xff]
    %v173 = vld [vmem:[%s1 + $0x460] sm:$0xff]
    %v174 = vld [vmem:[%s1 + $0x468] sm:$0xff]
    %v175 = vld [vmem:[%s1 + $0x470] sm:$0xff]
    %v176 = vld [vmem:[%s1 + $0x478] sm:$0xff]
    %v177 = vld [vmem:[%s1 + $0x480] sm:$0xff]
    %v178 = vld [vmem:[%s1 + $0x488] sm:$0xff]
    %v179 = vld [vmem:[%s1 + $0x490] sm:$0xff]
    %v180 = vld [vmem:[%s1 + $0x498] sm:$0xff]
    %v181 = vld [vmem:[%s1 + $0x4a0] sm:$0xff]
    %v182 = vld [vmem:[%s1 + $0x4a8] sm:$0xff]
    %v183 = vld [vmem:[%s1 + $0x4b0] sm:$0xff]
    %v184 = vld [vmem:[%s1 + $0x4b8] sm:$0xff]
    %v185 = vld [vmem:[%s1 + $0x4c0] sm:$0xff]
    %v186 = vld [vmem:[%s1 + $0x4c8] sm:$0xff]
    %v187 = vld [vmem:[%s1 + $0x4d0] sm:$0xff]
    %v188 = vld [vmem:[%s1 + $0x4d8] sm:$0xff]
    %v189 = vld [vmem:[%s1 + $0x4e0] sm:$0xff]
    %v190 = vld [vmem:[%s1 + $0x4e8] sm:$0xff]
    %v191 = vld [vmem:[%s1 + $0x4f0] sm:$0xff]
    %v192 = vld [vmem:[%s1 + $0x4f8] sm:$0xff]
    %v193 = vld [vmem:[%s1 + $0x500] sm:$0xff]
    %v194 = vld [vmem:[%s1 + $0x508] sm:$0xff]
    %v195 = vld [vmem:[%s1 + $0x510] sm:$0xff]
    %v196 = vld [vmem:[%s1 + $0x518] sm:$0xff]
    %v197 = vld [vmem:[%s1 + $0x520] sm:$0xff]
    %v198 = vld [vmem:[%s1 + $0x528] sm:$0xff]
    %v199 = vld [vmem:[%s1 + $0x530] sm:$0xff]
    %v200 = vld [vmem:[%s1 + $0x538] sm:$0xff]
    %v201 = vld [vmem:[%s1 + $0x540] sm:$0xff]
    %v202 = vld [vmem:[%s1 + $0x548] sm:$0xff]
    %v203 = vld [vmem:[%s1 + $0x550] sm:$0xff]
    %v204 = vld [vmem:[%s1 + $0x558] sm:$0xff]
    %v205 = vld [vmem:[%s1 + $0x560] sm:$0xff]
    %v206 = vld [vmem:[%s1 + $0x568] sm:$0xff]
    %v207 = vld [vmem:[%s1 + $0x570] sm:$0xff]
    %v208 = vld [vmem:[%s1 + $0x578] sm:$0xff]
    %v209 = vld [vmem:[%s1 + $0x580] sm:$0xff]
    %v210 = vld [vmem:[%s1 + $0x588] sm:$0xff]
    %v211 = vld [vmem:[%s1 + $0x590] sm:$0xff]
    %v212 = vld [vmem:[%s1 + $0x598] sm:$0xff]
    %v213 = vld [vmem:[%s1 + $0x5a0] sm:$0xff]
    %v214 = vld [vmem:[%s1 + $0x5a8] sm:$0xff]
    %v215 = vld [vmem:[%s1 + $0x5b0] sm:$0xff]
    %v216 = vld [vmem:[%s1 + $0x5b8] sm:$0xff]
    %v217 = vld [vmem:[%s1 + $0x5c0] sm:$0xff]
    %v218 = vld [vmem:[%s1 + $0x5c8] sm:$0xff]
    %v219 = vld [vmem:[%s1 + $0x5d0] sm:$0xff]
    %v220 = vld [vmem:[%s1 + $0x5d8] sm:$0xff]
    %v221 = vld [vmem:[%s1 + $0x5e0] sm:$0xff]
    %v222 = vld [vmem:[%s1 + $0x5e8] sm:$0xff]
    %v223 = vld [vmem:[%s1 + $0x5f0] sm:$0xff]
    %v224 = vld [vmem:[%s1 + $0x5f8] sm:$0xff]
    %v225 = vld [vmem:[%s1 + $0x600] sm:$0xff]
    %v226 = vld [vmem:[%s1 + $0x608] sm:$0xff]
    %v227 = vld [vmem:[%s1 + $0x610] sm:$0xff]
    %v228 = vld [vmem:[%s1 + $0x618] sm:$0xff]
    %v229 = vld [vmem:[%s1 + $0x620] sm:$0xff]
    %v230 = vld [vmem:[%s1 + $0x628] sm:$0xff]
    %v231 = vld [vmem:[%s1 + $0x630] sm:$0xff]
    %v232 = vld [vmem:[%s1 + $0x638] sm:$0xff]
    %v233 = vld [vmem:[%s1 + $0x640] sm:$0xff]
    %v234 = vld [vmem:[%s1 + $0x648] sm:$0xff]
    %v235 = vld [vmem:[%s1 + $0x650] sm:$0xff]
    %v236 = vld [vmem:[%s1 + $0x658] sm:$0xff]
    %v237 = vld [vmem:[%s1 + $0x660] sm:$0xff]
    %v238 = vld [vmem:[%s1 + $0x668] sm:$0xff]
    %v239 = vld [vmem:[%s1 + $0x670] sm:$0xff]
    %v240 = vld [vmem:[%s1 + $0x678] sm:$0xff]
    %v241 = vld [vmem:[%s1 + $0x680] sm:$0xff]
    %v242 = vld [vmem:[%s1 + $0x688] sm:$0xff]
    %v243 = vld [vmem:[%s1 + $0x690] sm:$0xff]
    %v244 = vld [vmem:[%s1 + $0x698] sm:$0xff]
    %v245 = vld [vmem:[%s1 + $0x6a0] sm:$0xff]
    %v246 = vld [vmem:[%s1 + $0x6a8] sm:$0xff]
    %v247 = vld [vmem:[%s1 + $0x6b0] sm:$0xff]
    %v248 = vld [vmem:[%s1 + $0x6b8] sm:$0xff]
    %v249 = vld [vmem:[%s1 + $0x6c0] sm:$0xff]
    %v250 = vld [vmem:[%s1 + $0x6c8] sm:$0xff]
    %v251 = vld [vmem:[%s1 + $0x6d0] sm:$0xff]
    %v252 = vld [vmem:[%s1 + $0x6d8] sm:$0xff]
    %v253 = vld [vmem:[%s1 + $0x6e0] sm:$0xff]
    %v254 = vld [vmem:[%s1 + $0x6e8] sm:$0xff]
    %v255 = vld [vmem:[%s1 + $0x6f0] sm:$0xff]
    %v256 = vld [vmem:[%s1 + $0x6f8] sm:$0xff]
    %v257 = vld [vmem:[%s1 + $0x700] sm:$0xff]
    %v258 = vld [vmem:[%s1 + $0x708] sm:$0xff]
    %v259 = vld [vmem:[%s1 + $0x710] sm:$0xff]
    %v260 = vld [vmem:[%s1 + $0x718] sm:$0xff]
    %v261 = vld [vmem:[%s1 + $0x720] sm:$0xff]
    %v262 = vld [vmem:[%s1 + $0x728] sm:$0xff]
    %v263 = vld [vmem:[%s1 + $0x730] sm:$0xff]
    %v264 = vld [vmem:[%s1 + $0x738] sm:$0xff]
    %v265 = vld [vmem:[%s1 + $0x740] sm:$0xff]
    %v266 = vld [vmem:[%s1 + $0x748] sm:$0xff]
    %v267 = vld [vmem:[%s1 + $0x750] sm:$0xff]
    %v268 = vld [vmem:[%s1 + $0x758] sm:$0xff]
    %v269 = vld [vmem:[%s1 + $0x760] sm:$0xff]
    %v270 = vld [vmem:[%s1 + $0x768] sm:$0xff]
    %v271 = vld [vmem:[%s1 + $0x770] sm:$0xff]
    %v272 = vld [vmem:[%s1 + $0x778] sm:$0xff]
    %v273 = vld [vmem:[%s1 + $0x780] sm:$0xff]
    %v274 = vld [vmem:[%s1 + $0x788] sm:$0xff]
    %v275 = vld [vmem:[%s1 + $0x790] sm:$0xff]
    %v276 = vld [vmem:[%s1 + $0x798] sm:$0xff]
    %v277 = vld [vmem:[%s1 + $0x7a0] sm:$0xff]
    %v278 = vld [vmem:[%s1 + $0x7a8] sm:$0xff]
    %v279 = vld [vmem:[%s1 + $0x7b0] sm:$0xff]
    %v280 = vld [vmem:[%s1 + $0x7b8] sm:$0xff]
    %v281 = vld [vmem:[%s1 + $0x7c0] sm:$0xff]
    %v282 = vld [vmem:[%s1 + $0x7c8] sm:$0xff]
    %v283 = vld [vmem:[%s1 + $0x7d0] sm:$0xff]
    %v284 = vld [vmem:[%s1 + $0x7d8] sm:$0xff]
    %v285 = vld [vmem:[%s1 + $0x7e0] sm:$0xff]
    %v286 = vld [vmem:[%s1 + $0x7e8] sm:$0xff]
    %v287 = vld [vmem:[%s1 + $0x7f0] sm:$0xff]
    %v288 = vld [vmem:[%s1 + $0x7f8] sm:$0xff]
    %v289 = vld [vmem:[#allocation2] sm:$0x1]
    %v291 = vperm.slane %v289, 0
    %297 = vst [vmem:[#allocation1] ss:$4 sm:$0xff] %v29
    %s298 = scalar_lea.vmem [#allocation1], 32
    %299 = vst [vmem:[%s298] ss:$4 sm:$0xff] %v30
    %v300 = vld.sshfl [vmem:[#allocation1] sm:$0xff pattern:$0x73625140]
    %v301 = vld.sshfl [vmem:[#allocation1 + $0x8] sm:$0xff pattern:$0x73625140]
    %v302 = vld.sshfl [vmem:[#allocation1 + $0x10] sm:$0xff pattern:$0x73625140]
    %v303 = vld.sshfl [vmem:[#allocation1 + $0x18] sm:$0xff pattern:$0x73625140]
    %v304 = vld.sshfl [vmem:[#allocation1 + $0x20] sm:$0xff pattern:$0x73625140]
    %v305 = vld.sshfl [vmem:[#allocation1 + $0x28] sm:$0xff pattern:$0x73625140]
    %v306 = vld.sshfl [vmem:[#allocation1 + $0x30] sm:$0xff pattern:$0x73625140]
    %v307 = vld.sshfl [vmem:[#allocation1 + $0x38] sm:$0xff pattern:$0x73625140]
    %308 = vst [vmem:[#allocation1] ss:$4 sm:$0xff] %v31
    %309 = vst [vmem:[%s298] ss:$4 sm:$0xff] %v32
    %v310 = vld.sshfl [vmem:[#allocation1] sm:$0xff pattern:$0x73625140]
    %v311 = vld.sshfl [vmem:[#allocation1 + $0x8] sm:$0xff pattern:$0x73625140]
    %v312 = vld.sshfl [vmem:[#allocation1 + $0x10] sm:$0xff pattern:$0x73625140]
    %v313 = vld.sshfl [vmem:[#allocation1 + $0x18] sm:$0xff pattern:$0x73625140]
    %v314 = vld.sshfl [vmem:[#allocation1 + $0x20] sm:$0xff pattern:$0x73625140]
    %v315 = vld.sshfl [vmem:[#allocation1 + $0x28] sm:$0xff pattern:$0x73625140]
    %v316 = vld.sshfl [vmem:[#allocation1 + $0x30] sm:$0xff pattern:$0x73625140]
    %v317 = vld.sshfl [vmem:[#allocation1 + $0x38] sm:$0xff pattern:$0x73625140]
    %334 = vmatpush.msra.mxu0 %v48
    %335 = vmatpush.msra.mxu0 %v47
    %336 = vmatpush.msra.mxu0 %v46
    %337 = vmatpush.msra.mxu0 %v45
    %338 = vmatpush.msra.mxu0 %v44
    %339 = vmatpush.msra.mxu0 %v43
    %340 = vmatpush.msra.mxu0 %v42
    %341 = vmatpush.msra.mxu0 %v41
    %342 = vmatpush.msra.mxu0 %v40
    %343 = vmatpush.msra.mxu0 %v39
    %344 = vmatpush.msra.mxu0 %v38
    %345 = vmatpush.msra.mxu0 %v37
    %346 = vmatpush.msra.mxu0 %v36
    %347 = vmatpush.msra.mxu0 %v35
    %348 = vmatpush.msra.mxu0 %v34
    %349 = vmatpush.msra.mxu0 %v33
    %350 = vmatmul.f32.gmra.mxu0 %v300
    %v351 = vpop.f32.mrf.mxu0
    %v352 = vadd.f32 %v291, %v351
    %353 = vdwg.mxu0
    %354 = vmatpush.msra.mxu0 %v64
    %355 = vmatpush.msra.mxu0 %v63
    %356 = vmatpush.msra.mxu0 %v62
    %357 = vmatpush.msra.mxu0 %v61
    %358 = vmatpush.msra.mxu0 %v60
    %359 = vmatpush.msra.mxu0 %v59
    %360 = vmatpush.msra.mxu0 %v58
    %361 = vmatpush.msra.mxu0 %v57
    %362 = vmatpush.msra.mxu0 %v56
    %363 = vmatpush.msra.mxu0 %v55
    %364 = vmatpush.msra.mxu0 %v54
    %365 = vmatpush.msra.mxu0 %v53
    %366 = vmatpush.msra.mxu0 %v52
    %367 = vmatpush.msra.mxu0 %v51
    %368 = vmatpush.msra.mxu0 %v50
    %369 = vmatpush.msra.mxu0 %v49
    %370 = vmatmul.f32.gmra.mxu0 %v301
    %v371 = vpop.f32.mrf.mxu0
    %v372 = vadd.f32 %v352, %v371
    %373 = vdwg.mxu0
    %374 = vmatpush.msra.mxu0 %v80
    %375 = vmatpush.msra.mxu0 %v79
    %376 = vmatpush.msra.mxu0 %v78
    %377 = vmatpush.msra.mxu0 %v77
    %378 = vmatpush.msra.mxu0 %v76
    %379 = vmatpush.msra.mxu0 %v75
    %380 = vmatpush.msra.mxu0 %v74
    %381 = vmatpush.msra.mxu0 %v73
    %382 = vmatpush.msra.mxu0 %v72
    %383 = vmatpush.msra.mxu0 %v71
    %384 = vmatpush.msra.mxu0 %v70
    %385 = vmatpush.msra.mxu0 %v69
    %386 = vmatpush.msra.mxu0 %v68
    %387 = vmatpush.msra.mxu0 %v67
    %388 = vmatpush.msra.mxu0 %v66
    %389 = vmatpush.msra.mxu0 %v65
    %390 = vmatmul.f32.gmra.mxu0 %v302
    %v391 = vpop.f32.mrf.mxu0
    %v392 = vadd.f32 %v372, %v391
    %393 = vdwg.mxu0
    %394 = vmatpush.msra.mxu0 %v96
    %395 = vmatpush.msra.mxu0 %v95
    %396 = vmatpush.msra.mxu0 %v94
    %397 = vmatpush.msra.mxu0 %v93
    %398 = vmatpush.msra.mxu0 %v92
    %399 = vmatpush.msra.mxu0 %v91
    %400 = vmatpush.msra.mxu0 %v90
    %401 = vmatpush.msra.mxu0 %v89
    %402 = vmatpush.msra.mxu0 %v88
    %403 = vmatpush.msra.mxu0 %v87
    %404 = vmatpush.msra.mxu0 %v86
    %405 = vmatpush.msra.mxu0 %v85
    %406 = vmatpush.msra.mxu0 %v84
    %407 = vmatpush.msra.mxu0 %v83
    %408 = vmatpush.msra.mxu0 %v82
    %409 = vmatpush.msra.mxu0 %v81
    %410 = vmatmul.f32.gmra.mxu0 %v303
    %v411 = vpop.f32.mrf.mxu0
    %v412 = vadd.f32 %v392, %v411
    %413 = vdwg.mxu0
    %414 = vmatpush.msra.mxu0 %v112
    %415 = vmatpush.msra.mxu0 %v111
    %416 = vmatpush.msra.mxu0 %v110
    %417 = vmatpush.msra.mxu0 %v109
    %418 = vmatpush.msra.mxu0 %v108
    %419 = vmatpush.msra.mxu0 %v107
    %420 = vmatpush.msra.mxu0 %v106
    %421 = vmatpush.msra.mxu0 %v105
    %422 = vmatpush.msra.mxu0 %v104
    %423 = vmatpush.msra.mxu0 %v103
    %424 = vmatpush.msra.mxu0 %v102
    %425 = vmatpush.msra.mxu0 %v101
    %426 = vmatpush.msra.mxu0 %v100
    %427 = vmatpush.msra.mxu0 %v99
    %428 = vmatpush.msra.mxu0 %v98
    %429 = vmatpush.msra.mxu0 %v97
    %430 = vmatmul.f32.gmra.mxu0 %v304
    %v431 = vpop.f32.mrf.mxu0
    %v432 = vadd.f32 %v412, %v431
    %433 = vdwg.mxu0
    %434 = vmatpush.msra.mxu0 %v128
    %435 = vmatpush.msra.mxu0 %v127
    %436 = vmatpush.msra.mxu0 %v126
    %437 = vmatpush.msra.mxu0 %v125
    %438 = vmatpush.msra.mxu0 %v124
    %439 = vmatpush.msra.mxu0 %v123
    %440 = vmatpush.msra.mxu0 %v122
    %441 = vmatpush.msra.mxu0 %v121
    %442 = vmatpush.msra.mxu0 %v120
    %443 = vmatpush.msra.mxu0 %v119
    %444 = vmatpush.msra.mxu0 %v118
    %445 = vmatpush.msra.mxu0 %v117
    %446 = vmatpush.msra.mxu0 %v116
    %447 = vmatpush.msra.mxu0 %v115
    %448 = vmatpush.msra.mxu0 %v114
    %449 = vmatpush.msra.mxu0 %v113
    %450 = vmatmul.f32.gmra.mxu0 %v305
    %v451 = vpop.f32.mrf.mxu0
    %v452 = vadd.f32 %v432, %v451
    %453 = vdwg.mxu0
    %454 = vmatpush.msra.mxu0 %v144
    %455 = vmatpush.msra.mxu0 %v143
    %456 = vmatpush.msra.mxu0 %v142
    %457 = vmatpush.msra.mxu0 %v141
    %458 = vmatpush.msra.mxu0 %v140
    %459 = vmatpush.msra.mxu0 %v139
    %460 = vmatpush.msra.mxu0 %v138
    %461 = vmatpush.msra.mxu0 %v137
    %462 = vmatpush.msra.mxu0 %v136
    %463 = vmatpush.msra.mxu0 %v135
    %464 = vmatpush.msra.mxu0 %v134
    %465 = vmatpush.msra.mxu0 %v133
    %466 = vmatpush.msra.mxu0 %v132
    %467 = vmatpush.msra.mxu0 %v131
    %468 = vmatpush.msra.mxu0 %v130
    %469 = vmatpush.msra.mxu0 %v129
    %470 = vmatmul.f32.gmra.mxu0 %v306
    %v471 = vpop.f32.mrf.mxu0
    %v472 = vadd.f32 %v452, %v471
    %473 = vdwg.mxu0
    %474 = vmatpush.msra.mxu0 %v160
    %475 = vmatpush.msra.mxu0 %v159
    %476 = vmatpush.msra.mxu0 %v158
    %477 = vmatpush.msra.mxu0 %v157
    %478 = vmatpush.msra.mxu0 %v156
    %479 = vmatpush.msra.mxu0 %v155
    %480 = vmatpush.msra.mxu0 %v154
    %481 = vmatpush.msra.mxu0 %v153
    %482 = vmatpush.msra.mxu0 %v152
    %483 = vmatpush.msra.mxu0 %v151
    %484 = vmatpush.msra.mxu0 %v150
    %485 = vmatpush.msra.mxu0 %v149
    %486 = vmatpush.msra.mxu0 %v148
    %487 = vmatpush.msra.mxu0 %v147
    %488 = vmatpush.msra.mxu0 %v146
    %489 = vmatpush.msra.mxu0 %v145
    %490 = vmatmul.f32.gmra.mxu0 %v307
    %v491 = vpop.f32.mrf.mxu0
    %v492 = vadd.f32 %v472, %v491
    %493 = vdwg.mxu0
    %494 = vmatpush.msra.mxu0 %v176
    %495 = vmatpush.msra.mxu0 %v175
    %496 = vmatpush.msra.mxu0 %v174
    %497 = vmatpush.msra.mxu0 %v173
    %498 = vmatpush.msra.mxu0 %v172
    %499 = vmatpush.msra.mxu0 %v171
    %500 = vmatpush.msra.mxu0 %v170
    %501 = vmatpush.msra.mxu0 %v169
    %502 = vmatpush.msra.mxu0 %v168
    %503 = vmatpush.msra.mxu0 %v167
    %504 = vmatpush.msra.mxu0 %v166
    %505 = vmatpush.msra.mxu0 %v165
    %506 = vmatpush.msra.mxu0 %v164
    %507 = vmatpush.msra.mxu0 %v163
    %508 = vmatpush.msra.mxu0 %v162
    %509 = vmatpush.msra.mxu0 %v161
    %510 = vmatmul.f32.gmra.mxu0 %v310
    %v511 = vpop.f32.mrf.mxu0
    %v512 = vadd.f32 %v492, %v511
    %513 = vdwg.mxu0
    %514 = vmatpush.msra.mxu0 %v192
    %515 = vmatpush.msra.mxu0 %v191
    %516 = vmatpush.msra.mxu0 %v190
    %517 = vmatpush.msra.mxu0 %v189
    %518 = vmatpush.msra.mxu0 %v188
    %519 = vmatpush.msra.mxu0 %v187
    %520 = vmatpush.msra.mxu0 %v186
    %521 = vmatpush.msra.mxu0 %v185
    %522 = vmatpush.msra.mxu0 %v184
    %523 = vmatpush.msra.mxu0 %v183
    %524 = vmatpush.msra.mxu0 %v182
    %525 = vmatpush.msra.mxu0 %v181
    %526 = vmatpush.msra.mxu0 %v180
    %527 = vmatpush.msra.mxu0 %v179
    %528 = vmatpush.msra.mxu0 %v178
    %529 = vmatpush.msra.mxu0 %v177
    %530 = vmatmul.f32.gmra.mxu0 %v311
    %v531 = vpop.f32.mrf.mxu0
    %v532 = vadd.f32 %v512, %v531
    %533 = vdwg.mxu0
    %534 = vmatpush.msra.mxu0 %v208
    %535 = vmatpush.msra.mxu0 %v207
    %536 = vmatpush.msra.mxu0 %v206
    %537 = vmatpush.msra.mxu0 %v205
    %538 = vmatpush.msra.mxu0 %v204
    %539 = vmatpush.msra.mxu0 %v203
    %540 = vmatpush.msra.mxu0 %v202
    %541 = vmatpush.msra.mxu0 %v201
    %542 = vmatpush.msra.mxu0 %v200
    %543 = vmatpush.msra.mxu0 %v199
    %544 = vmatpush.msra.mxu0 %v198
    %545 = vmatpush.msra.mxu0 %v197
    %546 = vmatpush.msra.mxu0 %v196
    %547 = vmatpush.msra.mxu0 %v195
    %548 = vmatpush.msra.mxu0 %v194
    %549 = vmatpush.msra.mxu0 %v193
    %550 = vmatmul.f32.gmra.mxu0 %v312
    %v551 = vpop.f32.mrf.mxu0
    %v552 = vadd.f32 %v532, %v551
    %553 = vdwg.mxu0
    %554 = vmatpush.msra.mxu0 %v224
    %555 = vmatpush.msra.mxu0 %v223
    %556 = vmatpush.msra.mxu0 %v222
    %557 = vmatpush.msra.mxu0 %v221
    %558 = vmatpush.msra.mxu0 %v220
    %559 = vmatpush.msra.mxu0 %v219
    %560 = vmatpush.msra.mxu0 %v218
    %561 = vmatpush.msra.mxu0 %v217
    %562 = vmatpush.msra.mxu0 %v216
    %563 = vmatpush.msra.mxu0 %v215
    %564 = vmatpush.msra.mxu0 %v214
    %565 = vmatpush.msra.mxu0 %v213
    %566 = vmatpush.msra.mxu0 %v212
    %567 = vmatpush.msra.mxu0 %v211
    %568 = vmatpush.msra.mxu0 %v210
    %569 = vmatpush.msra.mxu0 %v209
    %570 = vmatmul.f32.gmra.mxu0 %v313
    %v571 = vpop.f32.mrf.mxu0
    %v572 = vadd.f32 %v552, %v571
    %573 = vdwg.mxu0
    %574 = vmatpush.msra.mxu0 %v240
    %575 = vmatpush.msra.mxu0 %v239
    %576 = vmatpush.msra.mxu0 %v238
    %577 = vmatpush.msra.mxu0 %v237
    %578 = vmatpush.msra.mxu0 %v236
    %579 = vmatpush.msra.mxu0 %v235
    %580 = vmatpush.msra.mxu0 %v234
    %581 = vmatpush.msra.mxu0 %v233
    %582 = vmatpush.msra.mxu0 %v232
    %583 = vmatpush.msra.mxu0 %v231
    %584 = vmatpush.msra.mxu0 %v230
    %585 = vmatpush.msra.mxu0 %v229
    %586 = vmatpush.msra.mxu0 %v228
    %587 = vmatpush.msra.mxu0 %v227
    %588 = vmatpush.msra.mxu0 %v226
    %589 = vmatpush.msra.mxu0 %v225
    %590 = vmatmul.f32.gmra.mxu0 %v314
    %v591 = vpop.f32.mrf.mxu0
    %v592 = vadd.f32 %v572, %v591
    %593 = vdwg.mxu0
    %594 = vmatpush.msra.mxu0 %v256
    %595 = vmatpush.msra.mxu0 %v255
    %596 = vmatpush.msra.mxu0 %v254
    %597 = vmatpush.msra.mxu0 %v253
    %598 = vmatpush.msra.mxu0 %v252
    %599 = vmatpush.msra.mxu0 %v251
    %600 = vmatpush.msra.mxu0 %v250
    %601 = vmatpush.msra.mxu0 %v249
    %602 = vmatpush.msra.mxu0 %v248
    %603 = vmatpush.msra.mxu0 %v247
    %604 = vmatpush.msra.mxu0 %v246
    %605 = vmatpush.msra.mxu0 %v245
    %606 = vmatpush.msra.mxu0 %v244
    %607 = vmatpush.msra.mxu0 %v243
    %608 = vmatpush.msra.mxu0 %v242
    %609 = vmatpush.msra.mxu0 %v241
    %610 = vmatmul.f32.gmra.mxu0 %v315
    %v611 = vpop.f32.mrf.mxu0
    %v612 = vadd.f32 %v592, %v611
    %613 = vdwg.mxu0
    %614 = vmatpush.msra.mxu0 %v272
    %615 = vmatpush.msra.mxu0 %v271
    %616 = vmatpush.msra.mxu0 %v270
    %617 = vmatpush.msra.mxu0 %v269
    %618 = vmatpush.msra.mxu0 %v268
    %619 = vmatpush.msra.mxu0 %v267
    %620 = vmatpush.msra.mxu0 %v266
    %621 = vmatpush.msra.mxu0 %v265
    %622 = vmatpush.msra.mxu0 %v264
    %623 = vmatpush.msra.mxu0 %v263
    %624 = vmatpush.msra.mxu0 %v262
    %625 = vmatpush.msra.mxu0 %v261
    %626 = vmatpush.msra.mxu0 %v260
    %627 = vmatpush.msra.mxu0 %v259
    %628 = vmatpush.msra.mxu0 %v258
    %629 = vmatpush.msra.mxu0 %v257
    %630 = vmatmul.f32.gmra.mxu0 %v316
    %v631 = vpop.f32.mrf.mxu0
    %v632 = vadd.f32 %v612, %v631
    %633 = vdwg.mxu0
    %634 = vmatpush.msra.mxu0 %v288
    %635 = vmatpush.msra.mxu0 %v287
    %636 = vmatpush.msra.mxu0 %v286
    %637 = vmatpush.msra.mxu0 %v285
    %638 = vmatpush.msra.mxu0 %v284
    %639 = vmatpush.msra.mxu0 %v283
    %640 = vmatpush.msra.mxu0 %v282
    %641 = vmatpush.msra.mxu0 %v281
    %642 = vmatpush.msra.mxu0 %v280
    %643 = vmatpush.msra.mxu0 %v279
    %644 = vmatpush.msra.mxu0 %v278
    %645 = vmatpush.msra.mxu0 %v277
    %646 = vmatpush.msra.mxu0 %v276
    %647 = vmatpush.msra.mxu0 %v275
    %648 = vmatpush.msra.mxu0 %v274
    %649 = vmatpush.msra.mxu0 %v273
    %650 = vmatmul.f32.gmra.mxu0 %v317
    %v651 = vpop.f32.mrf.mxu0
    %v652 = vadd.f32 %v632, %v651
    %653 = vdwg.mxu0
    %vm654 = vcmask 517120
    %v655 = vsel %vm654, %v652, -inf
    %656 = vmax.xlane.f32.xlu0 %v655
    %v657 = vpop.xlane.xlu0 %656
    %v658 = vsub.f32 %v652, %v657
    %v659 = vmul.f32 %v658, 1.442695
    %v660 = vpow.pop %v659
    %v661 = vsel %vm654, %v660, 0.0
    %662 = vadd.xlane.f32.xlu0 %v661
    %v663 = vpop.xlane.xlu0 %662
    %v664 = vrcp.pop %v663
    %v665 = vmul.f32 %v663, %v664
    %v666 = vsub.f32 1.0, %v665
    %v667 = vmul.f32 %v664, %v666
    %v668 = vadd.f32 %v664, %v667
    %vm669 = vweird.f32 %v663
    %vm670 = vweird.f32 %v664
    %vm671 = vmor %vm669, %vm670
    %v672 = vsel %vm671, %v664, %v668
    %v673 = vand.u32 2147483647, %v663
    %vm674 = vcmp.eq.f32.partialorder %v673, 8.507059e+37
    %v675 = vand.u32 %v663, 2147483648
    %v676 = vor.u32 1.1754944e-38, %v675
    %v677 = vsel %vm674, %v676, %v672
    %v678 = vmul.f32 %v660, %v677
    %679 = vst.msk [vmem:[#allocation5] sm:$0x3] %vm654, %v678
    // Predicated region
    $region18: #{alphazero_forward.5} parent=1 // pred_check
      _
    $region19: #{alphazero_forward.5} parent=1 // pred_check_branch
      %681 = sbr.rel (0) target = $region21
    $region20: #{alphazero_forward.5} parent=1 // pred_region
      %683 = vsyncadd [#allocation4], 0
      %s685 = sshll.u32 [#allocation5], 4
      %s686 = int_to_ptr.vmem [resolvable:$true] %s685
      %s687 = sshll.u32 %s3, 4
      %s688 = int_to_ptr.hbm [resolvable:$true] %s687
      %690 = dma.vmem_to_hbm [thread:$0]  %s686, 32, %s688, [#allocation4]
    $region21: #{alphazero_forward.5} parent=1 // pred_fallthru
      _
    // Predicated region
    $region22: #{alphazero_forward.5} parent=1 // pred_check
      _
    $region23: #{alphazero_forward.5} parent=1 // pred_check_branch
      %692 = sbr.rel (0) target = $region25
    $region24: #{alphazero_forward.5} parent=1 // pred_region
      %694 = dma.done [#allocation4], 32
    $region25: #{alphazero_forward.5} parent=1 // pred_fallthru
      _
    %695 = vsyncpa [#allocation3], 1
    %696 = vsyncpa [#allocation4], 1

</llo_original>
